<compile_context>
chip_gen: v5e
topology: v5e:2x2
jax: 0.10.0
libtpu: 0.0.40
codegen_flags: <defaults>
</compile_context>

<pallas_src>
import functools
import math

import jax
import jax.numpy as jnp
from jax import lax
from jax.experimental import pallas as pl
from jax.experimental.pallas import tpu as pltpu

_BF16 = jnp.bfloat16


def _align(x, m):
    return -(-x // m) * m


# --------------------------------------------------------------- spec helpers
def _const_spec(shape):
    n = len(shape)
    return pl.BlockSpec(tuple(shape), lambda b, l, _n=n: (0,) * _n)


def _batch_spec(shape):
    n = len(shape) - 1
    return pl.BlockSpec((1,) + tuple(shape[1:]), lambda b, l, _n=n: (b,) + (0,) * _n)


def _layer_spec(shape):
    n = len(shape) - 1
    return pl.BlockSpec((1,) + tuple(shape[1:]), lambda b, l, _n=n: (l,) + (0,) * _n)


def _softplus(x):
    return jnp.maximum(x, 0.0) + jnp.log(1.0 + jnp.exp(-jnp.abs(x)))


def _layernorm(x, g, b, eps=1e-5):
    mu = jnp.mean(x, axis=-1, keepdims=True)
    var = jnp.mean((x - mu) ** 2, axis=-1, keepdims=True)
    return (x - mu) * lax.rsqrt(var + eps) * g + b


# ------------------------------------------------------------ fused forward
def _fused_forward_kernel(
        # per-batch activations
        seq_ref,    # (1, L, 4)  one-hot DNA
        ms_ref,     # (1, 2, M)  per-batch motif [mean, 1/std]
        kb_ref,     # (1, 1, R)  additive key-padding bias (-1e9 on padded keys)
        # front-end weights (resident; fetched once)
        mw_ref, mb_ref,           # (K, 4, M) bf16, (1, M)
        cw_ref, cb_ref,           # (3, M, H) bf16, (1, H)
        dw_ref, db_ref,           # (ND, 3, H, H) bf16, (ND, 1, H)
        pw_ref, pb_ref,           # (H, MD) bf16, (1, MD)
        aw1_ref, ab1_ref, aw2_ref, ab2_ref,      # ATACHead
        rw_ref, rb_ref, pe_ref,                  # RegionEmbed + abs-PE
        # transformer weights: one layer per grid step (streamed)
        ln1w_ref, ln1b_ref, wqkv_ref, bqkv_ref, wo_ref, bo_ref,
        ln2w_ref, ln2b_ref, w1_ref, b1_ref, w2_ref, b2_ref,
        # final LayerNorm + fused (exp | confidence) head
        flnw_ref, flnb_ref, hw_ref, hb_ref,
        # output
        out_ref,    # (1, R, OUT_PAD)  packed [atpm | exp | conf | 0]
        # scratch
        seqpad_ref, xpad_ref, hpad_ref, xe_ref, atpm_ref,
        *, nhead, chunk, pad_s, pad_x, pad_h):
    l_idx = pl.program_id(1)
    n_layers = pl.num_programs(1)

    L = seq_ref.shape[1]
    K = mw_ref.shape[0]
    M = mw_ref.shape[2]
    H = cw_ref.shape[2]
    D = rw_ref.shape[1]
    R = pe_ref.shape[0]
    hd = D // nhead
    n_dil = dw_ref.shape[0]
    bf16 = _BF16

    # ---------------- front end: runs once per batch element (layer step 0) --
    @pl.when(l_idx == 0)
    def _front_end():
        # zero ONLY the halo-border rows of the padded scratches
        seqpad_ref[0:pad_s, :] = jnp.zeros((pad_s, 4), jnp.float32)
        seqpad_ref[pl.ds(pad_s + L, pad_s), :] = jnp.zeros((pad_s, 4), jnp.float32)
        xpad_ref[0:pad_x, :] = jnp.zeros((pad_x, M), jnp.float32)
        xpad_ref[pl.ds(pad_x + L, pad_x), :] = jnp.zeros((pad_x, M), jnp.float32)
        hpad_ref[0:pad_h, :] = jnp.zeros((pad_h, H), jnp.float32)
        hpad_ref[pl.ds(pad_h + L, pad_h), :] = jnp.zeros((pad_h, H), jnp.float32)

        # 1. MotifScanner: PWM conv ('same'), per-tap accumulating matmuls
        seqpad_ref[pl.ds(pad_s, L), :] = seq_ref[0]
        pad_l = K // 2
        acc = jnp.zeros((L, M), jnp.float32)
        for k in range(K):
            tap = seqpad_ref[pl.ds(pad_s - pad_l + k, L), :].astype(bf16)
            acc += jnp.dot(tap, mw_ref[k], preferred_element_type=jnp.float32)
        ms = ms_ref[0]                                   # (2, M): [mean, 1/std]
        x = jnp.maximum((acc + mb_ref[...] - ms[0:1, :]) * ms[1:2, :], 0.0)  # (L, M)

        # 2. ConvPool tower: input conv (3 taps) + residual dilated convs
        xpad_ref[pl.ds(pad_x, L), :] = x
        hacc = jnp.zeros((L, H), jnp.float32)
        for k in range(3):
            tap = xpad_ref[pl.ds(pad_x - 1 + k, L), :].astype(bf16)
            hacc += jnp.dot(tap, cw_ref[k], preferred_element_type=jnp.float32)
        h = jnp.maximum(hacc + cb_ref[...], 0.0)

        hpad_ref[pl.ds(pad_h, L), :] = h
        for i in range(n_dil):                           # dilation = 2**(i+1)
            d = 2 ** (i + 1)
            uacc = jnp.zeros((L, H), jnp.float32)
            for k in range(3):
                tap = hpad_ref[pl.ds(pad_h + (k - 1) * d, L), :].astype(bf16)
                uacc += jnp.dot(tap, dw_ref[i, k], preferred_element_type=jnp.float32)
            h = h + jnp.maximum(uacc + db_ref[i], 0.0)   # residual dilated conv
            hpad_ref[pl.ds(pad_h, L), :] = h

        # per-peak mean pool: reshape (L, H) -> (R, chunk, H), sum over chunk
        # TODO(synk): variable per-peak widths / n_peaks < max_n_peaks not modelled.
        pooled = jnp.sum(jnp.reshape(h, (R, chunk, H)), axis=1) * (1.0 / chunk)
        x_orig = (jnp.dot(pooled.astype(bf16), pw_ref[...],
                          preferred_element_type=jnp.float32) + pb_ref[...])   # (R, MD)

        # 3. ATACHead -> softplus (stashed until the final layer step)
        a1 = jnp.maximum(jnp.dot(x_orig.astype(bf16), aw1_ref[...],
                                 preferred_element_type=jnp.float32) + ab1_ref[...], 0.0)
        atpm_ref[...] = _softplus(jnp.dot(a1.astype(bf16), aw2_ref[...],
                                          preferred_element_type=jnp.float32) + ab2_ref[...])

        # 4. RegionEmbed + AbsolutePositionalEncoding -> transformer state
        xe_ref[...] = (jnp.dot(x_orig.astype(bf16), rw_ref[...],
                               preferred_element_type=jnp.float32)
                       + rb_ref[...] + pe_ref[...])

    # ---------------- one transformer encoder layer per grid step ------------
    xc = xe_ref[...]
    h1 = _layernorm(xc, ln1w_ref[0], ln1b_ref[0])
    qkv = (jnp.dot(h1.astype(bf16), wqkv_ref[0], preferred_element_type=jnp.float32)
           + bqkv_ref[0])                                 # (R, 3D); 1/sqrt(hd) folded in Wq
    q3 = jnp.stack([qkv[:, i * hd:(i + 1) * hd] for i in range(nhead)], axis=0).astype(bf16)
    k3 = jnp.stack([qkv[:, D + i * hd:D + (i + 1) * hd] for i in range(nhead)], axis=0).astype(bf16)
    v3 = jnp.stack([qkv[:, 2 * D + i * hd:2 * D + (i + 1) * hd] for i in range(nhead)], axis=0).astype(bf16)

    logits = jnp.einsum('hqd,hkd->hqk', q3, k3,
                        preferred_element_type=jnp.float32)          # (nhead, R, R)
    logits = logits + kb_ref[...]                                    # (1,1,R) broadcast bias
    logits = logits - jnp.max(logits, axis=-1, keepdims=True)
    p = jnp.exp(logits)
    p = p * pl.reciprocal(jnp.sum(p, axis=-1, keepdims=True), approx=True)
    ctx = jnp.einsum('hqk,hkd->hqd', p.astype(bf16), v3,
                     preferred_element_type=jnp.float32)             # (nhead, R, hd)
    proj = jnp.einsum('hqc,hcd->hqd', ctx.astype(bf16), wo_ref[0],
                      preferred_element_type=jnp.float32)            # (nhead, R, D)
    xc = xc + jnp.sum(proj, axis=0) + bo_ref[0]

    h2 = _layernorm(xc, ln2w_ref[0], ln2b_ref[0])
    m = jnp.dot(h2.astype(bf16), w1_ref[0], preferred_element_type=jnp.float32) + b1_ref[0]
    # TODO(synk): tanh-approx GELU; torch nn.GELU default is the exact erf form.
    m = 0.5 * m * (1.0 + jnp.tanh(0.7978845608028654 * (m + 0.044715 * m * m * m)))
    m = jnp.dot(m.astype(bf16), w2_ref[0], preferred_element_type=jnp.float32) + b2_ref[0]
    xe_ref[...] = xc + m

    # ---------------- final LN + fused (exp | confidence) heads --------------
    @pl.when(l_idx == n_layers - 1)
    def _heads():
        hf = _layernorm(xe_ref[...], flnw_ref[...], flnb_ref[...])
        ec = _softplus(jnp.dot(hf.astype(bf16), hw_ref[...],
                               preferred_element_type=jnp.float32) + hb_ref[...])
        pad_cols = out_ref.shape[2] - 1 - ec.shape[1]
        pieces = [atpm_ref[...], ec]
        if pad_cols > 0:
            pieces.append(jnp.zeros((R, pad_cols), jnp.float32))
        out_ref[0] = jnp.concatenate(pieces, axis=-1)     # single lane-dense store


# ------------------------------------------------------------------ glue: PE
def sinusoidal_pe(n, d):
    pos = jnp.arange(n, dtype=jnp.float32)[:, None]
    div = jnp.exp(jnp.arange(0, d, 2, dtype=jnp.float32) * (-math.log(10000.0) / d))
    pe = jnp.zeros((n, d), jnp.float32)
    pe = pe.at[:, 0::2].set(jnp.sin(pos * div))
    pe = pe.at[:, 1::2].set(jnp.cos(pos * div))
    return pe


# ---------------------------------------------------------------- parameters
def _xavier(key, shape):
    fan_in, fan_out = shape[-2], shape[-1]
    lim = math.sqrt(6.0 / (fan_in + fan_out))
    return jax.random.uniform(key, shape, jnp.float32, minval=-lim, maxval=lim)


def init_params(key, *, num_motif, motif_dim, motif_kernel, hidden_dim,
                embed_dim, nhead, num_layers, output_dim):
    keys = iter(jax.random.split(key, 16 + 8 * num_layers))
    nk = lambda: next(keys)
    NL, D, H, M = num_layers, embed_dim, hidden_dim, num_motif
    hd = D // nhead
    p = {}
    # MotifScanner PWM conv, per-tap layout (K, 4, M); matmul weights stored bf16.
    p["motif_w"] = _xavier(nk(), (motif_kernel, 4, M)).astype(_BF16)
    p["motif_b"] = jnp.zeros((1, M), jnp.float32)
    # ConvPool: input conv (3 taps, M->H) + NL residual dilated convs (3 taps, H->H)
    p["conv_in_w"] = _xavier(nk(), (3, M, H)).astype(_BF16)
    p["conv_in_b"] = jnp.zeros((1, H), jnp.float32)
    p["dil_w"] = jnp.stack([_xavier(nk(), (3, H, H)) for _ in range(NL)]).astype(_BF16)
    p["dil_b"] = jnp.zeros((NL, 1, H), jnp.float32)
    p["pool_proj_w"] = _xavier(nk(), (H, motif_dim)).astype(_BF16)
    p["pool_proj_b"] = jnp.zeros((1, motif_dim), jnp.float32)
    # ATACHead(motif_dim, d_model, 1)
    p["atac_w1"] = _xavier(nk(), (motif_dim, D)).astype(_BF16)
    p["atac_b1"] = jnp.zeros((1, D), jnp.float32)
    p["atac_w2"] = _xavier(nk(), (D, 1)).astype(_BF16)
    p["atac_b2"] = jnp.zeros((1, 1), jnp.float32)
    # RegionEmbed
    p["re_w"] = _xavier(nk(), (motif_dim, D)).astype(_BF16)
    p["re_b"] = jnp.zeros((1, D), jnp.float32)
    # GETTransformer blocks, stacked along a leading layer axis (streamed per step)
    p["ln1_w"] = jnp.ones((NL, 1, D), jnp.float32)
    p["ln1_b"] = jnp.zeros((NL, 1, D), jnp.float32)
    wqkv = jnp.stack([_xavier(nk(), (D, 3 * D)) for _ in range(NL)])
    wqkv = wqkv.at[:, :, :D].multiply(1.0 / math.sqrt(hd))   # fold attn scale into Wq
    p["wqkv"] = wqkv.astype(_BF16)
    p["bqkv"] = jnp.zeros((NL, 1, 3 * D), jnp.float32)
    wo = jnp.stack([_xavier(nk(), (D, D)) for _ in range(NL)])
    p["wo"] = wo.reshape(NL, nhead, hd, D).astype(_BF16)     # head-major output proj
    p["bo"] = jnp.zeros((NL, 1, D), jnp.float32)
    p["ln2_w"] = jnp.ones((NL, 1, D), jnp.float32)
    p["ln2_b"] = jnp.zeros((NL, 1, D), jnp.float32)
    p["wfc1"] = jnp.stack([_xavier(nk(), (D, 4 * D)) for _ in range(NL)]).astype(_BF16)
    p["bfc1"] = jnp.zeros((NL, 1, 4 * D), jnp.float32)
    p["wfc2"] = jnp.stack([_xavier(nk(), (4 * D, D)) for _ in range(NL)]).astype(_BF16)
    p["bfc2"] = jnp.zeros((NL, 1, D), jnp.float32)
    p["final_ln_w"] = jnp.ones((1, D), jnp.float32)
    p["final_ln_b"] = jnp.zeros((1, D), jnp.float32)
    # head_exp (D -> output_dim) and head_confidence (D -> 50), fused column-wise
    p["head_w"] = jnp.concatenate([_xavier(nk(), (D, output_dim)),
                                   _xavier(nk(), (D, 50))], axis=1).astype(_BF16)
    p["head_b"] = jnp.zeros((1, output_dim + 50), jnp.float32)
    return p


# --------------------------------------------------------------- full forward
def get_finetune_forward(params, nhead, peak_seq, atac, mask, padding_mask,
                         chunk_size, n_peaks, max_n_peaks, motif_mean_std,
                         other_labels):
    B, L, _ = peak_seq.shape
    R = int(max_n_peaks)
    assert L == R * chunk_size, "fixed-chunk pooling expects L == max_n_peaks * chunk"
    K = params["motif_w"].shape[0]
    M = params["motif_w"].shape[2]
    H = params["conv_in_w"].shape[2]
    D = params["re_w"].shape[1]
    out_dim = params["head_w"].shape[1] - 50
    n_dil = params["dil_w"].shape[0]
    NL = params["wqkv"].shape[0]

    # motif normalization: precompute 1/std so the kernel multiplies (no divide).
    ms = jnp.stack([motif_mean_std[:, 0, :], 1.0 / motif_mean_std[:, 1, :]],
                   axis=1).astype(jnp.float32)
    key_bias = jnp.where(padding_mask > 0, -1e9, 0.0).astype(jnp.float32).reshape(B, 1, R)
    pe = sinusoidal_pe(R, D)

    tss_mask = other_labels[:, :, 1]   # parity with reference forward; unused
    del tss_mask
    # TODO(synk): CTCFPositionalEncoding skipped (reference forward references an
    # undefined `ctcf_pos`); `atac`, `mask`, `n_peaks` unused (use_atac=False,
    # fixed-size chunks), matching the eval path.

    pad_s = _align(K, 8)            # PWM-conv halo (sublane aligned)
    pad_x = 8                       # input-conv halo
    pad_h = _align(2 ** n_dil, 8)   # max dilation halo
    out_pad = _align(1 + out_dim + 50, 128)

    batch_args = (peak_seq, ms, key_bias)
    front_args = (params["motif_w"], params["motif_b"],
                  params["conv_in_w"], params["conv_in_b"],
                  params["dil_w"], params["dil_b"],
                  params["pool_proj_w"], params["pool_proj_b"],
                  params["atac_w1"], params["atac_b1"],
                  params["atac_w2"], params["atac_b2"],
                  params["re_w"], params["re_b"], pe)
    layer_args = (params["ln1_w"], params["ln1_b"], params["wqkv"], params["bqkv"],
                  params["wo"], params["bo"], params["ln2_w"], params["ln2_b"],
                  params["wfc1"], params["bfc1"], params["wfc2"], params["bfc2"])
    tail_args = (params["final_ln_w"], params["final_ln_b"],
                 params["head_w"], params["head_b"])

    in_specs = ([_batch_spec(a.shape) for a in batch_args]
                + [_const_spec(a.shape) for a in front_args]
                + [_layer_spec(a.shape) for a in layer_args]
                + [_const_spec(a.shape) for a in tail_args])

    scratch_shapes = [pltpu.VMEM((L + 2 * pad_s, 4), jnp.float32),   # padded one-hot seq
                      pltpu.VMEM((L + 2 * pad_x, M), jnp.float32),   # padded motif acts
                      pltpu.VMEM((L + 2 * pad_h, H), jnp.float32),   # padded tower acts
                      pltpu.VMEM((R, D), jnp.float32),               # transformer state
                      pltpu.VMEM((R, 1), jnp.float32)]               # stashed atpm

    # explicit VMEM budget: resident blocks (x2 double buffer) + scratch + margin.
    def _bb(shape, dtype):
        return int(math.prod(shape)) * jnp.dtype(dtype).itemsize
    est = sum(2 * _bb(a.shape[1:], a.dtype) for a in batch_args + layer_args)
    est += sum(2 * _bb(a.shape, a.dtype) for a in front_args + tail_args)
    est += 2 * _bb((R, out_pad), jnp.float32)
    est += (_bb((L + 2 * pad_s, 4), jnp.float32) + _bb((L + 2 * pad_x, M), jnp.float32)
            + _bb((L + 2 * pad_h, H), jnp.float32) + _bb((R, D), jnp.float32)
            + _bb((R, 1), jnp.float32))
    est = int(est * 1.25) + (2 << 20)
    try:  # generation-aware ceiling (64 MiB physical on v7x, 128 MiB on v5e/v6e)
        cap = int(pltpu.get_tpu_info().vmem_capacity_bytes) * 3 // 4
    except Exception:
        cap = 48 << 20
    vmem_limit = max(16 << 20, min(est, cap))

    kernel = functools.partial(_fused_forward_kernel, nhead=nhead, chunk=chunk_size,
                               pad_s=pad_s, pad_x=pad_x, pad_h=pad_h)
    out = pl.pallas_call(
        kernel,
        out_shape=jax.ShapeDtypeStruct((B, R, out_pad), jnp.float32),
        grid=(B, NL),
        in_specs=in_specs,
        out_specs=_batch_spec((B, R, out_pad)),
        scratch_shapes=scratch_shapes,
        compiler_params=pltpu.CompilerParams(
            dimension_semantics=("parallel", "arbitrary"),
            vmem_limit_bytes=vmem_limit),
    )(*batch_args, *front_args, *layer_args, *tail_args)

    atpm = out[:, :, 0:1]
    exp = out[:, :, 1:1 + out_dim]
    confidence = out[:, :, 1 + out_dim:1 + out_dim + 50]
    return atpm, exp, confidence


if __name__ == "__main__":
    B, R, CHUNK = 2, 8, 16          # batch, max_n_peaks, bp per peak
    L = R * CHUNK                   # total sequence length = 128
    NUM_MOTIF, MOTIF_DIM, MOTIF_K = 16, 24, 5
    EMBED_DIM, NHEAD, NUM_LAYERS, OUTPUT_DIM = 32, 4, 2, 1
    HIDDEN_DIM = EMBED_DIM // 2

    key = jax.random.PRNGKey(0)
    kp, k1, k2, k3, k4 = jax.random.split(key, 5)
    params = init_params(kp, num_motif=NUM_MOTIF, motif_dim=MOTIF_DIM,
                         motif_kernel=MOTIF_K, hidden_dim=HIDDEN_DIM,
                         embed_dim=EMBED_DIM, nhead=NHEAD,
                         num_layers=NUM_LAYERS, output_dim=OUTPUT_DIM)

    peak_seq = jax.nn.one_hot(jax.random.randint(k1, (B, L), 0, 4), 4,
                              dtype=jnp.float32)                      # one-hot DNA (B, L, 4)
    atac = jax.random.uniform(k2, (B, R), dtype=jnp.float32)          # unused (use_atac=False)
    mask = jnp.zeros((B, R), jnp.float32)                             # unused in reference fwd
    padding_mask = jnp.zeros((B, R), jnp.float32)                     # 0 = valid region
    motif_mean_std = jnp.stack(
        [0.1 * jax.random.normal(k3, (B, NUM_MOTIF), dtype=jnp.float32),
         jax.random.uniform(k4, (B, NUM_MOTIF), jnp.float32, 0.5, 1.5)], axis=1)
    other_labels = jnp.zeros((B, R, 2), jnp.float32)
    n_peaks = jnp.full((B,), R, jnp.int32)

    atpm, exp, confidence = get_finetune_forward(
        params, NHEAD, peak_seq, atac, mask, padding_mask,
        CHUNK, n_peaks, R, motif_mean_std, other_labels)
    jax.block_until_ready((atpm, exp, confidence))
    assert atpm.shape == (B, R, 1)
    assert exp.shape == (B, R, OUTPUT_DIM)
    assert confidence.shape == (B, R, 50)
    assert bool(jnp.all(jnp.isfinite(atpm))
                & jnp.all(jnp.isfinite(exp))
                & jnp.all(jnp.isfinite(confidence)))
    print("KERNEL_OK")
</pallas_src>

<mosaic_0001>
module attributes {stable_mosaic.version = 11 : i64} {
  func.func @_fused_forward_kernel(%arg0: i32, %arg1: i32, %arg2: memref<1x128x4xf32, #tpu.memory_space<vmem>>, %arg3: memref<1x2x16xf32, #tpu.memory_space<vmem>>, %arg4: memref<1x1x8xf32, #tpu.memory_space<vmem>>, %arg5: memref<5x4x16xbf16, #tpu.memory_space<vmem>>, %arg6: memref<1x16xf32, #tpu.memory_space<vmem>>, %arg7: memref<3x16x16xbf16, #tpu.memory_space<vmem>>, %arg8: memref<1x16xf32, #tpu.memory_space<vmem>>, %arg9: memref<2x3x16x16xbf16, #tpu.memory_space<vmem>>, %arg10: memref<2x1x16xf32, #tpu.memory_space<vmem>>, %arg11: memref<16x24xbf16, #tpu.memory_space<vmem>>, %arg12: memref<1x24xf32, #tpu.memory_space<vmem>>, %arg13: memref<24x32xbf16, #tpu.memory_space<vmem>>, %arg14: memref<1x32xf32, #tpu.memory_space<vmem>>, %arg15: memref<32x1xbf16, #tpu.memory_space<vmem>>, %arg16: memref<1x1xf32, #tpu.memory_space<vmem>>, %arg17: memref<24x32xbf16, #tpu.memory_space<vmem>>, %arg18: memref<1x32xf32, #tpu.memory_space<vmem>>, %arg19: memref<8x32xf32, #tpu.memory_space<vmem>>, %arg20: memref<1x1x32xf32, #tpu.memory_space<vmem>>, %arg21: memref<1x1x32xf32, #tpu.memory_space<vmem>>, %arg22: memref<1x32x96xbf16, #tpu.memory_space<vmem>>, %arg23: memref<1x1x96xf32, #tpu.memory_space<vmem>>, %arg24: memref<1x4x8x32xbf16, #tpu.memory_space<vmem>>, %arg25: memref<1x1x32xf32, #tpu.memory_space<vmem>>, %arg26: memref<1x1x32xf32, #tpu.memory_space<vmem>>, %arg27: memref<1x1x32xf32, #tpu.memory_space<vmem>>, %arg28: memref<1x32x128xbf16, #tpu.memory_space<vmem>>, %arg29: memref<1x1x128xf32, #tpu.memory_space<vmem>>, %arg30: memref<1x128x32xbf16, #tpu.memory_space<vmem>>, %arg31: memref<1x1x32xf32, #tpu.memory_space<vmem>>, %arg32: memref<1x32xf32, #tpu.memory_space<vmem>>, %arg33: memref<1x32xf32, #tpu.memory_space<vmem>>, %arg34: memref<32x51xbf16, #tpu.memory_space<vmem>>, %arg35: memref<1x51xf32, #tpu.memory_space<vmem>>, %arg36: memref<1x8x128xf32, #tpu.memory_space<vmem>>, %arg37: memref<144x4xf32, #tpu.memory_space<vmem>>, %arg38: memref<144x16xf32, #tpu.memory_space<vmem>>, %arg39: memref<144x16xf32, #tpu.memory_space<vmem>>, %arg40: memref<8x32xf32, #tpu.memory_space<vmem>>, %arg41: memref<8x1xf32, #tpu.memory_space<vmem>>) attributes {dimension_semantics = [#tpu.dimension_semantics<parallel>, #tpu.dimension_semantics<arbitrary>], iteration_bounds = array<i64: 2, 2>, scalar_prefetch = 0 : i64, scratch_operands = 5 : i64, tpu.core_type = #tpu.core_type<tc>, window_params = [{transform_indices = @transform_0, window_bounds = array<i64: 1, 128, 4>}, {transform_indices = @transform_1, window_bounds = array<i64: 1, 2, 16>}, {transform_indices = @transform_2, window_bounds = array<i64: 1, 1, 8>}, {pipeline_mode = #tpu.pipeline_mode<synchronous>, transform_indices = @transform_3, window_bounds = array<i64: 5, 4, 16>}, {pipeline_mode = #tpu.pipeline_mode<synchronous>, transform_indices = @transform_4, window_bounds = array<i64: 1, 16>}, {pipeline_mode = #tpu.pipeline_mode<synchronous>, transform_indices = @transform_5, window_bounds = array<i64: 3, 16, 16>}, {pipeline_mode = #tpu.pipeline_mode<synchronous>, transform_indices = @transform_6, window_bounds = array<i64: 1, 16>}, {pipeline_mode = #tpu.pipeline_mode<synchronous>, transform_indices = @transform_7, window_bounds = array<i64: 2, 3, 16, 16>}, {pipeline_mode = #tpu.pipeline_mode<synchronous>, transform_indices = @transform_8, window_bounds = array<i64: 2, 1, 16>}, {pipeline_mode = #tpu.pipeline_mode<synchronous>, transform_indices = @transform_9, window_bounds = array<i64: 16, 24>}, {pipeline_mode = #tpu.pipeline_mode<synchronous>, transform_indices = @transform_10, window_bounds = array<i64: 1, 24>}, {pipeline_mode = #tpu.pipeline_mode<synchronous>, transform_indices = @transform_11, window_bounds = array<i64: 24, 32>}, {pipeline_mode = #tpu.pipeline_mode<synchronous>, transform_indices = @transform_12, window_bounds = array<i64: 1, 32>}, {pipeline_mode = #tpu.pipeline_mode<synchronous>, transform_indices = @transform_13, window_bounds = array<i64: 32, 1>}, {pipeline_mode = #tpu.pipeline_mode<synchronous>, transform_indices = @transform_14, window_bounds = array<i64: 1, 1>}, {pipeline_mode = #tpu.pipeline_mode<synchronous>, transform_indices = @transform_15, window_bounds = array<i64: 24, 32>}, {pipeline_mode = #tpu.pipeline_mode<synchronous>, transform_indices = @transform_16, window_bounds = array<i64: 1, 32>}, {pipeline_mode = #tpu.pipeline_mode<synchronous>, transform_indices = @transform_17, window_bounds = array<i64: 8, 32>}, {transform_indices = @transform_18, window_bounds = array<i64: 1, 1, 32>}, {transform_indices = @transform_19, window_bounds = array<i64: 1, 1, 32>}, {transform_indices = @transform_20, window_bounds = array<i64: 1, 32, 96>}, {transform_indices = @transform_21, window_bounds = array<i64: 1, 1, 96>}, {transform_indices = @transform_22, window_bounds = array<i64: 1, 4, 8, 32>}, {transform_indices = @transform_23, window_bounds = array<i64: 1, 1, 32>}, {transform_indices = @transform_24, window_bounds = array<i64: 1, 1, 32>}, {transform_indices = @transform_25, window_bounds = array<i64: 1, 1, 32>}, {transform_indices = @transform_26, window_bounds = array<i64: 1, 32, 128>}, {transform_indices = @transform_27, window_bounds = array<i64: 1, 1, 128>}, {transform_indices = @transform_28, window_bounds = array<i64: 1, 128, 32>}, {transform_indices = @transform_29, window_bounds = array<i64: 1, 1, 32>}, {pipeline_mode = #tpu.pipeline_mode<synchronous>, transform_indices = @transform_30, window_bounds = array<i64: 1, 32>}, {pipeline_mode = #tpu.pipeline_mode<synchronous>, transform_indices = @transform_31, window_bounds = array<i64: 1, 32>}, {pipeline_mode = #tpu.pipeline_mode<synchronous>, transform_indices = @transform_32, window_bounds = array<i64: 32, 51>}, {pipeline_mode = #tpu.pipeline_mode<synchronous>, transform_indices = @transform_33, window_bounds = array<i64: 1, 51>}, {transform_indices = @transform_34, window_bounds = array<i64: 1, 8, 128>}]} {
    %c0_i32 = arith.constant 0 : i32
    %0 = arith.cmpi eq, %arg1, %c0_i32 : i32
    %1 = arith.extui %0 : i1 to i32
    %c0_i32_0 = arith.constant 0 : i32
    %2 = arith.cmpi ne, %1, %c0_i32_0 : i32
    scf.if %2 {
      %cst_67 = arith.constant 0.000000e+00 : f32
      %154 = vector.broadcast %cst_67 : f32 to vector<8x4xf32>
      %c0_68 = arith.constant 0 : index
      %c0_69 = arith.constant 0 : index
      %155 = vector.load %arg37[%c0_68, %c0_69] : memref<144x4xf32, #tpu.memory_space<vmem>>, vector<8x4xf32>
      tpu.vector_store %arg37[%c0_68, %c0_69], %154 {strides = array<i32>} : memref<144x4xf32, #tpu.memory_space<vmem>>, vector<8x4xf32>,
      %cst_70 = arith.constant 0.000000e+00 : f32
      %156 = vector.broadcast %cst_70 : f32 to vector<8x4xf32>
      %c136 = arith.constant 136 : index
      %c0_71 = arith.constant 0 : index
      %157 = vector.load %arg37[%c136, %c0_71] : memref<144x4xf32, #tpu.memory_space<vmem>>, vector<8x4xf32>
      tpu.vector_store %arg37[%c136, %c0_71], %156 {strides = array<i32>} : memref<144x4xf32, #tpu.memory_space<vmem>>, vector<8x4xf32>,
      %cst_72 = arith.constant 0.000000e+00 : f32
      %158 = vector.broadcast %cst_72 : f32 to vector<8x16xf32>
      %c0_73 = arith.constant 0 : index
      %c0_74 = arith.constant 0 : index
      %159 = vector.load %arg38[%c0_73, %c0_74] : memref<144x16xf32, #tpu.memory_space<vmem>>, vector<8x16xf32>
      tpu.vector_store %arg38[%c0_73, %c0_74], %158 {strides = array<i32>} : memref<144x16xf32, #tpu.memory_space<vmem>>, vector<8x16xf32>,
      %cst_75 = arith.constant 0.000000e+00 : f32
      %160 = vector.broadcast %cst_75 : f32 to vector<8x16xf32>
      %c136_76 = arith.constant 136 : index
      %c0_77 = arith.constant 0 : index
      %161 = vector.load %arg38[%c136_76, %c0_77] : memref<144x16xf32, #tpu.memory_space<vmem>>, vector<8x16xf32>
      tpu.vector_store %arg38[%c136_76, %c0_77], %160 {strides = array<i32>} : memref<144x16xf32, #tpu.memory_space<vmem>>, vector<8x16xf32>,
      %cst_78 = arith.constant 0.000000e+00 : f32
      %162 = vector.broadcast %cst_78 : f32 to vector<8x16xf32>
      %c0_79 = arith.constant 0 : index
      %c0_80 = arith.constant 0 : index
      %163 = vector.load %arg39[%c0_79, %c0_80] : memref<144x16xf32, #tpu.memory_space<vmem>>, vector<8x16xf32>
      tpu.vector_store %arg39[%c0_79, %c0_80], %162 {strides = array<i32>} : memref<144x16xf32, #tpu.memory_space<vmem>>, vector<8x16xf32>,
      %cst_81 = arith.constant 0.000000e+00 : f32
      %164 = vector.broadcast %cst_81 : f32 to vector<8x16xf32>
      %c136_82 = arith.constant 136 : index
      %c0_83 = arith.constant 0 : index
      %165 = vector.load %arg39[%c136_82, %c0_83] : memref<144x16xf32, #tpu.memory_space<vmem>>, vector<8x16xf32>
      tpu.vector_store %arg39[%c136_82, %c0_83], %164 {strides = array<i32>} : memref<144x16xf32, #tpu.memory_space<vmem>>, vector<8x16xf32>,
      %c0_84 = arith.constant 0 : index
      %c0_85 = arith.constant 0 : index
      %c0_86 = arith.constant 0 : index
      %166 = vector.load %arg2[%c0_84, %c0_85, %c0_86] : memref<1x128x4xf32, #tpu.memory_space<vmem>>, vector<1x128x4xf32>
      %167 = vector.shape_cast %166 : vector<1x128x4xf32> to vector<128x4xf32>
      %c8 = arith.constant 8 : index
      %c0_87 = arith.constant 0 : index
      %168 = vector.load %arg37[%c8, %c0_87] : memref<144x4xf32, #tpu.memory_space<vmem>>, vector<128x4xf32>
      tpu.vector_store %arg37[%c8, %c0_87], %167 {strides = array<i32>} : memref<144x4xf32, #tpu.memory_space<vmem>>, vector<128x4xf32>,
      %cst_88 = arith.constant 0.000000e+00 : f32
      %169 = vector.broadcast %cst_88 : f32 to vector<128x16xf32>
      %c6 = arith.constant 6 : index
      %c0_89 = arith.constant 0 : index
      %170 = vector.load %arg37[%c6, %c0_89] : memref<144x4xf32, #tpu.memory_space<vmem>>, vector<128x4xf32>
      %171 = arith.truncf %170 : vector<128x4xf32> to vector<128x4xbf16>
      %c0_90 = arith.constant 0 : index
      %c0_91 = arith.constant 0 : index
      %c0_92 = arith.constant 0 : index
      %172 = vector.load %arg5[%c0_90, %c0_91, %c0_92] : memref<5x4x16xbf16, #tpu.memory_space<vmem>>, vector<1x4x16xbf16>
      %173 = vector.shape_cast %172 : vector<1x4x16xbf16> to vector<4x16xbf16>
      %cst_93 = arith.constant dense<0.000000e+00> : vector<128x16xf32>
      %174 = tpu.matmul %171, %173, %cst_93 {dimension_numbers = #tpu.dot_dimension_numbers<[1], [0], [0], [1], [0, 0, 1, 1], [], []>} : vector<128x4xbf16>, vector<4x16xbf16>, vector<128x16xf32> -> vector<128x16xf32>
      %175 = arith.addf %169, %174 : vector<128x16xf32>
      %c7 = arith.constant 7 : index
      %c0_94 = arith.constant 0 : index
      %176 = vector.load %arg37[%c7, %c0_94] : memref<144x4xf32, #tpu.memory_space<vmem>>, vector<128x4xf32>
      %177 = arith.truncf %176 : vector<128x4xf32> to vector<128x4xbf16>
      %c1 = arith.constant 1 : index
      %c0_95 = arith.constant 0 : index
      %c0_96 = arith.constant 0 : index
      %178 = vector.load %arg5[%c1, %c0_95, %c0_96] : memref<5x4x16xbf16, #tpu.memory_space<vmem>>, vector<1x4x16xbf16>
      %179 = vector.shape_cast %178 : vector<1x4x16xbf16> to vector<4x16xbf16>
      %cst_97 = arith.constant dense<0.000000e+00> : vector<128x16xf32>
      %180 = tpu.matmul %177, %179, %cst_97 {dimension_numbers = #tpu.dot_dimension_numbers<[1], [0], [0], [1], [0, 0, 1, 1], [], []>} : vector<128x4xbf16>, vector<4x16xbf16>, vector<128x16xf32> -> vector<128x16xf32>
      %181 = arith.addf %175, %180 : vector<128x16xf32>
      %c8_98 = arith.constant 8 : index
      %c0_99 = arith.constant 0 : index
      %182 = vector.load %arg37[%c8_98, %c0_99] : memref<144x4xf32, #tpu.memory_space<vmem>>, vector<128x4xf32>
      %183 = arith.truncf %182 : vector<128x4xf32> to vector<128x4xbf16>
      %c2 = arith.constant 2 : index
      %c0_100 = arith.constant 0 : index
      %c0_101 = arith.constant 0 : index
      %184 = vector.load %arg5[%c2, %c0_100, %c0_101] : memref<5x4x16xbf16, #tpu.memory_space<vmem>>, vector<1x4x16xbf16>
      %185 = vector.shape_cast %184 : vector<1x4x16xbf16> to vector<4x16xbf16>
      %cst_102 = arith.constant dense<0.000000e+00> : vector<128x16xf32>
      %186 = tpu.matmul %183, %185, %cst_102 {dimension_numbers = #tpu.dot_dimension_numbers<[1], [0], [0], [1], [0, 0, 1, 1], [], []>} : vector<128x4xbf16>, vector<4x16xbf16>, vector<128x16xf32> -> vector<128x16xf32>
      %187 = arith.addf %181, %186 : vector<128x16xf32>
      %c9 = arith.constant 9 : index
      %c0_103 = arith.constant 0 : index
      %188 = vector.load %arg37[%c9, %c0_103] : memref<144x4xf32, #tpu.memory_space<vmem>>, vector<128x4xf32>
      %189 = arith.truncf %188 : vector<128x4xf32> to vector<128x4xbf16>
      %c3 = arith.constant 3 : index
      %c0_104 = arith.constant 0 : index
      %c0_105 = arith.constant 0 : index
      %190 = vector.load %arg5[%c3, %c0_104, %c0_105] : memref<5x4x16xbf16, #tpu.memory_space<vmem>>, vector<1x4x16xbf16>
      %191 = vector.shape_cast %190 : vector<1x4x16xbf16> to vector<4x16xbf16>
      %cst_106 = arith.constant dense<0.000000e+00> : vector<128x16xf32>
      %192 = tpu.matmul %189, %191, %cst_106 {dimension_numbers = #tpu.dot_dimension_numbers<[1], [0], [0], [1], [0, 0, 1, 1], [], []>} : vector<128x4xbf16>, vector<4x16xbf16>, vector<128x16xf32> -> vector<128x16xf32>
      %193 = arith.addf %187, %192 : vector<128x16xf32>
      %c10 = arith.constant 10 : index
      %c0_107 = arith.constant 0 : index
      %194 = vector.load %arg37[%c10, %c0_107] : memref<144x4xf32, #tpu.memory_space<vmem>>, vector<128x4xf32>
      %195 = arith.truncf %194 : vector<128x4xf32> to vector<128x4xbf16>
      %c4 = arith.constant 4 : index
      %c0_108 = arith.constant 0 : index
      %c0_109 = arith.constant 0 : index
      %196 = vector.load %arg5[%c4, %c0_108, %c0_109] : memref<5x4x16xbf16, #tpu.memory_space<vmem>>, vector<1x4x16xbf16>
      %197 = vector.shape_cast %196 : vector<1x4x16xbf16> to vector<4x16xbf16>
      %cst_110 = arith.constant dense<0.000000e+00> : vector<128x16xf32>
      %198 = tpu.matmul %195, %197, %cst_110 {dimension_numbers = #tpu.dot_dimension_numbers<[1], [0], [0], [1], [0, 0, 1, 1], [], []>} : vector<128x4xbf16>, vector<4x16xbf16>, vector<128x16xf32> -> vector<128x16xf32>
      %199 = arith.addf %193, %198 : vector<128x16xf32>
      %c0_111 = arith.constant 0 : index
      %c0_112 = arith.constant 0 : index
      %c0_113 = arith.constant 0 : index
      %200 = vector.load %arg3[%c0_111, %c0_112, %c0_113] : memref<1x2x16xf32, #tpu.memory_space<vmem>>, vector<1x2x16xf32>
      %201 = vector.shape_cast %200 : vector<1x2x16xf32> to vector<2x16xf32>
      %c0_114 = arith.constant 0 : index
      %c0_115 = arith.constant 0 : index
      %202 = vector.load %arg6[%c0_114, %c0_115] : memref<1x16xf32, #tpu.memory_space<vmem>>, vector<1x16xf32>
      %203 = vector.broadcast %202 : vector<1x16xf32> to vector<128x16xf32>
      %204 = arith.addf %199, %203 : vector<128x16xf32>
      %205 = vector.extract_strided_slice %201 {offsets = [0, 0], sizes = [1, 16], strides = [1, 1]} : vector<2x16xf32> to vector<1x16xf32>
      %206 = vector.broadcast %205 : vector<1x16xf32> to vector<128x16xf32>
      %207 = arith.subf %204, %206 : vector<128x16xf32>
      %208 = vector.extract_strided_slice %201 {offsets = [1, 0], sizes = [1, 16], strides = [1, 1]} : vector<2x16xf32> to vector<1x16xf32>
      %209 = vector.broadcast %208 : vector<1x16xf32> to vector<128x16xf32>
      %210 = arith.mulf %207, %209 : vector<128x16xf32>
      %cst_116 = arith.constant 0.000000e+00 : f32
      %211 = vector.broadcast %cst_116 : f32 to vector<128x16xf32>
      %212 = arith.maximumf %210, %211 : vector<128x16xf32>
      %c8_117 = arith.constant 8 : index
      %c0_118 = arith.constant 0 : index
      %213 = vector.load %arg38[%c8_117, %c0_118] : memref<144x16xf32, #tpu.memory_space<vmem>>, vector<128x16xf32>
      tpu.vector_store %arg38[%c8_117, %c0_118], %212 {strides = array<i32>} : memref<144x16xf32, #tpu.memory_space<vmem>>, vector<128x16xf32>,
      %cst_119 = arith.constant 0.000000e+00 : f32
      %214 = vector.broadcast %cst_119 : f32 to vector<128x16xf32>
      %c7_120 = arith.constant 7 : index
      %c0_121 = arith.constant 0 : index
      %215 = vector.load %arg38[%c7_120, %c0_121] : memref<144x16xf32, #tpu.memory_space<vmem>>, vector<128x16xf32>
      %216 = arith.truncf %215 : vector<128x16xf32> to vector<128x16xbf16>
      %c0_122 = arith.constant 0 : index
      %c0_123 = arith.constant 0 : index
      %c0_124 = arith.constant 0 : index
      %217 = vector.load %arg7[%c0_122, %c0_123, %c0_124] : memref<3x16x16xbf16, #tpu.memory_space<vmem>>, vector<1x16x16xbf16>
      %218 = vector.shape_cast %217 : vector<1x16x16xbf16> to vector<16x16xbf16>
      %cst_125 = arith.constant dense<0.000000e+00> : vector<128x16xf32>
      %219 = tpu.matmul %216, %218, %cst_125 {dimension_numbers = #tpu.dot_dimension_numbers<[1], [0], [0], [1], [0, 0, 1, 1], [], []>} : vector<128x16xbf16>, vector<16x16xbf16>, vector<128x16xf32> -> vector<128x16xf32>
      %220 = arith.addf %214, %219 : vector<128x16xf32>
      %c8_126 = arith.constant 8 : index
      %c0_127 = arith.constant 0 : index
      %221 = vector.load %arg38[%c8_126, %c0_127] : memref<144x16xf32, #tpu.memory_space<vmem>>, vector<128x16xf32>
      %222 = arith.truncf %221 : vector<128x16xf32> to vector<128x16xbf16>
      %c1_128 = arith.constant 1 : index
      %c0_129 = arith.constant 0 : index
      %c0_130 = arith.constant 0 : index
      %223 = vector.load %arg7[%c1_128, %c0_129, %c0_130] : memref<3x16x16xbf16, #tpu.memory_space<vmem>>, vector<1x16x16xbf16>
      %224 = vector.shape_cast %223 : vector<1x16x16xbf16> to vector<16x16xbf16>
      %cst_131 = arith.constant dense<0.000000e+00> : vector<128x16xf32>
      %225 = tpu.matmul %222, %224, %cst_131 {dimension_numbers = #tpu.dot_dimension_numbers<[1], [0], [0], [1], [0, 0, 1, 1], [], []>} : vector<128x16xbf16>, vector<16x16xbf16>, vector<128x16xf32> -> vector<128x16xf32>
      %226 = arith.addf %220, %225 : vector<128x16xf32>
      %c9_132 = arith.constant 9 : index
      %c0_133 = arith.constant 0 : index
      %227 = vector.load %arg38[%c9_132, %c0_133] : memref<144x16xf32, #tpu.memory_space<vmem>>, vector<128x16xf32>
      %228 = arith.truncf %227 : vector<128x16xf32> to vector<128x16xbf16>
      %c2_134 = arith.constant 2 : index
      %c0_135 = arith.constant 0 : index
      %c0_136 = arith.constant 0 : index
      %229 = vector.load %arg7[%c2_134, %c0_135, %c0_136] : memref<3x16x16xbf16, #tpu.memory_space<vmem>>, vector<1x16x16xbf16>
      %230 = vector.shape_cast %229 : vector<1x16x16xbf16> to vector<16x16xbf16>
      %cst_137 = arith.constant dense<0.000000e+00> : vector<128x16xf32>
      %231 = tpu.matmul %228, %230, %cst_137 {dimension_numbers = #tpu.dot_dimension_numbers<[1], [0], [0], [1], [0, 0, 1, 1], [], []>} : vector<128x16xbf16>, vector<16x16xbf16>, vector<128x16xf32> -> vector<128x16xf32>
      %232 = arith.addf %226, %231 : vector<128x16xf32>
      %c0_138 = arith.constant 0 : index
      %c0_139 = arith.constant 0 : index
      %233 = vector.load %arg8[%c0_138, %c0_139] : memref<1x16xf32, #tpu.memory_space<vmem>>, vector<1x16xf32>
      %234 = vector.broadcast %233 : vector<1x16xf32> to vector<128x16xf32>
      %235 = arith.addf %232, %234 : vector<128x16xf32>
      %cst_140 = arith.constant 0.000000e+00 : f32
      %236 = vector.broadcast %cst_140 : f32 to vector<128x16xf32>
      %237 = arith.maximumf %235, %236 : vector<128x16xf32>
      %c8_141 = arith.constant 8 : index
      %c0_142 = arith.constant 0 : index
      %238 = vector.load %arg39[%c8_141, %c0_142] : memref<144x16xf32, #tpu.memory_space<vmem>>, vector<128x16xf32>
      tpu.vector_store %arg39[%c8_141, %c0_142], %237 {strides = array<i32>} : memref<144x16xf32, #tpu.memory_space<vmem>>, vector<128x16xf32>,
      %cst_143 = arith.constant 0.000000e+00 : f32
      %239 = vector.broadcast %cst_143 : f32 to vector<128x16xf32>
      %c6_144 = arith.constant 6 : index
      %c0_145 = arith.constant 0 : index
      %240 = vector.load %arg39[%c6_144, %c0_145] : memref<144x16xf32, #tpu.memory_space<vmem>>, vector<128x16xf32>
      %241 = arith.truncf %240 : vector<128x16xf32> to vector<128x16xbf16>
      %c0_146 = arith.constant 0 : index
      %c0_147 = arith.constant 0 : index
      %c0_148 = arith.constant 0 : index
      %c0_149 = arith.constant 0 : index
      %242 = vector.load %arg9[%c0_146, %c0_147, %c0_148, %c0_149] : memref<2x3x16x16xbf16, #tpu.memory_space<vmem>>, vector<1x1x16x16xbf16>
      %243 = vector.shape_cast %242 : vector<1x1x16x16xbf16> to vector<16x16xbf16>
      %cst_150 = arith.constant dense<0.000000e+00> : vector<128x16xf32>
      %244 = tpu.matmul %241, %243, %cst_150 {dimension_numbers = #tpu.dot_dimension_numbers<[1], [0], [0], [1], [0, 0, 1, 1], [], []>} : vector<128x16xbf16>, vector<16x16xbf16>, vector<128x16xf32> -> vector<128x16xf32>
      %245 = arith.addf %239, %244 : vector<128x16xf32>
      %c8_151 = arith.constant 8 : index
      %c0_152 = arith.constant 0 : index
      %246 = vector.load %arg39[%c8_151, %c0_152] : memref<144x16xf32, #tpu.memory_space<vmem>>, vector<128x16xf32>
      %247 = arith.truncf %246 : vector<128x16xf32> to vector<128x16xbf16>
      %c0_153 = arith.constant 0 : index
      %c1_154 = arith.constant 1 : index
      %c0_155 = arith.constant 0 : index
      %c0_156 = arith.constant 0 : index
      %248 = vector.load %arg9[%c0_153, %c1_154, %c0_155, %c0_156] : memref<2x3x16x16xbf16, #tpu.memory_space<vmem>>, vector<1x1x16x16xbf16>
      %249 = vector.shape_cast %248 : vector<1x1x16x16xbf16> to vector<16x16xbf16>
      %cst_157 = arith.constant dense<0.000000e+00> : vector<128x16xf32>
      %250 = tpu.matmul %247, %249, %cst_157 {dimension_numbers = #tpu.dot_dimension_numbers<[1], [0], [0], [1], [0, 0, 1, 1], [], []>} : vector<128x16xbf16>, vector<16x16xbf16>, vector<128x16xf32> -> vector<128x16xf32>
      %251 = arith.addf %245, %250 : vector<128x16xf32>
      %c10_158 = arith.constant 10 : index
      %c0_159 = arith.constant 0 : index
      %252 = vector.load %arg39[%c10_158, %c0_159] : memref<144x16xf32, #tpu.memory_space<vmem>>, vector<128x16xf32>
      %253 = arith.truncf %252 : vector<128x16xf32> to vector<128x16xbf16>
      %c0_160 = arith.constant 0 : index
      %c2_161 = arith.constant 2 : index
      %c0_162 = arith.constant 0 : index
      %c0_163 = arith.constant 0 : index
      %254 = vector.load %arg9[%c0_160, %c2_161, %c0_162, %c0_163] : memref<2x3x16x16xbf16, #tpu.memory_space<vmem>>, vector<1x1x16x16xbf16>
      %255 = vector.shape_cast %254 : vector<1x1x16x16xbf16> to vector<16x16xbf16>
      %cst_164 = arith.constant dense<0.000000e+00> : vector<128x16xf32>
      %256 = tpu.matmul %253, %255, %cst_164 {dimension_numbers = #tpu.dot_dimension_numbers<[1], [0], [0], [1], [0, 0, 1, 1], [], []>} : vector<128x16xbf16>, vector<16x16xbf16>, vector<128x16xf32> -> vector<128x16xf32>
      %257 = arith.addf %251, %256 : vector<128x16xf32>
      %c0_165 = arith.constant 0 : index
      %c0_166 = arith.constant 0 : index
      %c0_167 = arith.constant 0 : index
      %258 = vector.load %arg10[%c0_165, %c0_166, %c0_167] : memref<2x1x16xf32, #tpu.memory_space<vmem>>, vector<1x1x16xf32>
      %259 = vector.shape_cast %258 : vector<1x1x16xf32> to vector<1x16xf32>
      %260 = vector.broadcast %259 : vector<1x16xf32> to vector<128x16xf32>
      %261 = arith.addf %257, %260 : vector<128x16xf32>
      %cst_168 = arith.constant 0.000000e+00 : f32
      %262 = vector.broadcast %cst_168 : f32 to vector<128x16xf32>
      %263 = arith.maximumf %261, %262 : vector<128x16xf32>
      %264 = arith.addf %237, %263 : vector<128x16xf32>
      %c8_169 = arith.constant 8 : index
      %c0_170 = arith.constant 0 : index
      %265 = vector.load %arg39[%c8_169, %c0_170] : memref<144x16xf32, #tpu.memory_space<vmem>>, vector<128x16xf32>
      tpu.vector_store %arg39[%c8_169, %c0_170], %264 {strides = array<i32>} : memref<144x16xf32, #tpu.memory_space<vmem>>, vector<128x16xf32>,
      %cst_171 = arith.constant 0.000000e+00 : f32
      %266 = vector.broadcast %cst_171 : f32 to vector<128x16xf32>
      %c4_172 = arith.constant 4 : index
      %c0_173 = arith.constant 0 : index
      %267 = vector.load %arg39[%c4_172, %c0_173] : memref<144x16xf32, #tpu.memory_space<vmem>>, vector<128x16xf32>
      %268 = arith.truncf %267 : vector<128x16xf32> to vector<128x16xbf16>
      %c1_174 = arith.constant 1 : index
      %c0_175 = arith.constant 0 : index
      %c0_176 = arith.constant 0 : index
      %c0_177 = arith.constant 0 : index
      %269 = vector.load %arg9[%c1_174, %c0_175, %c0_176, %c0_177] : memref<2x3x16x16xbf16, #tpu.memory_space<vmem>>, vector<1x1x16x16xbf16>
      %270 = vector.shape_cast %269 : vector<1x1x16x16xbf16> to vector<16x16xbf16>
      %cst_178 = arith.constant dense<0.000000e+00> : vector<128x16xf32>
      %271 = tpu.matmul %268, %270, %cst_178 {dimension_numbers = #tpu.dot_dimension_numbers<[1], [0], [0], [1], [0, 0, 1, 1], [], []>} : vector<128x16xbf16>, vector<16x16xbf16>, vector<128x16xf32> -> vector<128x16xf32>
      %272 = arith.addf %266, %271 : vector<128x16xf32>
      %c8_179 = arith.constant 8 : index
      %c0_180 = arith.constant 0 : index
      %273 = vector.load %arg39[%c8_179, %c0_180] : memref<144x16xf32, #tpu.memory_space<vmem>>, vector<128x16xf32>
      %274 = arith.truncf %273 : vector<128x16xf32> to vector<128x16xbf16>
      %c1_181 = arith.constant 1 : index
      %c1_182 = arith.constant 1 : index
      %c0_183 = arith.constant 0 : index
      %c0_184 = arith.constant 0 : index
      %275 = vector.load %arg9[%c1_181, %c1_182, %c0_183, %c0_184] : memref<2x3x16x16xbf16, #tpu.memory_space<vmem>>, vector<1x1x16x16xbf16>
      %276 = vector.shape_cast %275 : vector<1x1x16x16xbf16> to vector<16x16xbf16>
      %cst_185 = arith.constant dense<0.000000e+00> : vector<128x16xf32>
      %277 = tpu.matmul %274, %276, %cst_185 {dimension_numbers = #tpu.dot_dimension_numbers<[1], [0], [0], [1], [0, 0, 1, 1], [], []>} : vector<128x16xbf16>, vector<16x16xbf16>, vector<128x16xf32> -> vector<128x16xf32>
      %278 = arith.addf %272, %277 : vector<128x16xf32>
      %c12 = arith.constant 12 : index
      %c0_186 = arith.constant 0 : index
      %279 = vector.load %arg39[%c12, %c0_186] : memref<144x16xf32, #tpu.memory_space<vmem>>, vector<128x16xf32>
      %280 = arith.truncf %279 : vector<128x16xf32> to vector<128x16xbf16>
      %c1_187 = arith.constant 1 : index
      %c2_188 = arith.constant 2 : index
      %c0_189 = arith.constant 0 : index
      %c0_190 = arith.constant 0 : index
      %281 = vector.load %arg9[%c1_187, %c2_188, %c0_189, %c0_190] : memref<2x3x16x16xbf16, #tpu.memory_space<vmem>>, vector<1x1x16x16xbf16>
      %282 = vector.shape_cast %281 : vector<1x1x16x16xbf16> to vector<16x16xbf16>
      %cst_191 = arith.constant dense<0.000000e+00> : vector<128x16xf32>
      %283 = tpu.matmul %280, %282, %cst_191 {dimension_numbers = #tpu.dot_dimension_numbers<[1], [0], [0], [1], [0, 0, 1, 1], [], []>} : vector<128x16xbf16>, vector<16x16xbf16>, vector<128x16xf32> -> vector<128x16xf32>
      %284 = arith.addf %278, %283 : vector<128x16xf32>
      %c1_192 = arith.constant 1 : index
      %c0_193 = arith.constant 0 : index
      %c0_194 = arith.constant 0 : index
      %285 = vector.load %arg10[%c1_192, %c0_193, %c0_194] : memref<2x1x16xf32, #tpu.memory_space<vmem>>, vector<1x1x16xf32>
      %286 = vector.shape_cast %285 : vector<1x1x16xf32> to vector<1x16xf32>
      %287 = vector.broadcast %286 : vector<1x16xf32> to vector<128x16xf32>
      %288 = arith.addf %284, %287 : vector<128x16xf32>
      %cst_195 = arith.constant 0.000000e+00 : f32
      %289 = vector.broadcast %cst_195 : f32 to vector<128x16xf32>
      %290 = arith.maximumf %288, %289 : vector<128x16xf32>
      %291 = arith.addf %264, %290 : vector<128x16xf32>
      %c8_196 = arith.constant 8 : index
      %c0_197 = arith.constant 0 : index
      %292 = vector.load %arg39[%c8_196, %c0_197] : memref<144x16xf32, #tpu.memory_space<vmem>>, vector<128x16xf32>
      tpu.vector_store %arg39[%c8_196, %c0_197], %291 {strides = array<i32>} : memref<144x16xf32, #tpu.memory_space<vmem>>, vector<128x16xf32>,
      %293 = vector.shape_cast %291 : vector<128x16xf32> to vector<8x16x16xf32>
      %cst_198 = arith.constant dense<0.000000e+00> : vector<8x16xf32>
      %294 = vector.multi_reduction <add>, %293, %cst_198 [1] : vector<8x16x16xf32> to vector<8x16xf32>
      %cst_199 = arith.constant 6.250000e-02 : f32
      %295 = vector.broadcast %cst_199 : f32 to vector<8x16xf32>
      %296 = arith.mulf %294, %295 : vector<8x16xf32>
      %297 = arith.truncf %296 : vector<8x16xf32> to vector<8x16xbf16>
      %c0_200 = arith.constant 0 : index
      %c0_201 = arith.constant 0 : index
      %298 = vector.load %arg11[%c0_200, %c0_201] : memref<16x24xbf16, #tpu.memory_space<vmem>>, vector<16x24xbf16>
      %cst_202 = arith.constant dense<0.000000e+00> : vector<8x24xf32>
      %299 = tpu.matmul %297, %298, %cst_202 {dimension_numbers = #tpu.dot_dimension_numbers<[1], [0], [0], [1], [0, 0, 1, 1], [], []>} : vector<8x16xbf16>, vector<16x24xbf16>, vector<8x24xf32> -> vector<8x24xf32>
      %c0_203 = arith.constant 0 : index
      %c0_204 = arith.constant 0 : index
      %300 = vector.load %arg12[%c0_203, %c0_204] : memref<1x24xf32, #tpu.memory_space<vmem>>, vector<1x24xf32>
      %301 = vector.broadcast %300 : vector<1x24xf32> to vector<8x24xf32>
      %302 = arith.addf %299, %301 : vector<8x24xf32>
      %303 = arith.truncf %302 : vector<8x24xf32> to vector<8x24xbf16>
      %c0_205 = arith.constant 0 : index
      %c0_206 = arith.constant 0 : index
      %304 = vector.load %arg13[%c0_205, %c0_206] : memref<24x32xbf16, #tpu.memory_space<vmem>>, vector<24x32xbf16>
      %cst_207 = arith.constant dense<0.000000e+00> : vector<8x32xf32>
      %305 = tpu.matmul %303, %304, %cst_207 {dimension_numbers = #tpu.dot_dimension_numbers<[1], [0], [0], [1], [0, 0, 1, 1], [], []>} : vector<8x24xbf16>, vector<24x32xbf16>, vector<8x32xf32> -> vector<8x32xf32>
      %c0_208 = arith.constant 0 : index
      %c0_209 = arith.constant 0 : index
      %306 = vector.load %arg14[%c0_208, %c0_209] : memref<1x32xf32, #tpu.memory_space<vmem>>, vector<1x32xf32>
      %307 = vector.broadcast %306 : vector<1x32xf32> to vector<8x32xf32>
      %308 = arith.addf %305, %307 : vector<8x32xf32>
      %cst_210 = arith.constant 0.000000e+00 : f32
      %309 = vector.broadcast %cst_210 : f32 to vector<8x32xf32>
      %310 = arith.maximumf %308, %309 : vector<8x32xf32>
      %311 = arith.truncf %310 : vector<8x32xf32> to vector<8x32xbf16>
      %c0_211 = arith.constant 0 : index
      %c0_212 = arith.constant 0 : index
      %312 = vector.load %arg15[%c0_211, %c0_212] : memref<32x1xbf16, #tpu.memory_space<vmem>>, vector<32x1xbf16>
      %cst_213 = arith.constant dense<0.000000e+00> : vector<8x1xf32>
      %313 = tpu.matmul %311, %312, %cst_213 {dimension_numbers = #tpu.dot_dimension_numbers<[1], [0], [0], [1], [0, 0, 1, 1], [], []>} : vector<8x32xbf16>, vector<32x1xbf16>, vector<8x1xf32> -> vector<8x1xf32>
      %c0_214 = arith.constant 0 : index
      %c0_215 = arith.constant 0 : index
      %314 = vector.load %arg16[%c0_214, %c0_215] : memref<1x1xf32, #tpu.memory_space<vmem>>, vector<1x1xf32>
      %315 = vector.broadcast %314 : vector<1x1xf32> to vector<8x1xf32>
      %316 = arith.addf %313, %315 : vector<8x1xf32>
      %cst_216 = arith.constant 0.000000e+00 : f32
      %317 = vector.broadcast %cst_216 : f32 to vector<8x1xf32>
      %318 = arith.maximumf %316, %317 : vector<8x1xf32>
      %319 = math.absf %316 : vector<8x1xf32>
      %cst_217 = arith.constant 0.000000e+00 : f32
      %320 = vector.broadcast %cst_217 : f32 to vector<8x1xf32>
      %321 = arith.subf %320, %319 : vector<8x1xf32>
      %322 = math.exp %321 : vector<8x1xf32>
      %cst_218 = arith.constant 1.000000e+00 : f32
      %323 = vector.broadcast %cst_218 : f32 to vector<8x1xf32>
      %324 = arith.addf %323, %322 : vector<8x1xf32>
      %325 = math.log %324 : vector<8x1xf32>
      %326 = arith.addf %318, %325 : vector<8x1xf32>
      %c0_219 = arith.constant 0 : index
      %c0_220 = arith.constant 0 : index
      %327 = vector.load %arg41[%c0_219, %c0_220] : memref<8x1xf32, #tpu.memory_space<vmem>>, vector<8x1xf32>
      tpu.vector_store %arg41[%c0_219, %c0_220], %326 {strides = array<i32>} : memref<8x1xf32, #tpu.memory_space<vmem>>, vector<8x1xf32>,
      %328 = arith.truncf %302 : vector<8x24xf32> to vector<8x24xbf16>
      %c0_221 = arith.constant 0 : index
      %c0_222 = arith.constant 0 : index
      %329 = vector.load %arg17[%c0_221, %c0_222] : memref<24x32xbf16, #tpu.memory_space<vmem>>, vector<24x32xbf16>
      %cst_223 = arith.constant dense<0.000000e+00> : vector<8x32xf32>
      %330 = tpu.matmul %328, %329, %cst_223 {dimension_numbers = #tpu.dot_dimension_numbers<[1], [0], [0], [1], [0, 0, 1, 1], [], []>} : vector<8x24xbf16>, vector<24x32xbf16>, vector<8x32xf32> -> vector<8x32xf32>
      %c0_224 = arith.constant 0 : index
      %c0_225 = arith.constant 0 : index
      %331 = vector.load %arg18[%c0_224, %c0_225] : memref<1x32xf32, #tpu.memory_space<vmem>>, vector<1x32xf32>
      %332 = vector.broadcast %331 : vector<1x32xf32> to vector<8x32xf32>
      %333 = arith.addf %330, %332 : vector<8x32xf32>
      %c0_226 = arith.constant 0 : index
      %c0_227 = arith.constant 0 : index
      %334 = vector.load %arg19[%c0_226, %c0_227] : memref<8x32xf32, #tpu.memory_space<vmem>>, vector<8x32xf32>
      %335 = arith.addf %333, %334 : vector<8x32xf32>
      %c0_228 = arith.constant 0 : index
      %c0_229 = arith.constant 0 : index
      %336 = vector.load %arg40[%c0_228, %c0_229] : memref<8x32xf32, #tpu.memory_space<vmem>>, vector<8x32xf32>
      tpu.vector_store %arg40[%c0_228, %c0_229], %335 {strides = array<i32>} : memref<8x32xf32, #tpu.memory_space<vmem>>, vector<8x32xf32>,
    } else {
    }
    %c0 = arith.constant 0 : index
    %c0_1 = arith.constant 0 : index
    %3 = vector.load %arg40[%c0, %c0_1] : memref<8x32xf32, #tpu.memory_space<vmem>>, vector<8x32xf32>
    %c0_2 = arith.constant 0 : index
    %c0_3 = arith.constant 0 : index
    %c0_4 = arith.constant 0 : index
    %4 = vector.load %arg20[%c0_2, %c0_3, %c0_4] : memref<1x1x32xf32, #tpu.memory_space<vmem>>, vector<1x1x32xf32>
    %5 = vector.shape_cast %4 : vector<1x1x32xf32> to vector<1x32xf32>
    %c0_5 = arith.constant 0 : index
    %c0_6 = arith.constant 0 : index
    %c0_7 = arith.constant 0 : index
    %6 = vector.load %arg21[%c0_5, %c0_6, %c0_7] : memref<1x1x32xf32, #tpu.memory_space<vmem>>, vector<1x1x32xf32>
    %7 = vector.shape_cast %6 : vector<1x1x32xf32> to vector<1x32xf32>
    %cst = arith.constant dense<0.000000e+00> : vector<8xf32>
    %8 = vector.multi_reduction <add>, %3, %cst [1] : vector<8x32xf32> to vector<8xf32>
    %9 = vector.shape_cast %8 : vector<8xf32> to vector<8x1xf32>
    %cst_8 = arith.constant 3.200000e+01 : f32
    %10 = vector.broadcast %cst_8 : f32 to vector<8x1xf32>
    %11 = arith.divf %9, %10 : vector<8x1xf32>
    %12 = vector.broadcast %11 : vector<8x1xf32> to vector<8x32xf32>
    %13 = arith.subf %3, %12 : vector<8x32xf32>
    %14 = arith.mulf %13, %13 : vector<8x32xf32>
    %cst_9 = arith.constant dense<0.000000e+00> : vector<8xf32>
    %15 = vector.multi_reduction <add>, %14, %cst_9 [1] : vector<8x32xf32> to vector<8xf32>
    %16 = vector.shape_cast %15 : vector<8xf32> to vector<8x1xf32>
    %cst_10 = arith.constant 3.200000e+01 : f32
    %17 = vector.broadcast %cst_10 : f32 to vector<8x1xf32>
    %18 = arith.divf %16, %17 : vector<8x1xf32>
    %19 = vector.broadcast %11 : vector<8x1xf32> to vector<8x32xf32>
    %20 = arith.subf %3, %19 : vector<8x32xf32>
    %cst_11 = arith.constant 9.99999974E-6 : f32
    %21 = vector.broadcast %cst_11 : f32 to vector<8x1xf32>
    %22 = arith.addf %18, %21 : vector<8x1xf32>
    %23 = math.rsqrt %22 : vector<8x1xf32>
    %24 = vector.broadcast %23 : vector<8x1xf32> to vector<8x32xf32>
    %25 = arith.mulf %20, %24 : vector<8x32xf32>
    %26 = vector.broadcast %5 : vector<1x32xf32> to vector<8x32xf32>
    %27 = arith.mulf %25, %26 : vector<8x32xf32>
    %28 = vector.broadcast %7 : vector<1x32xf32> to vector<8x32xf32>
    %29 = arith.addf %27, %28 : vector<8x32xf32>
    %30 = arith.truncf %29 : vector<8x32xf32> to vector<8x32xbf16>
    %c0_12 = arith.constant 0 : index
    %c0_13 = arith.constant 0 : index
    %c0_14 = arith.constant 0 : index
    %31 = vector.load %arg22[%c0_12, %c0_13, %c0_14] : memref<1x32x96xbf16, #tpu.memory_space<vmem>>, vector<1x32x96xbf16>
    %32 = vector.shape_cast %31 : vector<1x32x96xbf16> to vector<32x96xbf16>
    %cst_15 = arith.constant dense<0.000000e+00> : vector<8x96xf32>
    %33 = tpu.matmul %30, %32, %cst_15 {dimension_numbers = #tpu.dot_dimension_numbers<[1], [0], [0], [1], [0, 0, 1, 1], [], []>} : vector<8x32xbf16>, vector<32x96xbf16>, vector<8x96xf32> -> vector<8x96xf32>
    %c0_16 = arith.constant 0 : index
    %c0_17 = arith.constant 0 : index
    %c0_18 = arith.constant 0 : index
    %34 = vector.load %arg23[%c0_16, %c0_17, %c0_18] : memref<1x1x96xf32, #tpu.memory_space<vmem>>, vector<1x1x96xf32>
    %35 = vector.shape_cast %34 : vector<1x1x96xf32> to vector<1x96xf32>
    %36 = vector.broadcast %35 : vector<1x96xf32> to vector<8x96xf32>
    %37 = arith.addf %33, %36 : vector<8x96xf32>
    %38 = vector.extract_strided_slice %37 {offsets = [0, 0], sizes = [8, 8], strides = [1, 1]} : vector<8x96xf32> to vector<8x8xf32>
    %39 = vector.extract_strided_slice %37 {offsets = [0, 8], sizes = [8, 8], strides = [1, 1]} : vector<8x96xf32> to vector<8x8xf32>
    %40 = vector.extract_strided_slice %37 {offsets = [0, 16], sizes = [8, 8], strides = [1, 1]} : vector<8x96xf32> to vector<8x8xf32>
    %41 = vector.extract_strided_slice %37 {offsets = [0, 24], sizes = [8, 8], strides = [1, 1]} : vector<8x96xf32> to vector<8x8xf32>
    %42 = vector.shape_cast %38 : vector<8x8xf32> to vector<1x8x8xf32>
    %43 = vector.shape_cast %39 : vector<8x8xf32> to vector<1x8x8xf32>
    %44 = vector.shape_cast %40 : vector<8x8xf32> to vector<1x8x8xf32>
    %45 = vector.shape_cast %41 : vector<8x8xf32> to vector<1x8x8xf32>
    %46 = tpu.concatenate %42, %43, %44, %45 in 0 : vector<1x8x8xf32>, vector<1x8x8xf32>, vector<1x8x8xf32>, vector<1x8x8xf32> -> vector<4x8x8xf32>
    %47 = arith.truncf %46 : vector<4x8x8xf32> to vector<4x8x8xbf16>
    %48 = vector.extract_strided_slice %37 {offsets = [0, 32], sizes = [8, 8], strides = [1, 1]} : vector<8x96xf32> to vector<8x8xf32>
    %49 = vector.extract_strided_slice %37 {offsets = [0, 40], sizes = [8, 8], strides = [1, 1]} : vector<8x96xf32> to vector<8x8xf32>
    %50 = vector.extract_strided_slice %37 {offsets = [0, 48], sizes = [8, 8], strides = [1, 1]} : vector<8x96xf32> to vector<8x8xf32>
    %51 = vector.extract_strided_slice %37 {offsets = [0, 56], sizes = [8, 8], strides = [1, 1]} : vector<8x96xf32> to vector<8x8xf32>
    %52 = vector.shape_cast %48 : vector<8x8xf32> to vector<1x8x8xf32>
    %53 = vector.shape_cast %49 : vector<8x8xf32> to vector<1x8x8xf32>
    %54 = vector.shape_cast %50 : vector<8x8xf32> to vector<1x8x8xf32>
    %55 = vector.shape_cast %51 : vector<8x8xf32> to vector<1x8x8xf32>
    %56 = tpu.concatenate %52, %53, %54, %55 in 0 : vector<1x8x8xf32>, vector<1x8x8xf32>, vector<1x8x8xf32>, vector<1x8x8xf32> -> vector<4x8x8xf32>
    %57 = arith.truncf %56 : vector<4x8x8xf32> to vector<4x8x8xbf16>
    %58 = vector.extract_strided_slice %37 {offsets = [0, 64], sizes = [8, 8], strides = [1, 1]} : vector<8x96xf32> to vector<8x8xf32>
    %59 = vector.extract_strided_slice %37 {offsets = [0, 72], sizes = [8, 8], strides = [1, 1]} : vector<8x96xf32> to vector<8x8xf32>
    %60 = vector.extract_strided_slice %37 {offsets = [0, 80], sizes = [8, 8], strides = [1, 1]} : vector<8x96xf32> to vector<8x8xf32>
    %61 = vector.extract_strided_slice %37 {offsets = [0, 88], sizes = [8, 8], strides = [1, 1]} : vector<8x96xf32> to vector<8x8xf32>
    %62 = vector.shape_cast %58 : vector<8x8xf32> to vector<1x8x8xf32>
    %63 = vector.shape_cast %59 : vector<8x8xf32> to vector<1x8x8xf32>
    %64 = vector.shape_cast %60 : vector<8x8xf32> to vector<1x8x8xf32>
    %65 = vector.shape_cast %61 : vector<8x8xf32> to vector<1x8x8xf32>
    %66 = tpu.concatenate %62, %63, %64, %65 in 0 : vector<1x8x8xf32>, vector<1x8x8xf32>, vector<1x8x8xf32>, vector<1x8x8xf32> -> vector<4x8x8xf32>
    %67 = arith.truncf %66 : vector<4x8x8xf32> to vector<4x8x8xbf16>
    "tpu.trace_start"() <{level = 10 : i32, message = "hqd,hkd->hqk"}> : () -> ()
    %cst_19 = arith.constant dense<0.000000e+00> : vector<4x8x8xf32>
    %68 = tpu.matmul %47, %57, %cst_19 {dimension_numbers = #tpu.dot_dimension_numbers<[2], [2], [1], [1], [0, 0, 0, 1, 1, 1], [0], [0]>} : vector<4x8x8xbf16>, vector<4x8x8xbf16>, vector<4x8x8xf32> -> vector<4x8x8xf32>
    "tpu.trace_stop"() : () -> ()
    %c0_20 = arith.constant 0 : index
    %c0_21 = arith.constant 0 : index
    %c0_22 = arith.constant 0 : index
    %69 = vector.load %arg4[%c0_20, %c0_21, %c0_22] : memref<1x1x8xf32, #tpu.memory_space<vmem>>, vector<1x1x8xf32>
    %70 = vector.broadcast %69 : vector<1x1x8xf32> to vector<4x8x8xf32>
    %71 = arith.addf %68, %70 : vector<4x8x8xf32>
    %cst_23 = arith.constant dense<0xFF800000> : vector<4x8xf32>
    %72 = vector.multi_reduction <maximumf>, %71, %cst_23 [2] : vector<4x8x8xf32> to vector<4x8xf32>
    %73 = vector.shape_cast %72 : vector<4x8xf32> to vector<4x8x1xf32>
    %74 = vector.broadcast %73 : vector<4x8x1xf32> to vector<4x8x8xf32>
    %75 = arith.subf %71, %74 : vector<4x8x8xf32>
    %76 = math.exp %75 : vector<4x8x8xf32>
    %cst_24 = arith.constant dense<0.000000e+00> : vector<4x8xf32>
    %77 = vector.multi_reduction <add>, %76, %cst_24 [2] : vector<4x8x8xf32> to vector<4x8xf32>
    %78 = vector.shape_cast %77 : vector<4x8xf32> to vector<4x8x1xf32>
    %79 = tpu.reciprocal %78 {approx = true} : vector<4x8x1xf32> -> vector<4x8x1xf32>
    %80 = vector.broadcast %79 : vector<4x8x1xf32> to vector<4x8x8xf32>
    %81 = arith.mulf %76, %80 : vector<4x8x8xf32>
    %82 = arith.truncf %81 : vector<4x8x8xf32> to vector<4x8x8xbf16>
    "tpu.trace_start"() <{level = 10 : i32, message = "hqk,hkd->hqd"}> : () -> ()
    %cst_25 = arith.constant dense<0.000000e+00> : vector<4x8x8xf32>
    %83 = tpu.matmul %82, %67, %cst_25 {dimension_numbers = #tpu.dot_dimension_numbers<[2], [1], [1], [2], [0, 0, 0, 1, 1, 2], [0], [0]>} : vector<4x8x8xbf16>, vector<4x8x8xbf16>, vector<4x8x8xf32> -> vector<4x8x8xf32>
    "tpu.trace_stop"() : () -> ()
    %84 = arith.truncf %83 : vector<4x8x8xf32> to vector<4x8x8xbf16>
    %c0_26 = arith.constant 0 : index
    %c0_27 = arith.constant 0 : index
    %c0_28 = arith.constant 0 : index
    %c0_29 = arith.constant 0 : index
    %85 = vector.load %arg24[%c0_26, %c0_27, %c0_28, %c0_29] : memref<1x4x8x32xbf16, #tpu.memory_space<vmem>>, vector<1x4x8x32xbf16>
    %86 = vector.shape_cast %85 : vector<1x4x8x32xbf16> to vector<4x8x32xbf16>
    "tpu.trace_start"() <{level = 10 : i32, message = "hqc,hcd->hqd"}> : () -> ()
    %cst_30 = arith.constant dense<0.000000e+00> : vector<4x8x32xf32>
    %87 = tpu.matmul %84, %86, %cst_30 {dimension_numbers = #tpu.dot_dimension_numbers<[2], [1], [1], [2], [0, 0, 0, 1, 1, 2], [0], [0]>} : vector<4x8x8xbf16>, vector<4x8x32xbf16>, vector<4x8x32xf32> -> vector<4x8x32xf32>
    "tpu.trace_stop"() : () -> ()
    %cst_31 = arith.constant dense<0.000000e+00> : vector<8x32xf32>
    %88 = vector.multi_reduction <add>, %87, %cst_31 [0] : vector<4x8x32xf32> to vector<8x32xf32>
    %89 = arith.addf %3, %88 : vector<8x32xf32>
    %c0_32 = arith.constant 0 : index
    %c0_33 = arith.constant 0 : index
    %c0_34 = arith.constant 0 : index
    %90 = vector.load %arg25[%c0_32, %c0_33, %c0_34] : memref<1x1x32xf32, #tpu.memory_space<vmem>>, vector<1x1x32xf32>
    %91 = vector.shape_cast %90 : vector<1x1x32xf32> to vector<1x32xf32>
    %92 = vector.broadcast %91 : vector<1x32xf32> to vector<8x32xf32>
    %93 = arith.addf %89, %92 : vector<8x32xf32>
    %c0_35 = arith.constant 0 : index
    %c0_36 = arith.constant 0 : index
    %c0_37 = arith.constant 0 : index
    %94 = vector.load %arg26[%c0_35, %c0_36, %c0_37] : memref<1x1x32xf32, #tpu.memory_space<vmem>>, vector<1x1x32xf32>
    %95 = vector.shape_cast %94 : vector<1x1x32xf32> to vector<1x32xf32>
    %c0_38 = arith.constant 0 : index
    %c0_39 = arith.constant 0 : index
    %c0_40 = arith.constant 0 : index
    %96 = vector.load %arg27[%c0_38, %c0_39, %c0_40] : memref<1x1x32xf32, #tpu.memory_space<vmem>>, vector<1x1x32xf32>
    %97 = vector.shape_cast %96 : vector<1x1x32xf32> to vector<1x32xf32>
    %cst_41 = arith.constant dense<0.000000e+00> : vector<8xf32>
    %98 = vector.multi_reduction <add>, %93, %cst_41 [1] : vector<8x32xf32> to vector<8xf32>
    %99 = vector.shape_cast %98 : vector<8xf32> to vector<8x1xf32>
    %cst_42 = arith.constant 3.200000e+01 : f32
    %100 = vector.broadcast %cst_42 : f32 to vector<8x1xf32>
    %101 = arith.divf %99, %100 : vector<8x1xf32>
    %102 = vector.broadcast %101 : vector<8x1xf32> to vector<8x32xf32>
    %103 = arith.subf %93, %102 : vector<8x32xf32>
    %104 = arith.mulf %103, %103 : vector<8x32xf32>
    %cst_43 = arith.constant dense<0.000000e+00> : vector<8xf32>
    %105 = vector.multi_reduction <add>, %104, %cst_43 [1] : vector<8x32xf32> to vector<8xf32>
    %106 = vector.shape_cast %105 : vector<8xf32> to vector<8x1xf32>
    %cst_44 = arith.constant 3.200000e+01 : f32
    %107 = vector.broadcast %cst_44 : f32 to vector<8x1xf32>
    %108 = arith.divf %106, %107 : vector<8x1xf32>
    %109 = vector.broadcast %101 : vector<8x1xf32> to vector<8x32xf32>
    %110 = arith.subf %93, %109 : vector<8x32xf32>
    %cst_45 = arith.constant 9.99999974E-6 : f32
    %111 = vector.broadcast %cst_45 : f32 to vector<8x1xf32>
    %112 = arith.addf %108, %111 : vector<8x1xf32>
    %113 = math.rsqrt %112 : vector<8x1xf32>
    %114 = vector.broadcast %113 : vector<8x1xf32> to vector<8x32xf32>
    %115 = arith.mulf %110, %114 : vector<8x32xf32>
    %116 = vector.broadcast %95 : vector<1x32xf32> to vector<8x32xf32>
    %117 = arith.mulf %115, %116 : vector<8x32xf32>
    %118 = vector.broadcast %97 : vector<1x32xf32> to vector<8x32xf32>
    %119 = arith.addf %117, %118 : vector<8x32xf32>
    %120 = arith.truncf %119 : vector<8x32xf32> to vector<8x32xbf16>
    %c0_46 = arith.constant 0 : index
    %c0_47 = arith.constant 0 : index
    %c0_48 = arith.constant 0 : index
    %121 = vector.load %arg28[%c0_46, %c0_47, %c0_48] : memref<1x32x128xbf16, #tpu.memory_space<vmem>>, vector<1x32x128xbf16>
    %122 = vector.shape_cast %121 : vector<1x32x128xbf16> to vector<32x128xbf16>
    %cst_49 = arith.constant dense<0.000000e+00> : vector<8x128xf32>
    %123 = tpu.matmul %120, %122, %cst_49 {dimension_numbers = #tpu.dot_dimension_numbers<[1], [0], [0], [1], [0, 0, 1, 1], [], []>} : vector<8x32xbf16>, vector<32x128xbf16>, vector<8x128xf32> -> vector<8x128xf32>
    %c0_50 = arith.constant 0 : index
    %c0_51 = arith.constant 0 : index
    %c0_52 = arith.constant 0 : index
    %124 = vector.load %arg29[%c0_50, %c0_51, %c0_52] : memref<1x1x128xf32, #tpu.memory_space<vmem>>, vector<1x1x128xf32>
    %125 = vector.shape_cast %124 : vector<1x1x128xf32> to vector<1x128xf32>
    %126 = vector.broadcast %125 : vector<1x128xf32> to vector<8x128xf32>
    %127 = arith.addf %123, %126 : vector<8x128xf32>
    %cst_53 = arith.constant 5.000000e-01 : f32
    %128 = vector.broadcast %cst_53 : f32 to vector<8x128xf32>
    %129 = arith.mulf %128, %127 : vector<8x128xf32>
    %cst_54 = arith.constant 4.471500e-02 : f32
    %130 = vector.broadcast %cst_54 : f32 to vector<8x128xf32>
    %131 = arith.mulf %130, %127 : vector<8x128xf32>
    %132 = arith.mulf %131, %127 : vector<8x128xf32>
    %133 = arith.mulf %132, %127 : vector<8x128xf32>
    %134 = arith.addf %127, %133 : vector<8x128xf32>
    %cst_55 = arith.constant 0.797884583 : f32
    %135 = vector.broadcast %cst_55 : f32 to vector<8x128xf32>
    %136 = arith.mulf %135, %134 : vector<8x128xf32>
    %137 = math.tanh %136 : vector<8x128xf32>
    %cst_56 = arith.constant 1.000000e+00 : f32
    %138 = vector.broadcast %cst_56 : f32 to vector<8x128xf32>
    %139 = arith.addf %138, %137 : vector<8x128xf32>
    %140 = arith.mulf %129, %139 : vector<8x128xf32>
    %141 = arith.truncf %140 : vector<8x128xf32> to vector<8x128xbf16>
    %c0_57 = arith.constant 0 : index
    %c0_58 = arith.constant 0 : index
    %c0_59 = arith.constant 0 : index
    %142 = vector.load %arg30[%c0_57, %c0_58, %c0_59] : memref<1x128x32xbf16, #tpu.memory_space<vmem>>, vector<1x128x32xbf16>
    %143 = vector.shape_cast %142 : vector<1x128x32xbf16> to vector<128x32xbf16>
    %cst_60 = arith.constant dense<0.000000e+00> : vector<8x32xf32>
    %144 = tpu.matmul %141, %143, %cst_60 {dimension_numbers = #tpu.dot_dimension_numbers<[1], [0], [0], [1], [0, 0, 1, 1], [], []>} : vector<8x128xbf16>, vector<128x32xbf16>, vector<8x32xf32> -> vector<8x32xf32>
    %c0_61 = arith.constant 0 : index
    %c0_62 = arith.constant 0 : index
    %c0_63 = arith.constant 0 : index
    %145 = vector.load %arg31[%c0_61, %c0_62, %c0_63] : memref<1x1x32xf32, #tpu.memory_space<vmem>>, vector<1x1x32xf32>
    %146 = vector.shape_cast %145 : vector<1x1x32xf32> to vector<1x32xf32>
    %147 = vector.broadcast %146 : vector<1x32xf32> to vector<8x32xf32>
    %148 = arith.addf %144, %147 : vector<8x32xf32>
    %149 = arith.addf %93, %148 : vector<8x32xf32>
    %c0_64 = arith.constant 0 : index
    %c0_65 = arith.constant 0 : index
    %150 = vector.load %arg40[%c0_64, %c0_65] : memref<8x32xf32, #tpu.memory_space<vmem>>, vector<8x32xf32>
    tpu.vector_store %arg40[%c0_64, %c0_65], %149 {strides = array<i32>} : memref<8x32xf32, #tpu.memory_space<vmem>>, vector<8x32xf32>,
    %c1_i32 = arith.constant 1 : i32
    %151 = arith.cmpi eq, %arg1, %c1_i32 : i32
    %152 = arith.extui %151 : i1 to i32
    %c0_i32_66 = arith.constant 0 : i32
    %153 = arith.cmpi ne, %152, %c0_i32_66 : i32
    scf.if %153 {
      %c0_67 = arith.constant 0 : index
      %c0_68 = arith.constant 0 : index
      %154 = vector.load %arg40[%c0_67, %c0_68] : memref<8x32xf32, #tpu.memory_space<vmem>>, vector<8x32xf32>
      %c0_69 = arith.constant 0 : index
      %c0_70 = arith.constant 0 : index
      %155 = vector.load %arg32[%c0_69, %c0_70] : memref<1x32xf32, #tpu.memory_space<vmem>>, vector<1x32xf32>
      %c0_71 = arith.constant 0 : index
      %c0_72 = arith.constant 0 : index
      %156 = vector.load %arg33[%c0_71, %c0_72] : memref<1x32xf32, #tpu.memory_space<vmem>>, vector<1x32xf32>
      %cst_73 = arith.constant dense<0.000000e+00> : vector<8xf32>
      %157 = vector.multi_reduction <add>, %154, %cst_73 [1] : vector<8x32xf32> to vector<8xf32>
      %158 = vector.shape_cast %157 : vector<8xf32> to vector<8x1xf32>
      %cst_74 = arith.constant 3.200000e+01 : f32
      %159 = vector.broadcast %cst_74 : f32 to vector<8x1xf32>
      %160 = arith.divf %158, %159 : vector<8x1xf32>
      %161 = vector.broadcast %160 : vector<8x1xf32> to vector<8x32xf32>
      %162 = arith.subf %154, %161 : vector<8x32xf32>
      %163 = arith.mulf %162, %162 : vector<8x32xf32>
      %cst_75 = arith.constant dense<0.000000e+00> : vector<8xf32>
      %164 = vector.multi_reduction <add>, %163, %cst_75 [1] : vector<8x32xf32> to vector<8xf32>
      %165 = vector.shape_cast %164 : vector<8xf32> to vector<8x1xf32>
      %cst_76 = arith.constant 3.200000e+01 : f32
      %166 = vector.broadcast %cst_76 : f32 to vector<8x1xf32>
      %167 = arith.divf %165, %166 : vector<8x1xf32>
      %168 = vector.broadcast %160 : vector<8x1xf32> to vector<8x32xf32>
      %169 = arith.subf %154, %168 : vector<8x32xf32>
      %cst_77 = arith.constant 9.99999974E-6 : f32
      %170 = vector.broadcast %cst_77 : f32 to vector<8x1xf32>
      %171 = arith.addf %167, %170 : vector<8x1xf32>
      %172 = math.rsqrt %171 : vector<8x1xf32>
      %173 = vector.broadcast %172 : vector<8x1xf32> to vector<8x32xf32>
      %174 = arith.mulf %169, %173 : vector<8x32xf32>
      %175 = vector.broadcast %155 : vector<1x32xf32> to vector<8x32xf32>
      %176 = arith.mulf %174, %175 : vector<8x32xf32>
      %177 = vector.broadcast %156 : vector<1x32xf32> to vector<8x32xf32>
      %178 = arith.addf %176, %177 : vector<8x32xf32>
      %179 = arith.truncf %178 : vector<8x32xf32> to vector<8x32xbf16>
      %c0_78 = arith.constant 0 : index
      %c0_79 = arith.constant 0 : index
      %180 = vector.load %arg34[%c0_78, %c0_79] : memref<32x51xbf16, #tpu.memory_space<vmem>>, vector<32x51xbf16>
      %cst_80 = arith.constant dense<0.000000e+00> : vector<8x51xf32>
      %181 = tpu.matmul %179, %180, %cst_80 {dimension_numbers = #tpu.dot_dimension_numbers<[1], [0], [0], [1], [0, 0, 1, 1], [], []>} : vector<8x32xbf16>, vector<32x51xbf16>, vector<8x51xf32> -> vector<8x51xf32>
      %c0_81 = arith.constant 0 : index
      %c0_82 = arith.constant 0 : index
      %182 = vector.load %arg35[%c0_81, %c0_82] : memref<1x51xf32, #tpu.memory_space<vmem>>, vector<1x51xf32>
      %183 = vector.broadcast %182 : vector<1x51xf32> to vector<8x51xf32>
      %184 = arith.addf %181, %183 : vector<8x51xf32>
      %cst_83 = arith.constant 0.000000e+00 : f32
      %185 = vector.broadcast %cst_83 : f32 to vector<8x51xf32>
      %186 = arith.maximumf %184, %185 : vector<8x51xf32>
      %187 = math.absf %184 : vector<8x51xf32>
      %cst_84 = arith.constant 0.000000e+00 : f32
      %188 = vector.broadcast %cst_84 : f32 to vector<8x51xf32>
      %189 = arith.subf %188, %187 : vector<8x51xf32>
      %190 = math.exp %189 : vector<8x51xf32>
      %cst_85 = arith.constant 1.000000e+00 : f32
      %191 = vector.broadcast %cst_85 : f32 to vector<8x51xf32>
      %192 = arith.addf %191, %190 : vector<8x51xf32>
      %193 = math.log %192 : vector<8x51xf32>
      %194 = arith.addf %186, %193 : vector<8x51xf32>
      %c0_86 = arith.constant 0 : index
      %c0_87 = arith.constant 0 : index
      %195 = vector.load %arg41[%c0_86, %c0_87] : memref<8x1xf32, #tpu.memory_space<vmem>>, vector<8x1xf32>
      %cst_88 = arith.constant 0.000000e+00 : f32
      %196 = vector.broadcast %cst_88 : f32 to vector<8x76xf32>
      %197 = tpu.concatenate %195, %194, %196 in 1 : vector<8x1xf32>, vector<8x51xf32>, vector<8x76xf32> -> vector<8x128xf32>
      %c0_89 = arith.constant 0 : index
      %c0_90 = arith.constant 0 : index
      %c0_91 = arith.constant 0 : index
      %198 = vector.load %arg36[%c0_89, %c0_90, %c0_91] : memref<1x8x128xf32, #tpu.memory_space<vmem>>, vector<1x8x128xf32>
      %199 = vector.shape_cast %198 : vector<1x8x128xf32> to vector<8x128xf32>
      %200 = vector.shape_cast %197 : vector<8x128xf32> to vector<1x8x128xf32>
      tpu.vector_store %arg36[%c0_89, %c0_90, %c0_91], %200 {strides = array<i32>} : memref<1x8x128xf32, #tpu.memory_space<vmem>>, vector<1x8x128xf32>,
    } else {
    }
    return
  }
  func.func @transform_0(%arg0: i32, %arg1: i32) -> (i32, i32, i32) {
    %c0_i32 = arith.constant 0 : i32
    %c0_i32_0 = arith.constant 0 : i32
    %c0_i32_1 = arith.constant 0 : i32
    return %arg0, %c0_i32, %c0_i32_0 : i32, i32, i32
  }
  func.func @transform_1(%arg0: i32, %arg1: i32) -> (i32, i32, i32) {
    %c0_i32 = arith.constant 0 : i32
    %c0_i32_0 = arith.constant 0 : i32
    %c0_i32_1 = arith.constant 0 : i32
    return %arg0, %c0_i32, %c0_i32_0 : i32, i32, i32
  }
  func.func @transform_2(%arg0: i32, %arg1: i32) -> (i32, i32, i32) {
    %c0_i32 = arith.constant 0 : i32
    %c0_i32_0 = arith.constant 0 : i32
    %c0_i32_1 = arith.constant 0 : i32
    return %arg0, %c0_i32, %c0_i32_0 : i32, i32, i32
  }
  func.func @transform_3(%arg0: i32, %arg1: i32) -> (i32, i32, i32) {
    %c0_i32 = arith.constant 0 : i32
    %c0_i32_0 = arith.constant 0 : i32
    %c0_i32_1 = arith.constant 0 : i32
    %c0_i32_2 = arith.constant 0 : i32
    return %c0_i32, %c0_i32_0, %c0_i32_1 : i32, i32, i32
  }
  func.func @transform_4(%arg0: i32, %arg1: i32) -> (i32, i32) {
    %c0_i32 = arith.constant 0 : i32
    %c0_i32_0 = arith.constant 0 : i32
    %c0_i32_1 = arith.constant 0 : i32
    return %c0_i32, %c0_i32_0 : i32, i32
  }
  func.func @transform_5(%arg0: i32, %arg1: i32) -> (i32, i32, i32) {
    %c0_i32 = arith.constant 0 : i32
    %c0_i32_0 = arith.constant 0 : i32
    %c0_i32_1 = arith.constant 0 : i32
    %c0_i32_2 = arith.constant 0 : i32
    return %c0_i32, %c0_i32_0, %c0_i32_1 : i32, i32, i32
  }
  func.func @transform_6(%arg0: i32, %arg1: i32) -> (i32, i32) {
    %c0_i32 = arith.constant 0 : i32
    %c0_i32_0 = arith.constant 0 : i32
    %c0_i32_1 = arith.constant 0 : i32
    return %c0_i32, %c0_i32_0 : i32, i32
  }
  func.func @transform_7(%arg0: i32, %arg1: i32) -> (i32, i32, i32, i32) {
    %c0_i32 = arith.constant 0 : i32
    %c0_i32_0 = arith.constant 0 : i32
    %c0_i32_1 = arith.constant 0 : i32
    %c0_i32_2 = arith.constant 0 : i32
    %c0_i32_3 = arith.constant 0 : i32
    return %c0_i32, %c0_i32_0, %c0_i32_1, %c0_i32_2 : i32, i32, i32, i32
  }
  func.func @transform_8(%arg0: i32, %arg1: i32) -> (i32, i32, i32) {
    %c0_i32 = arith.constant 0 : i32
    %c0_i32_0 = arith.constant 0 : i32
    %c0_i32_1 = arith.constant 0 : i32
    %c0_i32_2 = arith.constant 0 : i32
    return %c0_i32, %c0_i32_0, %c0_i32_1 : i32, i32, i32
  }
  func.func @transform_9(%arg0: i32, %arg1: i32) -> (i32, i32) {
    %c0_i32 = arith.constant 0 : i32
    %c0_i32_0 = arith.constant 0 : i32
    %c0_i32_1 = arith.constant 0 : i32
    return %c0_i32, %c0_i32_0 : i32, i32
  }
  func.func @transform_10(%arg0: i32, %arg1: i32) -> (i32, i32) {
    %c0_i32 = arith.constant 0 : i32
    %c0_i32_0 = arith.constant 0 : i32
    %c0_i32_1 = arith.constant 0 : i32
    return %c0_i32, %c0_i32_0 : i32, i32
  }
  func.func @transform_11(%arg0: i32, %arg1: i32) -> (i32, i32) {
    %c0_i32 = arith.constant 0 : i32
    %c0_i32_0 = arith.constant 0 : i32
    %c0_i32_1 = arith.constant 0 : i32
    return %c0_i32, %c0_i32_0 : i32, i32
  }
  func.func @transform_12(%arg0: i32, %arg1: i32) -> (i32, i32) {
    %c0_i32 = arith.constant 0 : i32
    %c0_i32_0 = arith.constant 0 : i32
    %c0_i32_1 = arith.constant 0 : i32
    return %c0_i32, %c0_i32_0 : i32, i32
  }
  func.func @transform_13(%arg0: i32, %arg1: i32) -> (i32, i32) {
    %c0_i32 = arith.constant 0 : i32
    %c0_i32_0 = arith.constant 0 : i32
    %c0_i32_1 = arith.constant 0 : i32
    return %c0_i32, %c0_i32_0 : i32, i32
  }
  func.func @transform_14(%arg0: i32, %arg1: i32) -> (i32, i32) {
    %c0_i32 = arith.constant 0 : i32
    %c0_i32_0 = arith.constant 0 : i32
    %c0_i32_1 = arith.constant 0 : i32
    return %c0_i32, %c0_i32_0 : i32, i32
  }
  func.func @transform_15(%arg0: i32, %arg1: i32) -> (i32, i32) {
    %c0_i32 = arith.constant 0 : i32
    %c0_i32_0 = arith.constant 0 : i32
    %c0_i32_1 = arith.constant 0 : i32
    return %c0_i32, %c0_i32_0 : i32, i32
  }
  func.func @transform_16(%arg0: i32, %arg1: i32) -> (i32, i32) {
    %c0_i32 = arith.constant 0 : i32
    %c0_i32_0 = arith.constant 0 : i32
    %c0_i32_1 = arith.constant 0 : i32
    return %c0_i32, %c0_i32_0 : i32, i32
  }
  func.func @transform_17(%arg0: i32, %arg1: i32) -> (i32, i32) {
    %c0_i32 = arith.constant 0 : i32
    %c0_i32_0 = arith.constant 0 : i32
    %c0_i32_1 = arith.constant 0 : i32
    return %c0_i32, %c0_i32_0 : i32, i32
  }
  func.func @transform_18(%arg0: i32, %arg1: i32) -> (i32, i32, i32) {
    %c0_i32 = arith.constant 0 : i32
    %c0_i32_0 = arith.constant 0 : i32
    %c0_i32_1 = arith.constant 0 : i32
    return %arg1, %c0_i32, %c0_i32_0 : i32, i32, i32
  }
  func.func @transform_19(%arg0: i32, %arg1: i32) -> (i32, i32, i32) {
    %c0_i32 = arith.constant 0 : i32
    %c0_i32_0 = arith.constant 0 : i32
    %c0_i32_1 = arith.constant 0 : i32
    return %arg1, %c0_i32, %c0_i32_0 : i32, i32, i32
  }
  func.func @transform_20(%arg0: i32, %arg1: i32) -> (i32, i32, i32) {
    %c0_i32 = arith.constant 0 : i32
    %c0_i32_0 = arith.constant 0 : i32
    %c0_i32_1 = arith.constant 0 : i32
    return %arg1, %c0_i32, %c0_i32_0 : i32, i32, i32
  }
  func.func @transform_21(%arg0: i32, %arg1: i32) -> (i32, i32, i32) {
    %c0_i32 = arith.constant 0 : i32
    %c0_i32_0 = arith.constant 0 : i32
    %c0_i32_1 = arith.constant 0 : i32
    return %arg1, %c0_i32, %c0_i32_0 : i32, i32, i32
  }
  func.func @transform_22(%arg0: i32, %arg1: i32) -> (i32, i32, i32, i32) {
    %c0_i32 = arith.constant 0 : i32
    %c0_i32_0 = arith.constant 0 : i32
    %c0_i32_1 = arith.constant 0 : i32
    %c0_i32_2 = arith.constant 0 : i32
    return %arg1, %c0_i32, %c0_i32_0, %c0_i32_1 : i32, i32, i32, i32
  }
  func.func @transform_23(%arg0: i32, %arg1: i32) -> (i32, i32, i32) {
    %c0_i32 = arith.constant 0 : i32
    %c0_i32_0 = arith.constant 0 : i32
    %c0_i32_1 = arith.constant 0 : i32
    return %arg1, %c0_i32, %c0_i32_0 : i32, i32, i32
  }
  func.func @transform_24(%arg0: i32, %arg1: i32) -> (i32, i32, i32) {
    %c0_i32 = arith.constant 0 : i32
    %c0_i32_0 = arith.constant 0 : i32
    %c0_i32_1 = arith.constant 0 : i32
    return %arg1, %c0_i32, %c0_i32_0 : i32, i32, i32
  }
  func.func @transform_25(%arg0: i32, %arg1: i32) -> (i32, i32, i32) {
    %c0_i32 = arith.constant 0 : i32
    %c0_i32_0 = arith.constant 0 : i32
    %c0_i32_1 = arith.constant 0 : i32
    return %arg1, %c0_i32, %c0_i32_0 : i32, i32, i32
  }
  func.func @transform_26(%arg0: i32, %arg1: i32) -> (i32, i32, i32) {
    %c0_i32 = arith.constant 0 : i32
    %c0_i32_0 = arith.constant 0 : i32
    %c0_i32_1 = arith.constant 0 : i32
    return %arg1, %c0_i32, %c0_i32_0 : i32, i32, i32
  }
  func.func @transform_27(%arg0: i32, %arg1: i32) -> (i32, i32, i32) {
    %c0_i32 = arith.constant 0 : i32
    %c0_i32_0 = arith.constant 0 : i32
    %c0_i32_1 = arith.constant 0 : i32
    return %arg1, %c0_i32, %c0_i32_0 : i32, i32, i32
  }
  func.func @transform_28(%arg0: i32, %arg1: i32) -> (i32, i32, i32) {
    %c0_i32 = arith.constant 0 : i32
    %c0_i32_0 = arith.constant 0 : i32
    %c0_i32_1 = arith.constant 0 : i32
    return %arg1, %c0_i32, %c0_i32_0 : i32, i32, i32
  }
  func.func @transform_29(%arg0: i32, %arg1: i32) -> (i32, i32, i32) {
    %c0_i32 = arith.constant 0 : i32
    %c0_i32_0 = arith.constant 0 : i32
    %c0_i32_1 = arith.constant 0 : i32
    return %arg1, %c0_i32, %c0_i32_0 : i32, i32, i32
  }
  func.func @transform_30(%arg0: i32, %arg1: i32) -> (i32, i32) {
    %c0_i32 = arith.constant 0 : i32
    %c0_i32_0 = arith.constant 0 : i32
    %c0_i32_1 = arith.constant 0 : i32
    return %c0_i32, %c0_i32_0 : i32, i32
  }
  func.func @transform_31(%arg0: i32, %arg1: i32) -> (i32, i32) {
    %c0_i32 = arith.constant 0 : i32
    %c0_i32_0 = arith.constant 0 : i32
    %c0_i32_1 = arith.constant 0 : i32
    return %c0_i32, %c0_i32_0 : i32, i32
  }
  func.func @transform_32(%arg0: i32, %arg1: i32) -> (i32, i32) {
    %c0_i32 = arith.constant 0 : i32
    %c0_i32_0 = arith.constant 0 : i32
    %c0_i32_1 = arith.constant 0 : i32
    return %c0_i32, %c0_i32_0 : i32, i32
  }
  func.func @transform_33(%arg0: i32, %arg1: i32) -> (i32, i32) {
    %c0_i32 = arith.constant 0 : i32
    %c0_i32_0 = arith.constant 0 : i32
    %c0_i32_1 = arith.constant 0 : i32
    return %c0_i32, %c0_i32_0 : i32, i32
  }
  func.func @transform_34(%arg0: i32, %arg1: i32) -> (i32, i32, i32) {
    %c0_i32 = arith.constant 0 : i32
    %c0_i32_0 = arith.constant 0 : i32
    %c0_i32_1 = arith.constant 0 : i32
    return %arg0, %c0_i32, %c0_i32_0 : i32, i32, i32
  }
}

</mosaic_0001>

<llo_original>
// kernel: tpu_custom_call.1
$region0: #{tpu_custom_call.1}
  #allocation0 [shape = 'u32[]', space=smem, size = 0x4, offset = 0x4, fixed_abs, tag = 'smem constant byte address 0x4 - core index']
  #allocation1 [shape = 'u32[72,128]{1,0:T(1,128)}', space=vmem, size = 0x9000, scoped, tag = 'internal scratch']
  #allocation2 [shape = 'f32[144,4]{1,0:T(8,128)}', space=vmem, size = 0x12000, scoped, tag = 'scratch operand']
  #allocation3 [shape = 'f32[144,16]{1,0:T(8,128)}', space=vmem, size = 0x12000, scoped, tag = 'scratch operand']
  #allocation4 [shape = 'f32[144,16]{1,0:T(8,128)}', space=vmem, size = 0x12000, scoped, tag = 'scratch operand']
  #allocation5 [shape = 'f32[8,32]{1,0:T(8,128)}', space=vmem, size = 0x1000, scoped, tag = 'scratch operand']
  #allocation6 [shape = 'f32[8,1]{1,0:T(8,128)}', space=vmem, size = 0x1000, scoped, tag = 'scratch operand']
  #allocation7 [shape = 'f32[1,1]{1,0:T(1,128)S(1)}', space=vmem, size = 0x200, scoped, tag = 'scoped memory for tpu_custom_call.1']
  %s0 = inlined_call_operand.smem [shape: u32[35], index: -1, kind: input, shape index: {}]
  %s1 = sld [smem:[%s0]]
  %s2 = scalar_lea.smem %s0, 1
  %s3 = sld [smem:[%s2]]
  %s4 = scalar_lea.smem %s0, 2
  %s5 = sld [smem:[%s4]]
  %s6 = scalar_lea.smem %s0, 3
  %s7 = sld [smem:[%s6]]
  %s8 = scalar_lea.smem %s0, 4
  %s9 = sld [smem:[%s8]]
  %s10 = scalar_lea.smem %s0, 5
  %s11 = sld [smem:[%s10]]
  %s12 = scalar_lea.smem %s0, 6
  %s13 = sld [smem:[%s12]]
  %s14 = scalar_lea.smem %s0, 7
  %s15 = sld [smem:[%s14]]
  %s16 = scalar_lea.smem %s0, 8
  %s17 = sld [smem:[%s16]]
  %s18 = scalar_lea.smem %s0, 9
  %s19 = sld [smem:[%s18]]
  %s20 = scalar_lea.smem %s0, 10
  %s21 = sld [smem:[%s20]]
  %s22 = scalar_lea.smem %s0, 11
  %s23 = sld [smem:[%s22]]
  %s24 = scalar_lea.smem %s0, 12
  %s25 = sld [smem:[%s24]]
  %s26 = scalar_lea.smem %s0, 13
  %s27 = sld [smem:[%s26]]
  %s28 = scalar_lea.smem %s0, 14
  %s29 = sld [smem:[%s28]]
  %s30 = scalar_lea.smem %s0, 15
  %s31 = sld [smem:[%s30]]
  %s32 = scalar_lea.smem %s0, 16
  %s33 = sld [smem:[%s32]]
  %s34 = scalar_lea.smem %s0, 17
  %s35 = sld [smem:[%s34]]
  %s36 = scalar_lea.smem %s0, 18
  %s37 = sld [smem:[%s36]]
  %s38 = scalar_lea.smem %s0, 19
  %s39 = sld [smem:[%s38]]
  %s40 = scalar_lea.smem %s0, 20
  %s41 = sld [smem:[%s40]]
  %s42 = scalar_lea.smem %s0, 21
  %s43 = sld [smem:[%s42]]
  %s44 = scalar_lea.smem %s0, 22
  %s45 = sld [smem:[%s44]]
  %s46 = scalar_lea.smem %s0, 23
  %s47 = sld [smem:[%s46]]
  %s48 = scalar_lea.smem %s0, 24
  %s49 = sld [smem:[%s48]]
  %s50 = scalar_lea.smem %s0, 25
  %s51 = sld [smem:[%s50]]
  %s52 = scalar_lea.smem %s0, 26
  %s53 = sld [smem:[%s52]]
  %s54 = scalar_lea.smem %s0, 27
  %s55 = sld [smem:[%s54]]
  %s56 = scalar_lea.smem %s0, 28
  %s57 = sld [smem:[%s56]]
  %s58 = scalar_lea.smem %s0, 29
  %s59 = sld [smem:[%s58]]
  %s60 = scalar_lea.smem %s0, 30
  %s61 = sld [smem:[%s60]]
  %s62 = scalar_lea.smem %s0, 31
  %s63 = sld [smem:[%s62]]
  %s64 = scalar_lea.smem %s0, 32
  %s65 = sld [smem:[%s64]]
  %s66 = scalar_lea.smem %s0, 33
  %s67 = sld [smem:[%s66]]
  %s68 = scalar_lea.smem %s0, 34
  %s69 = sld [smem:[%s68]]
  %s70 = sld [smem:[#allocation0]]
  $region177: #{tpu_custom_call.1} parent=0
    _
  %s72 = ssub.s32 1, %s70
  %s73 = scalar_select 0, %s72, %s70
  %v74 = vstv %s29
  %75 = vst [vmem:[#allocation7] sm:$0x1] %v74
  $region1: #{tpu_custom_call.1} parent=0
    #allocation8 [shape = 'u8[8192]{0}', space=vmem, size = 0x2000, scoped, tag = 'output window, operand 0']
    #allocation9 [shape = 's32[2]{0}', space=sflag, size = 0x8, scoped, tag = 'scoped memory for tpu_custom_call.1']
    %76 = vsyncpa [#allocation9], 0
    %s77 = scalar_lea.sflag [#allocation9], 1
    %78 = vsyncpa %s77, 0
    loop: start=0, step=1, limit=6
    $region2: #{tpu_custom_call.1} parent=1 // loop_pre_header
      _
    $region3: #{tpu_custom_call.1} parent=1 // loop_header
      %s80 = sphi 0, %s84
      %p81 = scmp.ge.s32.totalorder %s80, 6
      %s87 = sphi 0, %s99
      %s88 = sphi 0, %s95
      %s89 = sphi 0, %s87
      %s90 = sphi 0, %s88
      %s91 = sphi 0, %s89
      %s92 = sphi 0, %s90
      %s102 = sphi 0, %s104
      %s105 = sphi 0, %s102
      %s106 = sphi 0, %s105
      %s122 = sphi 0, %s106
      %s128 = sphi 0, %s130
      %s131 = sphi 0, %s128
      %s132 = sphi 0, %s131
      %s148 = sphi 0, %s132
      %s154 = sphi 0, %s156
      %s157 = sphi 0, %s154
      %s158 = sphi 0, %s157
      %s174 = sphi 0, %s158
      %s178 = sphi 0, %s178
      %s180 = sphi 0, %s178
      %s181 = sphi 0, %s180
      %s195 = sphi 0, %s181
      %s199 = sphi 0, %s199
      %s201 = sphi 0, %s199
      %s202 = sphi 0, %s201
      %s216 = sphi 0, %s202
      %s220 = sphi 0, %s220
      %s222 = sphi 0, %s220
      %s223 = sphi 0, %s222
      %s237 = sphi 0, %s223
      %s241 = sphi 0, %s241
      %s243 = sphi 0, %s241
      %s244 = sphi 0, %s243
      %s258 = sphi 0, %s244
      %s262 = sphi 0, %s262
      %s264 = sphi 0, %s262
      %s265 = sphi 0, %s264
      %s279 = sphi 0, %s265
      %s283 = sphi 0, %s283
      %s285 = sphi 0, %s283
      %s286 = sphi 0, %s285
      %s300 = sphi 0, %s286
      %s304 = sphi 0, %s304
      %s306 = sphi 0, %s304
      %s307 = sphi 0, %s306
      %s321 = sphi 0, %s307
      %s325 = sphi 0, %s325
      %s327 = sphi 0, %s325
      %s328 = sphi 0, %s327
      %s342 = sphi 0, %s328
      %s346 = sphi 0, %s346
      %s348 = sphi 0, %s346
      %s349 = sphi 0, %s348
      %s363 = sphi 0, %s349
      %s367 = sphi 0, %s367
      %s369 = sphi 0, %s367
      %s370 = sphi 0, %s369
      %s384 = sphi 0, %s370
      %s388 = sphi 0, %s388
      %s390 = sphi 0, %s388
      %s391 = sphi 0, %s390
      %s405 = sphi 0, %s391
      %s409 = sphi 0, %s409
      %s411 = sphi 0, %s409
      %s412 = sphi 0, %s411
      %s426 = sphi 0, %s412
      %s430 = sphi 0, %s430
      %s432 = sphi 0, %s430
      %s433 = sphi 0, %s432
      %s447 = sphi 0, %s433
      %s451 = sphi 0, %s451
      %s453 = sphi 0, %s451
      %s454 = sphi 0, %s453
      %s468 = sphi 0, %s454
      %s472 = sphi 0, %s472
      %s474 = sphi 0, %s472
      %s475 = sphi 0, %s474
      %s489 = sphi 0, %s475
      %s495 = sphi 0, %s497
      %s498 = sphi 0, %s495
      %s499 = sphi 0, %s498
      %s515 = sphi 0, %s499
      %s521 = sphi 0, %s523
      %s524 = sphi 0, %s521
      %s525 = sphi 0, %s524
      %s541 = sphi 0, %s525
      %s547 = sphi 0, %s549
      %s550 = sphi 0, %s547
      %s551 = sphi 0, %s550
      %s567 = sphi 0, %s551
      %s573 = sphi 0, %s575
      %s576 = sphi 0, %s573
      %s577 = sphi 0, %s576
      %s593 = sphi 0, %s577
      %s599 = sphi 0, %s601
      %s602 = sphi 0, %s599
      %s603 = sphi 0, %s602
      %s619 = sphi 0, %s603
      %s625 = sphi 0, %s627
      %s628 = sphi 0, %s625
      %s629 = sphi 0, %s628
      %s645 = sphi 0, %s629
      %s651 = sphi 0, %s653
      %s654 = sphi 0, %s651
      %s655 = sphi 0, %s654
      %s671 = sphi 0, %s655
      %s677 = sphi 0, %s679
      %s680 = sphi 0, %s677
      %s681 = sphi 0, %s680
      %s697 = sphi 0, %s681
      %s703 = sphi 0, %s705
      %s706 = sphi 0, %s703
      %s707 = sphi 0, %s706
      %s723 = sphi 0, %s707
      %s729 = sphi 0, %s731
      %s732 = sphi 0, %s729
      %s733 = sphi 0, %s732
      %s749 = sphi 0, %s733
      %s755 = sphi 0, %s757
      %s758 = sphi 0, %s755
      %s759 = sphi 0, %s758
      %s775 = sphi 0, %s759
      %s781 = sphi 0, %s783
      %s784 = sphi 0, %s781
      %s785 = sphi 0, %s784
      %s801 = sphi 0, %s785
      %s805 = sphi 0, %s805
      %s807 = sphi 0, %s805
      %s808 = sphi 0, %s807
      %s822 = sphi 0, %s808
      %s826 = sphi 0, %s826
      %s828 = sphi 0, %s826
      %s829 = sphi 0, %s828
      %s843 = sphi 0, %s829
      %s847 = sphi 0, %s847
      %s849 = sphi 0, %s847
      %s850 = sphi 0, %s849
      %s864 = sphi 0, %s850
      %s868 = sphi 0, %s868
      %s870 = sphi 0, %s868
      %s871 = sphi 0, %s870
      %s885 = sphi 0, %s871
      %s891 = sphi 0, %s893
      %s894 = sphi 0, %s891
      %s895 = sphi 0, %s894
      %s911 = sphi 0, %s895
    $region4: #{tpu_custom_call.1} parent=1 // loop_header_branch
      %83 = sbr.rel (%p81) target = $region8
    $region5: #{tpu_custom_call.1} parent=1 // loop_body
      %s85 = ssub.s32 %s80, 1
      %s86 = ssub.s32 %s80, 2
      %s93 = sadd.s32 1, %s88
      %p94 = scmp.ge.s32.totalorder %s93, 2
      %s95 = scalar_select %p94, 0, %s93
      %s96 = sadd.s32 1, %s87
      %s97 = scalar_select %p94, %s96, %s87
      %p98 = scmp.ge.s32.totalorder %s97, 2
      %s99 = scalar_select %p98, 0, %s97
      %s100 = ssub.s32 %s87, %s99
      %p101 = scmp.eq.s32.totalorder %s100, 0
      %s103 = sadd.s32 %s102, 1
      %s104 = scalar_select %p101, %s102, %s103
      %p107 = pneg %p101
      %p108 = scmp.eq.s32.totalorder %s80, 3
      %p109 = por %p107, %p108
      %p110 = scmp.ne.s32.totalorder %s102, %s105
      %p111 = scmp.eq.s32.totalorder %s80, 0
      %p112 = por %p110, %p111
      %p113 = scmp.ne.s32.totalorder %s102, %s105
      %p114 = scmp.eq.s32.totalorder %s85, 3
      %p115 = por %p113, %p114
      %p116 = scmp.ne.s32.totalorder %s105, %s106
      %p117 = scmp.eq.s32.totalorder %s85, 0
      %p118 = por %p116, %p117
      %p119 = scmp.ne.s32.totalorder %s105, %s106
      %p120 = scmp.eq.s32.totalorder %s86, 3
      %p121 = por %p119, %p120
      %p123 = scmp.ne.s32.totalorder %s106, %s122
      %p124 = scmp.eq.s32.totalorder %s86, 0
      %p125 = por %p123, %p124
      %s126 = ssub.s32 %s87, %s99
      %p127 = scmp.eq.s32.totalorder %s126, 0
      %s129 = sadd.s32 %s128, 1
      %s130 = scalar_select %p127, %s128, %s129
      %p133 = pneg %p127
      %p134 = scmp.eq.s32.totalorder %s80, 3
      %p135 = por %p133, %p134
      %p136 = scmp.ne.s32.totalorder %s128, %s131
      %p137 = scmp.eq.s32.totalorder %s80, 0
      %p138 = por %p136, %p137
      %p139 = scmp.ne.s32.totalorder %s128, %s131
      %p140 = scmp.eq.s32.totalorder %s85, 3
      %p141 = por %p139, %p140
      %p142 = scmp.ne.s32.totalorder %s131, %s132
      %p143 = scmp.eq.s32.totalorder %s85, 0
      %p144 = por %p142, %p143
      %p145 = scmp.ne.s32.totalorder %s131, %s132
      %p146 = scmp.eq.s32.totalorder %s86, 3
      %p147 = por %p145, %p146
      %p149 = scmp.ne.s32.totalorder %s132, %s148
      %p150 = scmp.eq.s32.totalorder %s86, 0
      %p151 = por %p149, %p150
      %s152 = ssub.s32 %s87, %s99
      %p153 = scmp.eq.s32.totalorder %s152, 0
      %s155 = sadd.s32 %s154, 1
      %s156 = scalar_select %p153, %s154, %s155
      %p159 = pneg %p153
      %p160 = scmp.eq.s32.totalorder %s80, 3
      %p161 = por %p159, %p160
      %p162 = scmp.ne.s32.totalorder %s154, %s157
      %p163 = scmp.eq.s32.totalorder %s80, 0
      %p164 = por %p162, %p163
      %p165 = scmp.ne.s32.totalorder %s154, %s157
      %p166 = scmp.eq.s32.totalorder %s85, 3
      %p167 = por %p165, %p166
      %p168 = scmp.ne.s32.totalorder %s157, %s158
      %p169 = scmp.eq.s32.totalorder %s85, 0
      %p170 = por %p168, %p169
      %p171 = scmp.ne.s32.totalorder %s157, %s158
      %p172 = scmp.eq.s32.totalorder %s86, 3
      %p173 = por %p171, %p172
      %p175 = scmp.ne.s32.totalorder %s158, %s174
      %p176 = scmp.eq.s32.totalorder %s86, 0
      %p177 = por %p175, %p176
      %s179 = sadd.s32 %s178, 1
      %p182 = scmp.eq.s32.totalorder %s80, 3
      %p183 = scmp.ne.s32.totalorder %s178, %s180
      %p184 = scmp.eq.s32.totalorder %s80, 0
      %p185 = por %p183, %p184
      %p186 = scmp.ne.s32.totalorder %s178, %s180
      %p187 = scmp.eq.s32.totalorder %s85, 3
      %p188 = por %p186, %p187
      %p189 = scmp.ne.s32.totalorder %s180, %s181
      %p190 = scmp.eq.s32.totalorder %s85, 0
      %p191 = por %p189, %p190
      %p192 = scmp.ne.s32.totalorder %s180, %s181
      %p193 = scmp.eq.s32.totalorder %s86, 3
      %p194 = por %p192, %p193
      %p196 = scmp.ne.s32.totalorder %s181, %s195
      %p197 = scmp.eq.s32.totalorder %s86, 0
      %p198 = por %p196, %p197
      %s200 = sadd.s32 %s199, 1
      %p203 = scmp.eq.s32.totalorder %s80, 3
      %p204 = scmp.ne.s32.totalorder %s199, %s201
      %p205 = scmp.eq.s32.totalorder %s80, 0
      %p206 = por %p204, %p205
      %p207 = scmp.ne.s32.totalorder %s199, %s201
      %p208 = scmp.eq.s32.totalorder %s85, 3
      %p209 = por %p207, %p208
      %p210 = scmp.ne.s32.totalorder %s201, %s202
      %p211 = scmp.eq.s32.totalorder %s85, 0
      %p212 = por %p210, %p211
      %p213 = scmp.ne.s32.totalorder %s201, %s202
      %p214 = scmp.eq.s32.totalorder %s86, 3
      %p215 = por %p213, %p214
      %p217 = scmp.ne.s32.totalorder %s202, %s216
      %p218 = scmp.eq.s32.totalorder %s86, 0
      %p219 = por %p217, %p218
      %s221 = sadd.s32 %s220, 1
      %p224 = scmp.eq.s32.totalorder %s80, 3
      %p225 = scmp.ne.s32.totalorder %s220, %s222
      %p226 = scmp.eq.s32.totalorder %s80, 0
      %p227 = por %p225, %p226
      %p228 = scmp.ne.s32.totalorder %s220, %s222
      %p229 = scmp.eq.s32.totalorder %s85, 3
      %p230 = por %p228, %p229
      %p231 = scmp.ne.s32.totalorder %s222, %s223
      %p232 = scmp.eq.s32.totalorder %s85, 0
      %p233 = por %p231, %p232
      %p234 = scmp.ne.s32.totalorder %s222, %s223
      %p235 = scmp.eq.s32.totalorder %s86, 3
      %p236 = por %p234, %p235
      %p238 = scmp.ne.s32.totalorder %s223, %s237
      %p239 = scmp.eq.s32.totalorder %s86, 0
      %p240 = por %p238, %p239
      %s242 = sadd.s32 %s241, 1
      %p245 = scmp.eq.s32.totalorder %s80, 3
      %p246 = scmp.ne.s32.totalorder %s241, %s243
      %p247 = scmp.eq.s32.totalorder %s80, 0
      %p248 = por %p246, %p247
      %p249 = scmp.ne.s32.totalorder %s241, %s243
      %p250 = scmp.eq.s32.totalorder %s85, 3
      %p251 = por %p249, %p250
      %p252 = scmp.ne.s32.totalorder %s243, %s244
      %p253 = scmp.eq.s32.totalorder %s85, 0
      %p254 = por %p252, %p253
      %p255 = scmp.ne.s32.totalorder %s243, %s244
      %p256 = scmp.eq.s32.totalorder %s86, 3
      %p257 = por %p255, %p256
      %p259 = scmp.ne.s32.totalorder %s244, %s258
      %p260 = scmp.eq.s32.totalorder %s86, 0
      %p261 = por %p259, %p260
      %s263 = sadd.s32 %s262, 1
      %p266 = scmp.eq.s32.totalorder %s80, 3
      %p267 = scmp.ne.s32.totalorder %s262, %s264
      %p268 = scmp.eq.s32.totalorder %s80, 0
      %p269 = por %p267, %p268
      %p270 = scmp.ne.s32.totalorder %s262, %s264
      %p271 = scmp.eq.s32.totalorder %s85, 3
      %p272 = por %p270, %p271
      %p273 = scmp.ne.s32.totalorder %s264, %s265
      %p274 = scmp.eq.s32.totalorder %s85, 0
      %p275 = por %p273, %p274
      %p276 = scmp.ne.s32.totalorder %s264, %s265
      %p277 = scmp.eq.s32.totalorder %s86, 3
      %p278 = por %p276, %p277
      %p280 = scmp.ne.s32.totalorder %s265, %s279
      %p281 = scmp.eq.s32.totalorder %s86, 0
      %p282 = por %p280, %p281
      %s284 = sadd.s32 %s283, 1
      %p287 = scmp.eq.s32.totalorder %s80, 3
      %p288 = scmp.ne.s32.totalorder %s283, %s285
      %p289 = scmp.eq.s32.totalorder %s80, 0
      %p290 = por %p288, %p289
      %p291 = scmp.ne.s32.totalorder %s283, %s285
      %p292 = scmp.eq.s32.totalorder %s85, 3
      %p293 = por %p291, %p292
      %p294 = scmp.ne.s32.totalorder %s285, %s286
      %p295 = scmp.eq.s32.totalorder %s85, 0
      %p296 = por %p294, %p295
      %p297 = scmp.ne.s32.totalorder %s285, %s286
      %p298 = scmp.eq.s32.totalorder %s86, 3
      %p299 = por %p297, %p298
      %p301 = scmp.ne.s32.totalorder %s286, %s300
      %p302 = scmp.eq.s32.totalorder %s86, 0
      %p303 = por %p301, %p302
      %s305 = sadd.s32 %s304, 1
      %p308 = scmp.eq.s32.totalorder %s80, 3
      %p309 = scmp.ne.s32.totalorder %s304, %s306
      %p310 = scmp.eq.s32.totalorder %s80, 0
      %p311 = por %p309, %p310
      %p312 = scmp.ne.s32.totalorder %s304, %s306
      %p313 = scmp.eq.s32.totalorder %s85, 3
      %p314 = por %p312, %p313
      %p315 = scmp.ne.s32.totalorder %s306, %s307
      %p316 = scmp.eq.s32.totalorder %s85, 0
      %p317 = por %p315, %p316
      %p318 = scmp.ne.s32.totalorder %s306, %s307
      %p319 = scmp.eq.s32.totalorder %s86, 3
      %p320 = por %p318, %p319
      %p322 = scmp.ne.s32.totalorder %s307, %s321
      %p323 = scmp.eq.s32.totalorder %s86, 0
      %p324 = por %p322, %p323
      %s326 = sadd.s32 %s325, 1
      %p329 = scmp.eq.s32.totalorder %s80, 3
      %p330 = scmp.ne.s32.totalorder %s325, %s327
      %p331 = scmp.eq.s32.totalorder %s80, 0
      %p332 = por %p330, %p331
      %p333 = scmp.ne.s32.totalorder %s325, %s327
      %p334 = scmp.eq.s32.totalorder %s85, 3
      %p335 = por %p333, %p334
      %p336 = scmp.ne.s32.totalorder %s327, %s328
      %p337 = scmp.eq.s32.totalorder %s85, 0
      %p338 = por %p336, %p337
      %p339 = scmp.ne.s32.totalorder %s327, %s328
      %p340 = scmp.eq.s32.totalorder %s86, 3
      %p341 = por %p339, %p340
      %p343 = scmp.ne.s32.totalorder %s328, %s342
      %p344 = scmp.eq.s32.totalorder %s86, 0
      %p345 = por %p343, %p344
      %s347 = sadd.s32 %s346, 1
      %p350 = scmp.eq.s32.totalorder %s80, 3
      %p351 = scmp.ne.s32.totalorder %s346, %s348
      %p352 = scmp.eq.s32.totalorder %s80, 0
      %p353 = por %p351, %p352
      %p354 = scmp.ne.s32.totalorder %s346, %s348
      %p355 = scmp.eq.s32.totalorder %s85, 3
      %p356 = por %p354, %p355
      %p357 = scmp.ne.s32.totalorder %s348, %s349
      %p358 = scmp.eq.s32.totalorder %s85, 0
      %p359 = por %p357, %p358
      %p360 = scmp.ne.s32.totalorder %s348, %s349
      %p361 = scmp.eq.s32.totalorder %s86, 3
      %p362 = por %p360, %p361
      %p364 = scmp.ne.s32.totalorder %s349, %s363
      %p365 = scmp.eq.s32.totalorder %s86, 0
      %p366 = por %p364, %p365
      %s368 = sadd.s32 %s367, 1
      %p371 = scmp.eq.s32.totalorder %s80, 3
      %p372 = scmp.ne.s32.totalorder %s367, %s369
      %p373 = scmp.eq.s32.totalorder %s80, 0
      %p374 = por %p372, %p373
      %p375 = scmp.ne.s32.totalorder %s367, %s369
      %p376 = scmp.eq.s32.totalorder %s85, 3
      %p377 = por %p375, %p376
      %p378 = scmp.ne.s32.totalorder %s369, %s370
      %p379 = scmp.eq.s32.totalorder %s85, 0
      %p380 = por %p378, %p379
      %p381 = scmp.ne.s32.totalorder %s369, %s370
      %p382 = scmp.eq.s32.totalorder %s86, 3
      %p383 = por %p381, %p382
      %p385 = scmp.ne.s32.totalorder %s370, %s384
      %p386 = scmp.eq.s32.totalorder %s86, 0
      %p387 = por %p385, %p386
      %s389 = sadd.s32 %s388, 1
      %p392 = scmp.eq.s32.totalorder %s80, 3
      %p393 = scmp.ne.s32.totalorder %s388, %s390
      %p394 = scmp.eq.s32.totalorder %s80, 0
      %p395 = por %p393, %p394
      %p396 = scmp.ne.s32.totalorder %s388, %s390
      %p397 = scmp.eq.s32.totalorder %s85, 3
      %p398 = por %p396, %p397
      %p399 = scmp.ne.s32.totalorder %s390, %s391
      %p400 = scmp.eq.s32.totalorder %s85, 0
      %p401 = por %p399, %p400
      %p402 = scmp.ne.s32.totalorder %s390, %s391
      %p403 = scmp.eq.s32.totalorder %s86, 3
      %p404 = por %p402, %p403
      %p406 = scmp.ne.s32.totalorder %s391, %s405
      %p407 = scmp.eq.s32.totalorder %s86, 0
      %p408 = por %p406, %p407
      %s410 = sadd.s32 %s409, 1
      %p413 = scmp.eq.s32.totalorder %s80, 3
      %p414 = scmp.ne.s32.totalorder %s409, %s411
      %p415 = scmp.eq.s32.totalorder %s80, 0
      %p416 = por %p414, %p415
      %p417 = scmp.ne.s32.totalorder %s409, %s411
      %p418 = scmp.eq.s32.totalorder %s85, 3
      %p419 = por %p417, %p418
      %p420 = scmp.ne.s32.totalorder %s411, %s412
      %p421 = scmp.eq.s32.totalorder %s85, 0
      %p422 = por %p420, %p421
      %p423 = scmp.ne.s32.totalorder %s411, %s412
      %p424 = scmp.eq.s32.totalorder %s86, 3
      %p425 = por %p423, %p424
      %p427 = scmp.ne.s32.totalorder %s412, %s426
      %p428 = scmp.eq.s32.totalorder %s86, 0
      %p429 = por %p427, %p428
      %s431 = sadd.s32 %s430, 1
      %p434 = scmp.eq.s32.totalorder %s80, 3
      %p435 = scmp.ne.s32.totalorder %s430, %s432
      %p436 = scmp.eq.s32.totalorder %s80, 0
      %p437 = por %p435, %p436
      %p438 = scmp.ne.s32.totalorder %s430, %s432
      %p439 = scmp.eq.s32.totalorder %s85, 3
      %p440 = por %p438, %p439
      %p441 = scmp.ne.s32.totalorder %s432, %s433
      %p442 = scmp.eq.s32.totalorder %s85, 0
      %p443 = por %p441, %p442
      %p444 = scmp.ne.s32.totalorder %s432, %s433
      %p445 = scmp.eq.s32.totalorder %s86, 3
      %p446 = por %p444, %p445
      %p448 = scmp.ne.s32.totalorder %s433, %s447
      %p449 = scmp.eq.s32.totalorder %s86, 0
      %p450 = por %p448, %p449
      %s452 = sadd.s32 %s451, 1
      %p455 = scmp.eq.s32.totalorder %s80, 3
      %p456 = scmp.ne.s32.totalorder %s451, %s453
      %p457 = scmp.eq.s32.totalorder %s80, 0
      %p458 = por %p456, %p457
      %p459 = scmp.ne.s32.totalorder %s451, %s453
      %p460 = scmp.eq.s32.totalorder %s85, 3
      %p461 = por %p459, %p460
      %p462 = scmp.ne.s32.totalorder %s453, %s454
      %p463 = scmp.eq.s32.totalorder %s85, 0
      %p464 = por %p462, %p463
      %p465 = scmp.ne.s32.totalorder %s453, %s454
      %p466 = scmp.eq.s32.totalorder %s86, 3
      %p467 = por %p465, %p466
      %p469 = scmp.ne.s32.totalorder %s454, %s468
      %p470 = scmp.eq.s32.totalorder %s86, 0
      %p471 = por %p469, %p470
      %s473 = sadd.s32 %s472, 1
      %p476 = scmp.eq.s32.totalorder %s80, 3
      %p477 = scmp.ne.s32.totalorder %s472, %s474
      %p478 = scmp.eq.s32.totalorder %s80, 0
      %p479 = por %p477, %p478
      %p480 = scmp.ne.s32.totalorder %s472, %s474
      %p481 = scmp.eq.s32.totalorder %s85, 3
      %p482 = por %p480, %p481
      %p483 = scmp.ne.s32.totalorder %s474, %s475
      %p484 = scmp.eq.s32.totalorder %s85, 0
      %p485 = por %p483, %p484
      %p486 = scmp.ne.s32.totalorder %s474, %s475
      %p487 = scmp.eq.s32.totalorder %s86, 3
      %p488 = por %p486, %p487
      %p490 = scmp.ne.s32.totalorder %s475, %s489
      %p491 = scmp.eq.s32.totalorder %s86, 0
      %p492 = por %p490, %p491
      %s493 = ssub.s32 %s88, %s95
      %p494 = scmp.eq.s32.totalorder %s493, 0
      %s496 = sadd.s32 %s495, 1
      %s497 = scalar_select %p494, %s495, %s496
      %p500 = pneg %p494
      %p501 = scmp.eq.s32.totalorder %s80, 3
      %p502 = por %p500, %p501
      %p503 = scmp.ne.s32.totalorder %s495, %s498
      %p504 = scmp.eq.s32.totalorder %s80, 0
      %p505 = por %p503, %p504
      %p506 = scmp.ne.s32.totalorder %s495, %s498
      %p507 = scmp.eq.s32.totalorder %s85, 3
      %p508 = por %p506, %p507
      %p509 = scmp.ne.s32.totalorder %s498, %s499
      %p510 = scmp.eq.s32.totalorder %s85, 0
      %p511 = por %p509, %p510
      %p512 = scmp.ne.s32.totalorder %s498, %s499
      %p513 = scmp.eq.s32.totalorder %s86, 3
      %p514 = por %p512, %p513
      %p516 = scmp.ne.s32.totalorder %s499, %s515
      %p517 = scmp.eq.s32.totalorder %s86, 0
      %p518 = por %p516, %p517
      %s519 = ssub.s32 %s88, %s95
      %p520 = scmp.eq.s32.totalorder %s519, 0
      %s522 = sadd.s32 %s521, 1
      %s523 = scalar_select %p520, %s521, %s522
      %p526 = pneg %p520
      %p527 = scmp.eq.s32.totalorder %s80, 3
      %p528 = por %p526, %p527
      %p529 = scmp.ne.s32.totalorder %s521, %s524
      %p530 = scmp.eq.s32.totalorder %s80, 0
      %p531 = por %p529, %p530
      %p532 = scmp.ne.s32.totalorder %s521, %s524
      %p533 = scmp.eq.s32.totalorder %s85, 3
      %p534 = por %p532, %p533
      %p535 = scmp.ne.s32.totalorder %s524, %s525
      %p536 = scmp.eq.s32.totalorder %s85, 0
      %p537 = por %p535, %p536
      %p538 = scmp.ne.s32.totalorder %s524, %s525
      %p539 = scmp.eq.s32.totalorder %s86, 3
      %p540 = por %p538, %p539
      %p542 = scmp.ne.s32.totalorder %s525, %s541
      %p543 = scmp.eq.s32.totalorder %s86, 0
      %p544 = por %p542, %p543
      %s545 = ssub.s32 %s88, %s95
      %p546 = scmp.eq.s32.totalorder %s545, 0
      %s548 = sadd.s32 %s547, 1
      %s549 = scalar_select %p546, %s547, %s548
      %p552 = pneg %p546
      %p553 = scmp.eq.s32.totalorder %s80, 3
      %p554 = por %p552, %p553
      %p555 = scmp.ne.s32.totalorder %s547, %s550
      %p556 = scmp.eq.s32.totalorder %s80, 0
      %p557 = por %p555, %p556
      %p558 = scmp.ne.s32.totalorder %s547, %s550
      %p559 = scmp.eq.s32.totalorder %s85, 3
      %p560 = por %p558, %p559
      %p561 = scmp.ne.s32.totalorder %s550, %s551
      %p562 = scmp.eq.s32.totalorder %s85, 0
      %p563 = por %p561, %p562
      %p564 = scmp.ne.s32.totalorder %s550, %s551
      %p565 = scmp.eq.s32.totalorder %s86, 3
      %p566 = por %p564, %p565
      %p568 = scmp.ne.s32.totalorder %s551, %s567
      %p569 = scmp.eq.s32.totalorder %s86, 0
      %p570 = por %p568, %p569
      %s571 = ssub.s32 %s88, %s95
      %p572 = scmp.eq.s32.totalorder %s571, 0
      %s574 = sadd.s32 %s573, 1
      %s575 = scalar_select %p572, %s573, %s574
      %p578 = pneg %p572
      %p579 = scmp.eq.s32.totalorder %s80, 3
      %p580 = por %p578, %p579
      %p581 = scmp.ne.s32.totalorder %s573, %s576
      %p582 = scmp.eq.s32.totalorder %s80, 0
      %p583 = por %p581, %p582
      %p584 = scmp.ne.s32.totalorder %s573, %s576
      %p585 = scmp.eq.s32.totalorder %s85, 3
      %p586 = por %p584, %p585
      %p587 = scmp.ne.s32.totalorder %s576, %s577
      %p588 = scmp.eq.s32.totalorder %s85, 0
      %p589 = por %p587, %p588
      %p590 = scmp.ne.s32.totalorder %s576, %s577
      %p591 = scmp.eq.s32.totalorder %s86, 3
      %p592 = por %p590, %p591
      %p594 = scmp.ne.s32.totalorder %s577, %s593
      %p595 = scmp.eq.s32.totalorder %s86, 0
      %p596 = por %p594, %p595
      %s597 = ssub.s32 %s88, %s95
      %p598 = scmp.eq.s32.totalorder %s597, 0
      %s600 = sadd.s32 %s599, 1
      %s601 = scalar_select %p598, %s599, %s600
      %p604 = pneg %p598
      %p605 = scmp.eq.s32.totalorder %s80, 3
      %p606 = por %p604, %p605
      %p607 = scmp.ne.s32.totalorder %s599, %s602
      %p608 = scmp.eq.s32.totalorder %s80, 0
      %p609 = por %p607, %p608
      %p610 = scmp.ne.s32.totalorder %s599, %s602
      %p611 = scmp.eq.s32.totalorder %s85, 3
      %p612 = por %p610, %p611
      %p613 = scmp.ne.s32.totalorder %s602, %s603
      %p614 = scmp.eq.s32.totalorder %s85, 0
      %p615 = por %p613, %p614
      %p616 = scmp.ne.s32.totalorder %s602, %s603
      %p617 = scmp.eq.s32.totalorder %s86, 3
      %p618 = por %p616, %p617
      %p620 = scmp.ne.s32.totalorder %s603, %s619
      %p621 = scmp.eq.s32.totalorder %s86, 0
      %p622 = por %p620, %p621
      %s623 = ssub.s32 %s88, %s95
      %p624 = scmp.eq.s32.totalorder %s623, 0
      %s626 = sadd.s32 %s625, 1
      %s627 = scalar_select %p624, %s625, %s626
      %p630 = pneg %p624
      %p631 = scmp.eq.s32.totalorder %s80, 3
      %p632 = por %p630, %p631
      %p633 = scmp.ne.s32.totalorder %s625, %s628
      %p634 = scmp.eq.s32.totalorder %s80, 0
      %p635 = por %p633, %p634
      %p636 = scmp.ne.s32.totalorder %s625, %s628
      %p637 = scmp.eq.s32.totalorder %s85, 3
      %p638 = por %p636, %p637
      %p639 = scmp.ne.s32.totalorder %s628, %s629
      %p640 = scmp.eq.s32.totalorder %s85, 0
      %p641 = por %p639, %p640
      %p642 = scmp.ne.s32.totalorder %s628, %s629
      %p643 = scmp.eq.s32.totalorder %s86, 3
      %p644 = por %p642, %p643
      %p646 = scmp.ne.s32.totalorder %s629, %s645
      %p647 = scmp.eq.s32.totalorder %s86, 0
      %p648 = por %p646, %p647
      %s649 = ssub.s32 %s88, %s95
      %p650 = scmp.eq.s32.totalorder %s649, 0
      %s652 = sadd.s32 %s651, 1
      %s653 = scalar_select %p650, %s651, %s652
      %p656 = pneg %p650
      %p657 = scmp.eq.s32.totalorder %s80, 3
      %p658 = por %p656, %p657
      %p659 = scmp.ne.s32.totalorder %s651, %s654
      %p660 = scmp.eq.s32.totalorder %s80, 0
      %p661 = por %p659, %p660
      %p662 = scmp.ne.s32.totalorder %s651, %s654
      %p663 = scmp.eq.s32.totalorder %s85, 3
      %p664 = por %p662, %p663
      %p665 = scmp.ne.s32.totalorder %s654, %s655
      %p666 = scmp.eq.s32.totalorder %s85, 0
      %p667 = por %p665, %p666
      %p668 = scmp.ne.s32.totalorder %s654, %s655
      %p669 = scmp.eq.s32.totalorder %s86, 3
      %p670 = por %p668, %p669
      %p672 = scmp.ne.s32.totalorder %s655, %s671
      %p673 = scmp.eq.s32.totalorder %s86, 0
      %p674 = por %p672, %p673
      %s675 = ssub.s32 %s88, %s95
      %p676 = scmp.eq.s32.totalorder %s675, 0
      %s678 = sadd.s32 %s677, 1
      %s679 = scalar_select %p676, %s677, %s678
      %p682 = pneg %p676
      %p683 = scmp.eq.s32.totalorder %s80, 3
      %p684 = por %p682, %p683
      %p685 = scmp.ne.s32.totalorder %s677, %s680
      %p686 = scmp.eq.s32.totalorder %s80, 0
      %p687 = por %p685, %p686
      %p688 = scmp.ne.s32.totalorder %s677, %s680
      %p689 = scmp.eq.s32.totalorder %s85, 3
      %p690 = por %p688, %p689
      %p691 = scmp.ne.s32.totalorder %s680, %s681
      %p692 = scmp.eq.s32.totalorder %s85, 0
      %p693 = por %p691, %p692
      %p694 = scmp.ne.s32.totalorder %s680, %s681
      %p695 = scmp.eq.s32.totalorder %s86, 3
      %p696 = por %p694, %p695
      %p698 = scmp.ne.s32.totalorder %s681, %s697
      %p699 = scmp.eq.s32.totalorder %s86, 0
      %p700 = por %p698, %p699
      %s701 = ssub.s32 %s88, %s95
      %p702 = scmp.eq.s32.totalorder %s701, 0
      %s704 = sadd.s32 %s703, 1
      %s705 = scalar_select %p702, %s703, %s704
      %p708 = pneg %p702
      %p709 = scmp.eq.s32.totalorder %s80, 3
      %p710 = por %p708, %p709
      %p711 = scmp.ne.s32.totalorder %s703, %s706
      %p712 = scmp.eq.s32.totalorder %s80, 0
      %p713 = por %p711, %p712
      %p714 = scmp.ne.s32.totalorder %s703, %s706
      %p715 = scmp.eq.s32.totalorder %s85, 3
      %p716 = por %p714, %p715
      %p717 = scmp.ne.s32.totalorder %s706, %s707
      %p718 = scmp.eq.s32.totalorder %s85, 0
      %p719 = por %p717, %p718
      %p720 = scmp.ne.s32.totalorder %s706, %s707
      %p721 = scmp.eq.s32.totalorder %s86, 3
      %p722 = por %p720, %p721
      %p724 = scmp.ne.s32.totalorder %s707, %s723
      %p725 = scmp.eq.s32.totalorder %s86, 0
      %p726 = por %p724, %p725
      %s727 = ssub.s32 %s88, %s95
      %p728 = scmp.eq.s32.totalorder %s727, 0
      %s730 = sadd.s32 %s729, 1
      %s731 = scalar_select %p728, %s729, %s730
      %p734 = pneg %p728
      %p735 = scmp.eq.s32.totalorder %s80, 3
      %p736 = por %p734, %p735
      %p737 = scmp.ne.s32.totalorder %s729, %s732
      %p738 = scmp.eq.s32.totalorder %s80, 0
      %p739 = por %p737, %p738
      %p740 = scmp.ne.s32.totalorder %s729, %s732
      %p741 = scmp.eq.s32.totalorder %s85, 3
      %p742 = por %p740, %p741
      %p743 = scmp.ne.s32.totalorder %s732, %s733
      %p744 = scmp.eq.s32.totalorder %s85, 0
      %p745 = por %p743, %p744
      %p746 = scmp.ne.s32.totalorder %s732, %s733
      %p747 = scmp.eq.s32.totalorder %s86, 3
      %p748 = por %p746, %p747
      %p750 = scmp.ne.s32.totalorder %s733, %s749
      %p751 = scmp.eq.s32.totalorder %s86, 0
      %p752 = por %p750, %p751
      %s753 = ssub.s32 %s88, %s95
      %p754 = scmp.eq.s32.totalorder %s753, 0
      %s756 = sadd.s32 %s755, 1
      %s757 = scalar_select %p754, %s755, %s756
      %p760 = pneg %p754
      %p761 = scmp.eq.s32.totalorder %s80, 3
      %p762 = por %p760, %p761
      %p763 = scmp.ne.s32.totalorder %s755, %s758
      %p764 = scmp.eq.s32.totalorder %s80, 0
      %p765 = por %p763, %p764
      %p766 = scmp.ne.s32.totalorder %s755, %s758
      %p767 = scmp.eq.s32.totalorder %s85, 3
      %p768 = por %p766, %p767
      %p769 = scmp.ne.s32.totalorder %s758, %s759
      %p770 = scmp.eq.s32.totalorder %s85, 0
      %p771 = por %p769, %p770
      %p772 = scmp.ne.s32.totalorder %s758, %s759
      %p773 = scmp.eq.s32.totalorder %s86, 3
      %p774 = por %p772, %p773
      %p776 = scmp.ne.s32.totalorder %s759, %s775
      %p777 = scmp.eq.s32.totalorder %s86, 0
      %p778 = por %p776, %p777
      %s779 = ssub.s32 %s88, %s95
      %p780 = scmp.eq.s32.totalorder %s779, 0
      %s782 = sadd.s32 %s781, 1
      %s783 = scalar_select %p780, %s781, %s782
      %p786 = pneg %p780
      %p787 = scmp.eq.s32.totalorder %s80, 3
      %p788 = por %p786, %p787
      %p789 = scmp.ne.s32.totalorder %s781, %s784
      %p790 = scmp.eq.s32.totalorder %s80, 0
      %p791 = por %p789, %p790
      %p792 = scmp.ne.s32.totalorder %s781, %s784
      %p793 = scmp.eq.s32.totalorder %s85, 3
      %p794 = por %p792, %p793
      %p795 = scmp.ne.s32.totalorder %s784, %s785
      %p796 = scmp.eq.s32.totalorder %s85, 0
      %p797 = por %p795, %p796
      %p798 = scmp.ne.s32.totalorder %s784, %s785
      %p799 = scmp.eq.s32.totalorder %s86, 3
      %p800 = por %p798, %p799
      %p802 = scmp.ne.s32.totalorder %s785, %s801
      %p803 = scmp.eq.s32.totalorder %s86, 0
      %p804 = por %p802, %p803
      %s806 = sadd.s32 %s805, 1
      %p809 = scmp.eq.s32.totalorder %s80, 3
      %p810 = scmp.ne.s32.totalorder %s805, %s807
      %p811 = scmp.eq.s32.totalorder %s80, 0
      %p812 = por %p810, %p811
      %p813 = scmp.ne.s32.totalorder %s805, %s807
      %p814 = scmp.eq.s32.totalorder %s85, 3
      %p815 = por %p813, %p814
      %p816 = scmp.ne.s32.totalorder %s807, %s808
      %p817 = scmp.eq.s32.totalorder %s85, 0
      %p818 = por %p816, %p817
      %p819 = scmp.ne.s32.totalorder %s807, %s808
      %p820 = scmp.eq.s32.totalorder %s86, 3
      %p821 = por %p819, %p820
      %p823 = scmp.ne.s32.totalorder %s808, %s822
      %p824 = scmp.eq.s32.totalorder %s86, 0
      %p825 = por %p823, %p824
      %s827 = sadd.s32 %s826, 1
      %p830 = scmp.eq.s32.totalorder %s80, 3
      %p831 = scmp.ne.s32.totalorder %s826, %s828
      %p832 = scmp.eq.s32.totalorder %s80, 0
      %p833 = por %p831, %p832
      %p834 = scmp.ne.s32.totalorder %s826, %s828
      %p835 = scmp.eq.s32.totalorder %s85, 3
      %p836 = por %p834, %p835
      %p837 = scmp.ne.s32.totalorder %s828, %s829
      %p838 = scmp.eq.s32.totalorder %s85, 0
      %p839 = por %p837, %p838
      %p840 = scmp.ne.s32.totalorder %s828, %s829
      %p841 = scmp.eq.s32.totalorder %s86, 3
      %p842 = por %p840, %p841
      %p844 = scmp.ne.s32.totalorder %s829, %s843
      %p845 = scmp.eq.s32.totalorder %s86, 0
      %p846 = por %p844, %p845
      %s848 = sadd.s32 %s847, 1
      %p851 = scmp.eq.s32.totalorder %s80, 3
      %p852 = scmp.ne.s32.totalorder %s847, %s849
      %p853 = scmp.eq.s32.totalorder %s80, 0
      %p854 = por %p852, %p853
      %p855 = scmp.ne.s32.totalorder %s847, %s849
      %p856 = scmp.eq.s32.totalorder %s85, 3
      %p857 = por %p855, %p856
      %p858 = scmp.ne.s32.totalorder %s849, %s850
      %p859 = scmp.eq.s32.totalorder %s85, 0
      %p860 = por %p858, %p859
      %p861 = scmp.ne.s32.totalorder %s849, %s850
      %p862 = scmp.eq.s32.totalorder %s86, 3
      %p863 = por %p861, %p862
      %p865 = scmp.ne.s32.totalorder %s850, %s864
      %p866 = scmp.eq.s32.totalorder %s86, 0
      %p867 = por %p865, %p866
      %s869 = sadd.s32 %s868, 1
      %p872 = scmp.eq.s32.totalorder %s80, 3
      %p873 = scmp.ne.s32.totalorder %s868, %s870
      %p874 = scmp.eq.s32.totalorder %s80, 0
      %p875 = por %p873, %p874
      %p876 = scmp.ne.s32.totalorder %s868, %s870
      %p877 = scmp.eq.s32.totalorder %s85, 3
      %p878 = por %p876, %p877
      %p879 = scmp.ne.s32.totalorder %s870, %s871
      %p880 = scmp.eq.s32.totalorder %s85, 0
      %p881 = por %p879, %p880
      %p882 = scmp.ne.s32.totalorder %s870, %s871
      %p883 = scmp.eq.s32.totalorder %s86, 3
      %p884 = por %p882, %p883
      %p886 = scmp.ne.s32.totalorder %s871, %s885
      %p887 = scmp.eq.s32.totalorder %s86, 0
      %p888 = por %p886, %p887
      %s889 = ssub.s32 %s87, %s99
      %p890 = scmp.eq.s32.totalorder %s889, 0
      %s892 = sadd.s32 %s891, 1
      %s893 = scalar_select %p890, %s891, %s892
      %p896 = pneg %p890
      %p897 = scmp.eq.s32.totalorder %s80, 3
      %p898 = por %p896, %p897
      %p899 = scmp.ne.s32.totalorder %s891, %s894
      %p900 = scmp.eq.s32.totalorder %s80, 0
      %p901 = por %p899, %p900
      %p902 = scmp.ne.s32.totalorder %s891, %s894
      %p903 = scmp.eq.s32.totalorder %s85, 3
      %p904 = por %p902, %p903
      %p905 = scmp.ne.s32.totalorder %s894, %s895
      %p906 = scmp.eq.s32.totalorder %s85, 0
      %p907 = por %p905, %p906
      %p908 = scmp.ne.s32.totalorder %s894, %s895
      %p909 = scmp.eq.s32.totalorder %s86, 3
      %p910 = por %p908, %p909
      %p912 = scmp.ne.s32.totalorder %s895, %s911
      %p913 = scmp.eq.s32.totalorder %s86, 0
      %p914 = por %p912, %p913
      %p915 = scmp.le.s32.totalorder 1, %s80
      %p916 = scmp.lt.s32.totalorder %s80, 5
      %p917 = pnand %p915, %p916
      %p918 = pneg %p917
      // Predicated region
      $region9: #{tpu_custom_call.1} parent=5 // pred_check
        _
      $region10: #{tpu_custom_call.1} parent=5 // pred_check_branch
        %920 = sbr.rel (%p917) target = $region12
      $region11: #{tpu_custom_call.1} parent=5 // pred_region
        %s921 = ssub.s32 %s80, 1
        // Predicated region
        $region13: #{tpu_custom_call.1} parent=11 // pred_check
          %p922 = pneg %p191
        $region14: #{tpu_custom_call.1} parent=11 // pred_check_branch
          %924 = sbr.rel (%p922) target = $region16
        $region15: #{tpu_custom_call.1} parent=11 // pred_region
          _
        $region16: #{tpu_custom_call.1} parent=11 // pred_fallthru
          _
        // Predicated region
        $region17: #{tpu_custom_call.1} parent=11 // pred_check
          %p925 = pneg %p212
        $region18: #{tpu_custom_call.1} parent=11 // pred_check_branch
          %927 = sbr.rel (%p925) target = $region20
        $region19: #{tpu_custom_call.1} parent=11 // pred_region
          _
        $region20: #{tpu_custom_call.1} parent=11 // pred_fallthru
          _
        // Predicated region
        $region21: #{tpu_custom_call.1} parent=11 // pred_check
          %p928 = pneg %p233
        $region22: #{tpu_custom_call.1} parent=11 // pred_check_branch
          %930 = sbr.rel (%p928) target = $region24
        $region23: #{tpu_custom_call.1} parent=11 // pred_region
          _
        $region24: #{tpu_custom_call.1} parent=11 // pred_fallthru
          _
        // Predicated region
        $region25: #{tpu_custom_call.1} parent=11 // pred_check
          %p931 = pneg %p254
        $region26: #{tpu_custom_call.1} parent=11 // pred_check_branch
          %933 = sbr.rel (%p931) target = $region28
        $region27: #{tpu_custom_call.1} parent=11 // pred_region
          _
        $region28: #{tpu_custom_call.1} parent=11 // pred_fallthru
          _
        // Predicated region
        $region29: #{tpu_custom_call.1} parent=11 // pred_check
          %p934 = pneg %p275
        $region30: #{tpu_custom_call.1} parent=11 // pred_check_branch
          %936 = sbr.rel (%p934) target = $region32
        $region31: #{tpu_custom_call.1} parent=11 // pred_region
          _
        $region32: #{tpu_custom_call.1} parent=11 // pred_fallthru
          _
        // Predicated region
        $region33: #{tpu_custom_call.1} parent=11 // pred_check
          %p937 = pneg %p296
        $region34: #{tpu_custom_call.1} parent=11 // pred_check_branch
          %939 = sbr.rel (%p937) target = $region36
        $region35: #{tpu_custom_call.1} parent=11 // pred_region
          _
        $region36: #{tpu_custom_call.1} parent=11 // pred_fallthru
          _
        // Predicated region
        $region37: #{tpu_custom_call.1} parent=11 // pred_check
          %p940 = pneg %p317
        $region38: #{tpu_custom_call.1} parent=11 // pred_check_branch
          %942 = sbr.rel (%p940) target = $region40
        $region39: #{tpu_custom_call.1} parent=11 // pred_region
          _
        $region40: #{tpu_custom_call.1} parent=11 // pred_fallthru
          _
        // Predicated region
        $region41: #{tpu_custom_call.1} parent=11 // pred_check
          %p943 = pneg %p338
        $region42: #{tpu_custom_call.1} parent=11 // pred_check_branch
          %945 = sbr.rel (%p943) target = $region44
        $region43: #{tpu_custom_call.1} parent=11 // pred_region
          _
        $region44: #{tpu_custom_call.1} parent=11 // pred_fallthru
          _
        // Predicated region
        $region45: #{tpu_custom_call.1} parent=11 // pred_check
          %p946 = pneg %p359
        $region46: #{tpu_custom_call.1} parent=11 // pred_check_branch
          %948 = sbr.rel (%p946) target = $region48
        $region47: #{tpu_custom_call.1} parent=11 // pred_region
          _
        $region48: #{tpu_custom_call.1} parent=11 // pred_fallthru
          _
        // Predicated region
        $region49: #{tpu_custom_call.1} parent=11 // pred_check
          %p949 = pneg %p380
        $region50: #{tpu_custom_call.1} parent=11 // pred_check_branch
          %951 = sbr.rel (%p949) target = $region52
        $region51: #{tpu_custom_call.1} parent=11 // pred_region
          _
        $region52: #{tpu_custom_call.1} parent=11 // pred_fallthru
          _
        // Predicated region
        $region53: #{tpu_custom_call.1} parent=11 // pred_check
          %p952 = pneg %p401
        $region54: #{tpu_custom_call.1} parent=11 // pred_check_branch
          %954 = sbr.rel (%p952) target = $region56
        $region55: #{tpu_custom_call.1} parent=11 // pred_region
          _
        $region56: #{tpu_custom_call.1} parent=11 // pred_fallthru
          _
        // Predicated region
        $region57: #{tpu_custom_call.1} parent=11 // pred_check
          %p955 = pneg %p422
        $region58: #{tpu_custom_call.1} parent=11 // pred_check_branch
          %957 = sbr.rel (%p955) target = $region60
        $region59: #{tpu_custom_call.1} parent=11 // pred_region
          _
        $region60: #{tpu_custom_call.1} parent=11 // pred_fallthru
          _
        // Predicated region
        $region61: #{tpu_custom_call.1} parent=11 // pred_check
          %p958 = pneg %p443
        $region62: #{tpu_custom_call.1} parent=11 // pred_check_branch
          %960 = sbr.rel (%p958) target = $region64
        $region63: #{tpu_custom_call.1} parent=11 // pred_region
          _
        $region64: #{tpu_custom_call.1} parent=11 // pred_fallthru
          _
        // Predicated region
        $region65: #{tpu_custom_call.1} parent=11 // pred_check
          %p961 = pneg %p464
        $region66: #{tpu_custom_call.1} parent=11 // pred_check_branch
          %963 = sbr.rel (%p961) target = $region68
        $region67: #{tpu_custom_call.1} parent=11 // pred_region
          _
        $region68: #{tpu_custom_call.1} parent=11 // pred_fallthru
          _
        // Predicated region
        $region69: #{tpu_custom_call.1} parent=11 // pred_check
          %p964 = pneg %p485
        $region70: #{tpu_custom_call.1} parent=11 // pred_check_branch
          %966 = sbr.rel (%p964) target = $region72
        $region71: #{tpu_custom_call.1} parent=11 // pred_region
          _
        $region72: #{tpu_custom_call.1} parent=11 // pred_fallthru
          _
        // Predicated region
        $region73: #{tpu_custom_call.1} parent=11 // pred_check
          %p967 = pneg %p818
        $region74: #{tpu_custom_call.1} parent=11 // pred_check_branch
          %969 = sbr.rel (%p967) target = $region76
        $region75: #{tpu_custom_call.1} parent=11 // pred_region
          _
        $region76: #{tpu_custom_call.1} parent=11 // pred_fallthru
          _
        // Predicated region
        $region77: #{tpu_custom_call.1} parent=11 // pred_check
          %p970 = pneg %p839
        $region78: #{tpu_custom_call.1} parent=11 // pred_check_branch
          %972 = sbr.rel (%p970) target = $region80
        $region79: #{tpu_custom_call.1} parent=11 // pred_region
          _
        $region80: #{tpu_custom_call.1} parent=11 // pred_fallthru
          _
        // Predicated region
        $region81: #{tpu_custom_call.1} parent=11 // pred_check
          %p973 = pneg %p860
        $region82: #{tpu_custom_call.1} parent=11 // pred_check_branch
          %975 = sbr.rel (%p973) target = $region84
        $region83: #{tpu_custom_call.1} parent=11 // pred_region
          _
        $region84: #{tpu_custom_call.1} parent=11 // pred_fallthru
          _
        // Predicated region
        $region85: #{tpu_custom_call.1} parent=11 // pred_check
          %p976 = pneg %p881
        $region86: #{tpu_custom_call.1} parent=11 // pred_check_branch
          %978 = sbr.rel (%p976) target = $region88
        $region87: #{tpu_custom_call.1} parent=11 // pred_region
          _
        $region88: #{tpu_custom_call.1} parent=11 // pred_fallthru
          _
      $region12: #{tpu_custom_call.1} parent=5 // pred_fallthru
        _
      %p979 = scmp.lt.s32.totalorder %s80, 4
      // Predicated region
      $region89: #{tpu_custom_call.1} parent=5 // pred_check
        %p980 = pneg %p979
      $region90: #{tpu_custom_call.1} parent=5 // pred_check_branch
        %982 = sbr.rel (%p980) target = $region92
      $region91: #{tpu_custom_call.1} parent=5 // pred_region
        // Predicated region
        $region93: #{tpu_custom_call.1} parent=91 // pred_check
          %p983 = pneg %p112
        $region94: #{tpu_custom_call.1} parent=91 // pred_check_branch
          %985 = sbr.rel (%p983) target = $region96
        $region95: #{tpu_custom_call.1} parent=91 // pred_region
          %p986 = scmp.lt.s32.totalorder %s87, 1
          %s987 = scalar_select %p986, %s87, 1
          %s988 = smul.addr %s987, 16
          %s989 = smul.addr %s988, 8
          %s990 = scalar_lea.vmem %s1, %s989
        $region96: #{tpu_custom_call.1} parent=91 // pred_fallthru
          _
        // Predicated region
        $region97: #{tpu_custom_call.1} parent=91 // pred_check
          %p991 = pneg %p138
        $region98: #{tpu_custom_call.1} parent=91 // pred_check_branch
          %993 = sbr.rel (%p991) target = $region100
        $region99: #{tpu_custom_call.1} parent=91 // pred_region
          %p994 = scmp.lt.s32.totalorder %s87, 1
          %s995 = scalar_select %p994, %s87, 1
          %s996 = smul.addr %s995, 2
          %s997 = scalar_lea.vmem %s3, %s996
        $region100: #{tpu_custom_call.1} parent=91 // pred_fallthru
          _
        // Predicated region
        $region101: #{tpu_custom_call.1} parent=91 // pred_check
          %p998 = pneg %p164
        $region102: #{tpu_custom_call.1} parent=91 // pred_check_branch
          %1000 = sbr.rel (%p998) target = $region104
        $region103: #{tpu_custom_call.1} parent=91 // pred_region
          %p1001 = scmp.lt.s32.totalorder %s87, 1
          %s1002 = scalar_select %p1001, %s87, 1
          %s1003 = scalar_lea.vmem %s5, %s1002
        $region104: #{tpu_custom_call.1} parent=91 // pred_fallthru
          _
        // Predicated region
        $region105: #{tpu_custom_call.1} parent=91 // pred_check
          %p1004 = pneg %p505
        $region106: #{tpu_custom_call.1} parent=91 // pred_check_branch
          %1006 = sbr.rel (%p1004) target = $region108
        $region107: #{tpu_custom_call.1} parent=91 // pred_region
          %p1007 = scmp.lt.s32.totalorder %s88, 1
          %s1008 = scalar_select %p1007, %s88, 1
          %s1009 = scalar_lea.vmem %s37, %s1008
        $region108: #{tpu_custom_call.1} parent=91 // pred_fallthru
          _
        // Predicated region
        $region109: #{tpu_custom_call.1} parent=91 // pred_check
          %p1010 = pneg %p531
        $region110: #{tpu_custom_call.1} parent=91 // pred_check_branch
          %1012 = sbr.rel (%p1010) target = $region112
        $region111: #{tpu_custom_call.1} parent=91 // pred_region
          %p1013 = scmp.lt.s32.totalorder %s88, 1
          %s1014 = scalar_select %p1013, %s88, 1
          %s1015 = scalar_lea.vmem %s39, %s1014
        $region112: #{tpu_custom_call.1} parent=91 // pred_fallthru
          _
        // Predicated region
        $region113: #{tpu_custom_call.1} parent=91 // pred_check
          %p1016 = pneg %p557
        $region114: #{tpu_custom_call.1} parent=91 // pred_check_branch
          %1018 = sbr.rel (%p1016) target = $region116
        $region115: #{tpu_custom_call.1} parent=91 // pred_region
          %p1019 = scmp.lt.s32.totalorder %s88, 1
          %s1020 = scalar_select %p1019, %s88, 1
          %s1021 = smul.addr %s1020, 4
          %s1022 = smul.addr %s1021, 4
          %s1023 = scalar_lea.vmem %s41, %s1022
        $region116: #{tpu_custom_call.1} parent=91 // pred_fallthru
          _
        // Predicated region
        $region117: #{tpu_custom_call.1} parent=91 // pred_check
          %p1024 = pneg %p583
        $region118: #{tpu_custom_call.1} parent=91 // pred_check_branch
          %1026 = sbr.rel (%p1024) target = $region120
        $region119: #{tpu_custom_call.1} parent=91 // pred_region
          %p1027 = scmp.lt.s32.totalorder %s88, 1
          %s1028 = scalar_select %p1027, %s88, 1
          %s1029 = scalar_lea.vmem %s43, %s1028
        $region120: #{tpu_custom_call.1} parent=91 // pred_fallthru
          _
        // Predicated region
        $region121: #{tpu_custom_call.1} parent=91 // pred_check
          %p1030 = pneg %p609
        $region122: #{tpu_custom_call.1} parent=91 // pred_check_branch
          %1032 = sbr.rel (%p1030) target = $region124
        $region123: #{tpu_custom_call.1} parent=91 // pred_region
          %p1033 = scmp.lt.s32.totalorder %s88, 1
          %s1034 = scalar_select %p1033, %s88, 1
          %s1035 = smul.addr %s1034, 4
          %s1036 = smul.addr %s1035, 4
          %s1037 = scalar_lea.vmem %s45, %s1036
        $region124: #{tpu_custom_call.1} parent=91 // pred_fallthru
          _
        // Predicated region
        $region125: #{tpu_custom_call.1} parent=91 // pred_check
          %p1038 = pneg %p635
        $region126: #{tpu_custom_call.1} parent=91 // pred_check_branch
          %1040 = sbr.rel (%p1038) target = $region128
        $region127: #{tpu_custom_call.1} parent=91 // pred_region
          %p1041 = scmp.lt.s32.totalorder %s88, 1
          %s1042 = scalar_select %p1041, %s88, 1
          %s1043 = scalar_lea.vmem %s47, %s1042
        $region128: #{tpu_custom_call.1} parent=91 // pred_fallthru
          _
        // Predicated region
        $region129: #{tpu_custom_call.1} parent=91 // pred_check
          %p1044 = pneg %p661
        $region130: #{tpu_custom_call.1} parent=91 // pred_check_branch
          %1046 = sbr.rel (%p1044) target = $region132
        $region131: #{tpu_custom_call.1} parent=91 // pred_region
          %p1047 = scmp.lt.s32.totalorder %s88, 1
          %s1048 = scalar_select %p1047, %s88, 1
          %s1049 = scalar_lea.vmem %s49, %s1048
        $region132: #{tpu_custom_call.1} parent=91 // pred_fallthru
          _
        // Predicated region
        $region133: #{tpu_custom_call.1} parent=91 // pred_check
          %p1050 = pneg %p687
        $region134: #{tpu_custom_call.1} parent=91 // pred_check_branch
          %1052 = sbr.rel (%p1050) target = $region136
        $region135: #{tpu_custom_call.1} parent=91 // pred_region
          %p1053 = scmp.lt.s32.totalorder %s88, 1
          %s1054 = scalar_select %p1053, %s88, 1
          %s1055 = scalar_lea.vmem %s51, %s1054
        $region136: #{tpu_custom_call.1} parent=91 // pred_fallthru
          _
        // Predicated region
        $region137: #{tpu_custom_call.1} parent=91 // pred_check
          %p1056 = pneg %p713
        $region138: #{tpu_custom_call.1} parent=91 // pred_check_branch
          %1058 = sbr.rel (%p1056) target = $region140
        $region139: #{tpu_custom_call.1} parent=91 // pred_region
          %p1059 = scmp.lt.s32.totalorder %s88, 1
          %s1060 = scalar_select %p1059, %s88, 1
          %s1061 = smul.addr %s1060, 4
          %s1062 = smul.addr %s1061, 4
          %s1063 = scalar_lea.vmem %s53, %s1062
        $region140: #{tpu_custom_call.1} parent=91 // pred_fallthru
          _
        // Predicated region
        $region141: #{tpu_custom_call.1} parent=91 // pred_check
          %p1064 = pneg %p739
        $region142: #{tpu_custom_call.1} parent=91 // pred_check_branch
          %1066 = sbr.rel (%p1064) target = $region144
        $region143: #{tpu_custom_call.1} parent=91 // pred_region
          %p1067 = scmp.lt.s32.totalorder %s88, 1
          %s1068 = scalar_select %p1067, %s88, 1
          %s1069 = scalar_lea.vmem %s55, %s1068
        $region144: #{tpu_custom_call.1} parent=91 // pred_fallthru
          _
        // Predicated region
        $region145: #{tpu_custom_call.1} parent=91 // pred_check
          %p1070 = pneg %p765
        $region146: #{tpu_custom_call.1} parent=91 // pred_check_branch
          %1072 = sbr.rel (%p1070) target = $region148
        $region147: #{tpu_custom_call.1} parent=91 // pred_region
          %p1073 = scmp.lt.s32.totalorder %s88, 1
          %s1074 = scalar_select %p1073, %s88, 1
          %s1075 = smul.addr %s1074, 16
          %s1076 = smul.addr %s1075, 4
          %s1077 = scalar_lea.vmem %s57, %s1076
        $region148: #{tpu_custom_call.1} parent=91 // pred_fallthru
          _
        // Predicated region
        $region149: #{tpu_custom_call.1} parent=91 // pred_check
          %p1078 = pneg %p791
        $region150: #{tpu_custom_call.1} parent=91 // pred_check_branch
          %1080 = sbr.rel (%p1078) target = $region152
        $region151: #{tpu_custom_call.1} parent=91 // pred_region
          %p1081 = scmp.lt.s32.totalorder %s88, 1
          %s1082 = scalar_select %p1081, %s88, 1
          %s1083 = scalar_lea.vmem %s59, %s1082
        $region152: #{tpu_custom_call.1} parent=91 // pred_fallthru
          _
      $region92: #{tpu_custom_call.1} parent=5 // pred_fallthru
        _
      %p1084 = scmp.le.s32.totalorder 1, %s80
      %p1085 = scmp.lt.s32.totalorder %s80, 5
      %p1086 = pnand %p1084, %p1085
      %p1087 = pneg %p1086
      // Predicated region
      $region153: #{tpu_custom_call.1} parent=5 // pred_check
        _
      $region154: #{tpu_custom_call.1} parent=5 // pred_check_branch
        %1089 = sbr.rel (%p1086) target = $region156
      $region155: #{tpu_custom_call.1} parent=5 // pred_region
        %s1090 = ssub.s32 %s80, 1
        %p1091 = scmp.lt.s32.totalorder %s89, 1
        %s1092 = scalar_select %p1091, %s89, 1
        %s1093 = smul.addr %s1092, 16
        %s1094 = smul.addr %s1093, 8
        %s1095 = scalar_lea.vmem %s1, %s1094
        %p1096 = pneg %p118
        %p1097 = pneg %p115
        %p1098 = scmp.lt.s32.totalorder %s89, 1
        %s1099 = scalar_select %p1098, %s89, 1
        %s1100 = smul.addr %s1099, 2
        %s1101 = scalar_lea.vmem %s3, %s1100
        %p1102 = pneg %p144
        %p1103 = pneg %p141
        %p1104 = scmp.lt.s32.totalorder %s89, 1
        %s1105 = scalar_select %p1104, %s89, 1
        %s1106 = scalar_lea.vmem %s5, %s1105
        %p1107 = pneg %p170
        %p1108 = pneg %p167
        %p1109 = pneg %p191
        %p1110 = pneg %p188
        %p1111 = pneg %p212
        %p1112 = pneg %p209
        %p1113 = pneg %p233
        %p1114 = pneg %p230
        %p1115 = pneg %p254
        %p1116 = pneg %p251
        %p1117 = pneg %p275
        %p1118 = pneg %p272
        %p1119 = pneg %p296
        %p1120 = pneg %p293
        %p1121 = pneg %p317
        %p1122 = pneg %p314
        %p1123 = pneg %p338
        %p1124 = pneg %p335
        %p1125 = pneg %p359
        %p1126 = pneg %p356
        %p1127 = pneg %p380
        %p1128 = pneg %p377
        %p1129 = pneg %p401
        %p1130 = pneg %p398
        %p1131 = pneg %p422
        %p1132 = pneg %p419
        %p1133 = pneg %p443
        %p1134 = pneg %p440
        %p1135 = pneg %p464
        %p1136 = pneg %p461
        %p1137 = pneg %p485
        %p1138 = pneg %p482
        %p1139 = scmp.lt.s32.totalorder %s90, 1
        %s1140 = scalar_select %p1139, %s90, 1
        %s1141 = scalar_lea.vmem %s37, %s1140
        %p1142 = pneg %p511
        %p1143 = pneg %p508
        %p1144 = scmp.lt.s32.totalorder %s90, 1
        %s1145 = scalar_select %p1144, %s90, 1
        %s1146 = scalar_lea.vmem %s39, %s1145
        %p1147 = pneg %p537
        %p1148 = pneg %p534
        %p1149 = scmp.lt.s32.totalorder %s90, 1
        %s1150 = scalar_select %p1149, %s90, 1
        %s1151 = smul.addr %s1150, 4
        %s1152 = smul.addr %s1151, 4
        %s1153 = scalar_lea.vmem %s41, %s1152
        %p1154 = pneg %p563
        %p1155 = pneg %p560
        %p1156 = scmp.lt.s32.totalorder %s90, 1
        %s1157 = scalar_select %p1156, %s90, 1
        %s1158 = scalar_lea.vmem %s43, %s1157
        %p1159 = pneg %p589
        %p1160 = pneg %p586
        %p1161 = scmp.lt.s32.totalorder %s90, 1
        %s1162 = scalar_select %p1161, %s90, 1
        %s1163 = smul.addr %s1162, 4
        %s1164 = smul.addr %s1163, 4
        %s1165 = scalar_lea.vmem %s45, %s1164
        %p1166 = pneg %p615
        %p1167 = pneg %p612
        %p1168 = scmp.lt.s32.totalorder %s90, 1
        %s1169 = scalar_select %p1168, %s90, 1
        %s1170 = scalar_lea.vmem %s47, %s1169
        %p1171 = pneg %p641
        %p1172 = pneg %p638
        %p1173 = scmp.lt.s32.totalorder %s90, 1
        %s1174 = scalar_select %p1173, %s90, 1
        %s1175 = scalar_lea.vmem %s49, %s1174
        %p1176 = pneg %p667
        %p1177 = pneg %p664
        %p1178 = scmp.lt.s32.totalorder %s90, 1
        %s1179 = scalar_select %p1178, %s90, 1
        %s1180 = scalar_lea.vmem %s51, %s1179
        %p1181 = pneg %p693
        %p1182 = pneg %p690
        %p1183 = scmp.lt.s32.totalorder %s90, 1
        %s1184 = scalar_select %p1183, %s90, 1
        %s1185 = smul.addr %s1184, 4
        %s1186 = smul.addr %s1185, 4
        %s1187 = scalar_lea.vmem %s53, %s1186
        %p1188 = pneg %p719
        %p1189 = pneg %p716
        %p1190 = scmp.lt.s32.totalorder %s90, 1
        %s1191 = scalar_select %p1190, %s90, 1
        %s1192 = scalar_lea.vmem %s55, %s1191
        %p1193 = pneg %p745
        %p1194 = pneg %p742
        %p1195 = scmp.lt.s32.totalorder %s90, 1
        %s1196 = scalar_select %p1195, %s90, 1
        %s1197 = smul.addr %s1196, 16
        %s1198 = smul.addr %s1197, 4
        %s1199 = scalar_lea.vmem %s57, %s1198
        %p1200 = pneg %p771
        %p1201 = pneg %p768
        %p1202 = scmp.lt.s32.totalorder %s90, 1
        %s1203 = scalar_select %p1202, %s90, 1
        %s1204 = scalar_lea.vmem %s59, %s1203
        %p1205 = pneg %p797
        %p1206 = pneg %p794
        %p1207 = pneg %p818
        %p1208 = pneg %p815
        %p1209 = pneg %p839
        %p1210 = pneg %p836
        %p1211 = pneg %p860
        %p1212 = pneg %p857
        %p1213 = pneg %p881
        %p1214 = pneg %p878
        %p1215 = pneg %p907
        %p1216 = pneg %p904
        %s1217 = sand.u32 %s894, 1
        %s1218 = scalar_lea.sflag [#allocation9], %s1217
        %s1219 = sand.u32 %s894, 1
        %s1220 = smul.addr %s1219, 8
        %s1221 = scalar_lea.vmem [#allocation8], %s1220
        %p1222 = scmp.lt.s32.totalorder %s89, 1
        %s1223 = scalar_select %p1222, %s89, 1
        %s1224 = smul.addr %s1223, 16
        %s1225 = smul.addr %s1224, 8
        %s1226 = scalar_lea.vmem %s1, %s1225
        %p1227 = scmp.lt.s32.totalorder %s89, 1
        %s1228 = scalar_select %p1227, %s89, 1
        %s1229 = smul.addr %s1228, 2
        %s1230 = scalar_lea.vmem %s3, %s1229
        %p1231 = scmp.lt.s32.totalorder %s89, 1
        %s1232 = scalar_select %p1231, %s89, 1
        %s1233 = scalar_lea.vmem %s5, %s1232
        %p1234 = scmp.lt.s32.totalorder %s90, 1
        %s1235 = scalar_select %p1234, %s90, 1
        %s1236 = scalar_lea.vmem %s37, %s1235
        %p1237 = scmp.lt.s32.totalorder %s90, 1
        %s1238 = scalar_select %p1237, %s90, 1
        %s1239 = scalar_lea.vmem %s39, %s1238
        %p1240 = scmp.lt.s32.totalorder %s90, 1
        %s1241 = scalar_select %p1240, %s90, 1
        %s1242 = smul.addr %s1241, 4
        %s1243 = smul.addr %s1242, 4
        %s1244 = scalar_lea.vmem %s41, %s1243
        %p1245 = scmp.lt.s32.totalorder %s90, 1
        %s1246 = scalar_select %p1245, %s90, 1
        %s1247 = scalar_lea.vmem %s43, %s1246
        %p1248 = scmp.lt.s32.totalorder %s90, 1
        %s1249 = scalar_select %p1248, %s90, 1
        %s1250 = smul.addr %s1249, 4
        %s1251 = smul.addr %s1250, 4
        %s1252 = scalar_lea.vmem %s45, %s1251
        %p1253 = scmp.lt.s32.totalorder %s90, 1
        %s1254 = scalar_select %p1253, %s90, 1
        %s1255 = scalar_lea.vmem %s47, %s1254
        %p1256 = scmp.lt.s32.totalorder %s90, 1
        %s1257 = scalar_select %p1256, %s90, 1
        %s1258 = scalar_lea.vmem %s49, %s1257
        %p1259 = scmp.lt.s32.totalorder %s90, 1
        %s1260 = scalar_select %p1259, %s90, 1
        %s1261 = scalar_lea.vmem %s51, %s1260
        %p1262 = scmp.lt.s32.totalorder %s90, 1
        %s1263 = scalar_select %p1262, %s90, 1
        %s1264 = smul.addr %s1263, 4
        %s1265 = smul.addr %s1264, 4
        %s1266 = scalar_lea.vmem %s53, %s1265
        %p1267 = scmp.lt.s32.totalorder %s90, 1
        %s1268 = scalar_select %p1267, %s90, 1
        %s1269 = scalar_lea.vmem %s55, %s1268
        %p1270 = scmp.lt.s32.totalorder %s90, 1
        %s1271 = scalar_select %p1270, %s90, 1
        %s1272 = smul.addr %s1271, 16
        %s1273 = smul.addr %s1272, 4
        %s1274 = scalar_lea.vmem %s57, %s1273
        %p1275 = scmp.lt.s32.totalorder %s90, 1
        %s1276 = scalar_select %p1275, %s90, 1
        %s1277 = scalar_lea.vmem %s59, %s1276
        %p1279 = scmp.eq.s32.totalorder %s90, 0
        // Predicated region
        $region157: #{tpu_custom_call.1} parent=155 // pred_check
          %p1280 = pneg %p1279
        $region158: #{tpu_custom_call.1} parent=155 // pred_check_branch
          %1282 = sbr.rel (%p1280) target = $region160
        $region159: #{tpu_custom_call.1} parent=155 // pred_region
          %vm1283 = vcmask 31744
          %1284 = vst.msk [vmem:[#allocation2] sm:$0xff] %vm1283, 0.0
          %1285 = vst.msk [vmem:[#allocation2 + $0x88] sm:$0xff] %vm1283, 0.0
          %vm1286 = vcmask 130048
          %1287 = vst.msk [vmem:[#allocation3] sm:$0xff] %vm1286, 0.0
          %1288 = vst.msk [vmem:[#allocation3 + $0x88] sm:$0xff] %vm1286, 0.0
          %1289 = vst.msk [vmem:[#allocation4] sm:$0xff] %vm1286, 0.0
          %1290 = vst.msk [vmem:[#allocation4 + $0x88] sm:$0xff] %vm1286, 0.0
          %v1291 = vld [vmem:[%s1226] sm:$0xff]
          %v1292 = vld [vmem:[%s1226 + $0x8] sm:$0xff]
          %v1293 = vld [vmem:[%s1226 + $0x10] sm:$0xff]
          %v1294 = vld [vmem:[%s1226 + $0x18] sm:$0xff]
          %v1295 = vld [vmem:[%s1226 + $0x20] sm:$0xff]
          %v1296 = vld [vmem:[%s1226 + $0x28] sm:$0xff]
          %v1297 = vld [vmem:[%s1226 + $0x30] sm:$0xff]
          %v1298 = vld [vmem:[%s1226 + $0x38] sm:$0xff]
          %v1299 = vld [vmem:[%s1226 + $0x40] sm:$0xff]
          %v1300 = vld [vmem:[%s1226 + $0x48] sm:$0xff]
          %v1301 = vld [vmem:[%s1226 + $0x50] sm:$0xff]
          %v1302 = vld [vmem:[%s1226 + $0x58] sm:$0xff]
          %v1303 = vld [vmem:[%s1226 + $0x60] sm:$0xff]
          %v1304 = vld [vmem:[%s1226 + $0x68] sm:$0xff]
          %v1305 = vld [vmem:[%s1226 + $0x70] sm:$0xff]
          %v1306 = vld [vmem:[%s1226 + $0x78] sm:$0xff]
          %1307 = vst.msk [vmem:[#allocation2 + $0x8] sm:$0xff] %vm1283, %v1291
          %1308 = vst.msk [vmem:[#allocation2 + $0x10] sm:$0xff] %vm1283, %v1292
          %1309 = vst.msk [vmem:[#allocation2 + $0x18] sm:$0xff] %vm1283, %v1293
          %1310 = vst.msk [vmem:[#allocation2 + $0x20] sm:$0xff] %vm1283, %v1294
          %1311 = vst.msk [vmem:[#allocation2 + $0x28] sm:$0xff] %vm1283, %v1295
          %1312 = vst.msk [vmem:[#allocation2 + $0x30] sm:$0xff] %vm1283, %v1296
          %1313 = vst.msk [vmem:[#allocation2 + $0x38] sm:$0xff] %vm1283, %v1297
          %1314 = vst.msk [vmem:[#allocation2 + $0x40] sm:$0xff] %vm1283, %v1298
          %1315 = vst.msk [vmem:[#allocation2 + $0x48] sm:$0xff] %vm1283, %v1299
          %1316 = vst.msk [vmem:[#allocation2 + $0x50] sm:$0xff] %vm1283, %v1300
          %1317 = vst.msk [vmem:[#allocation2 + $0x58] sm:$0xff] %vm1283, %v1301
          %1318 = vst.msk [vmem:[#allocation2 + $0x60] sm:$0xff] %vm1283, %v1302
          %1319 = vst.msk [vmem:[#allocation2 + $0x68] sm:$0xff] %vm1283, %v1303
          %1320 = vst.msk [vmem:[#allocation2 + $0x70] sm:$0xff] %vm1283, %v1304
          %1321 = vst.msk [vmem:[#allocation2 + $0x78] sm:$0xff] %vm1283, %v1305
          %1322 = vst.msk [vmem:[#allocation2 + $0x80] sm:$0xff] %vm1283, %v1306
          %v1323 = vld [vmem:[#allocation2 + $0x6] sm:$0xff]
          %v1324 = vld [vmem:[#allocation2 + $0xe] sm:$0xff]
          %v1325 = vld [vmem:[#allocation2 + $0x16] sm:$0xff]
          %v1326 = vld [vmem:[#allocation2 + $0x1e] sm:$0xff]
          %v1327 = vld [vmem:[#allocation2 + $0x26] sm:$0xff]
          %v1328 = vld [vmem:[#allocation2 + $0x2e] sm:$0xff]
          %v1329 = vld [vmem:[#allocation2 + $0x36] sm:$0xff]
          %v1330 = vld [vmem:[#allocation2 + $0x3e] sm:$0xff]
          %v1331 = vld [vmem:[#allocation2 + $0x46] sm:$0xff]
          %v1332 = vld [vmem:[#allocation2 + $0x4e] sm:$0xff]
          %v1333 = vld [vmem:[#allocation2 + $0x56] sm:$0xff]
          %v1334 = vld [vmem:[#allocation2 + $0x5e] sm:$0xff]
          %v1335 = vld [vmem:[#allocation2 + $0x66] sm:$0xff]
          %v1336 = vld [vmem:[#allocation2 + $0x6e] sm:$0xff]
          %v1337 = vld [vmem:[#allocation2 + $0x76] sm:$0xff]
          %v1338 = vld [vmem:[#allocation2 + $0x7e] sm:$0xff]
          %v1339 = vpack.c.bf16 %v1324, %v1323
          %v1340 = vpack.c.bf16 %v1326, %v1325
          %v1341 = vpack.c.bf16 %v1328, %v1327
          %v1342 = vpack.c.bf16 %v1330, %v1329
          %v1343 = vpack.c.bf16 %v1332, %v1331
          %v1344 = vpack.c.bf16 %v1334, %v1333
          %v1345 = vpack.c.bf16 %v1336, %v1335
          %v1346 = vpack.c.bf16 %v1338, %v1337
          %v1347 = vld [vmem:[%s7] sm:$0x3]
          %v1348 = vld [vmem:[#allocation2 + $0x7] sm:$0xff]
          %v1349 = vld [vmem:[#allocation2 + $0xf] sm:$0xff]
          %v1350 = vld [vmem:[#allocation2 + $0x17] sm:$0xff]
          %v1351 = vld [vmem:[#allocation2 + $0x1f] sm:$0xff]
          %v1352 = vld [vmem:[#allocation2 + $0x27] sm:$0xff]
          %v1353 = vld [vmem:[#allocation2 + $0x2f] sm:$0xff]
          %v1354 = vld [vmem:[#allocation2 + $0x37] sm:$0xff]
          %v1355 = vld [vmem:[#allocation2 + $0x3f] sm:$0xff]
          %v1356 = vld [vmem:[#allocation2 + $0x47] sm:$0xff]
          %v1357 = vld [vmem:[#allocation2 + $0x4f] sm:$0xff]
          %v1358 = vld [vmem:[#allocation2 + $0x57] sm:$0xff]
          %v1359 = vld [vmem:[#allocation2 + $0x5f] sm:$0xff]
          %v1360 = vld [vmem:[#allocation2 + $0x67] sm:$0xff]
          %v1361 = vld [vmem:[#allocation2 + $0x6f] sm:$0xff]
          %v1362 = vld [vmem:[#allocation2 + $0x77] sm:$0xff]
          %v1363 = vld [vmem:[#allocation2 + $0x7f] sm:$0xff]
          %v1364 = vpack.c.bf16 %v1349, %v1348
          %v1365 = vpack.c.bf16 %v1351, %v1350
          %v1366 = vpack.c.bf16 %v1353, %v1352
          %v1367 = vpack.c.bf16 %v1355, %v1354
          %v1368 = vpack.c.bf16 %v1357, %v1356
          %v1369 = vpack.c.bf16 %v1359, %v1358
          %v1370 = vpack.c.bf16 %v1361, %v1360
          %v1371 = vpack.c.bf16 %v1363, %v1362
          %s1372 = scalar_lea.vmem %s7, 2
          %v1373 = vld [vmem:[%s1372] sm:$0x3]
          %v1375 = vsel %vm1283, %v1364, 0
          %v1378 = vsel %vm1283, %v1365, 0
          %v1381 = vsel %vm1283, %v1366, 0
          %v1384 = vsel %vm1283, %v1367, 0
          %v1387 = vsel %vm1283, %v1368, 0
          %v1390 = vsel %vm1283, %v1369, 0
          %v1393 = vsel %vm1283, %v1370, 0
          %v1396 = vsel %vm1283, %v1371, 0
          %vm1398 = vcmask 1041408
          %v1400 = vsel %vm1398, %v1373, 0
          %1402 = vmatpush.bf16.msra.mxu0 0
          %1403 = vmatpush.bf16.msra.mxu0 0
          %1404 = vmatpush.bf16.msra.mxu0 0
          %1405 = vmatpush.bf16.msra.mxu0 0
          %1406 = vmatpush.bf16.msra.mxu0 0
          %1407 = vmatpush.bf16.msra.mxu0 0
          %1408 = vmatpush.bf16.msra.mxu0 0
          %1409 = vmatpush.bf16.msra.mxu0 %v1400
          %1410 = vmatmul.bf16.gmra.mxu0 %v1375
          %v1411 = vpop.f32.mrf.mxu0
          %v1412 = vadd.f32 0.0, %v1411
          %v1413 = vpop.f32.mrf.mxu0
          %v1414 = vadd.f32 0.0, %v1413
          %1415 = vmatmul.bf16.gmra.mxu0 %v1378
          %v1416 = vpop.f32.mrf.mxu0
          %v1417 = vadd.f32 0.0, %v1416
          %v1418 = vpop.f32.mrf.mxu0
          %v1419 = vadd.f32 0.0, %v1418
          %1420 = vmatmul.bf16.gmra.mxu0 %v1381
          %v1421 = vpop.f32.mrf.mxu0
          %v1422 = vadd.f32 0.0, %v1421
          %v1423 = vpop.f32.mrf.mxu0
          %v1424 = vadd.f32 0.0, %v1423
          %1425 = vmatmul.bf16.gmra.mxu0 %v1384
          %v1426 = vpop.f32.mrf.mxu0
          %v1427 = vadd.f32 0.0, %v1426
          %v1428 = vpop.f32.mrf.mxu0
          %v1429 = vadd.f32 0.0, %v1428
          %1430 = vmatmul.bf16.gmra.mxu0 %v1387
          %v1431 = vpop.f32.mrf.mxu0
          %v1432 = vadd.f32 0.0, %v1431
          %v1433 = vpop.f32.mrf.mxu0
          %v1434 = vadd.f32 0.0, %v1433
          %1435 = vmatmul.bf16.gmra.mxu0 %v1390
          %v1436 = vpop.f32.mrf.mxu0
          %v1437 = vadd.f32 0.0, %v1436
          %v1438 = vpop.f32.mrf.mxu0
          %v1439 = vadd.f32 0.0, %v1438
          %1440 = vmatmul.bf16.gmra.mxu0 %v1393
          %v1441 = vpop.f32.mrf.mxu0
          %v1442 = vadd.f32 0.0, %v1441
          %v1443 = vpop.f32.mrf.mxu0
          %v1444 = vadd.f32 0.0, %v1443
          %1445 = vmatmul.bf16.gmra.mxu0 %v1396
          %v1446 = vpop.f32.mrf.mxu0
          %v1447 = vadd.f32 0.0, %v1446
          %v1448 = vpop.f32.mrf.mxu0
          %v1449 = vadd.f32 0.0, %v1448
          %1450 = vdwg.mxu0
          %v1452 = vsel %vm1283, %v1339, 0
          %v1455 = vsel %vm1283, %v1340, 0
          %v1458 = vsel %vm1283, %v1341, 0
          %v1461 = vsel %vm1283, %v1342, 0
          %v1464 = vsel %vm1283, %v1343, 0
          %v1467 = vsel %vm1283, %v1344, 0
          %v1470 = vsel %vm1283, %v1345, 0
          %v1473 = vsel %vm1283, %v1346, 0
          %v1476 = vsel %vm1398, %v1347, 0
          %1478 = vmatpush.bf16.msra.mxu0 0
          %1479 = vmatpush.bf16.msra.mxu0 0
          %1480 = vmatpush.bf16.msra.mxu0 0
          %1481 = vmatpush.bf16.msra.mxu0 0
          %1482 = vmatpush.bf16.msra.mxu0 0
          %1483 = vmatpush.bf16.msra.mxu0 0
          %1484 = vmatpush.bf16.msra.mxu0 0
          %1485 = vmatpush.bf16.msra.mxu0 %v1476
          %1486 = vmatmul.bf16.gmra.mxu0 %v1452
          %v1487 = vpop.f32.mrf.mxu0
          %v1488 = vadd.f32 %v1412, %v1487
          %v1489 = vpop.f32.mrf.mxu0
          %v1490 = vadd.f32 %v1414, %v1489
          %1491 = vmatmul.bf16.gmra.mxu0 %v1455
          %v1492 = vpop.f32.mrf.mxu0
          %v1493 = vadd.f32 %v1417, %v1492
          %v1494 = vpop.f32.mrf.mxu0
          %v1495 = vadd.f32 %v1419, %v1494
          %1496 = vmatmul.bf16.gmra.mxu0 %v1458
          %v1497 = vpop.f32.mrf.mxu0
          %v1498 = vadd.f32 %v1422, %v1497
          %v1499 = vpop.f32.mrf.mxu0
          %v1500 = vadd.f32 %v1424, %v1499
          %1501 = vmatmul.bf16.gmra.mxu0 %v1461
          %v1502 = vpop.f32.mrf.mxu0
          %v1503 = vadd.f32 %v1427, %v1502
          %v1504 = vpop.f32.mrf.mxu0
          %v1505 = vadd.f32 %v1429, %v1504
          %1506 = vmatmul.bf16.gmra.mxu0 %v1464
          %v1507 = vpop.f32.mrf.mxu0
          %v1508 = vadd.f32 %v1432, %v1507
          %v1509 = vpop.f32.mrf.mxu0
          %v1510 = vadd.f32 %v1434, %v1509
          %1511 = vmatmul.bf16.gmra.mxu0 %v1467
          %v1512 = vpop.f32.mrf.mxu0
          %v1513 = vadd.f32 %v1437, %v1512
          %v1514 = vpop.f32.mrf.mxu0
          %v1515 = vadd.f32 %v1439, %v1514
          %1516 = vmatmul.bf16.gmra.mxu0 %v1470
          %v1517 = vpop.f32.mrf.mxu0
          %v1518 = vadd.f32 %v1442, %v1517
          %v1519 = vpop.f32.mrf.mxu0
          %v1520 = vadd.f32 %v1444, %v1519
          %1521 = vmatmul.bf16.gmra.mxu0 %v1473
          %v1522 = vpop.f32.mrf.mxu0
          %v1523 = vadd.f32 %v1447, %v1522
          %v1524 = vpop.f32.mrf.mxu0
          %v1525 = vadd.f32 %v1449, %v1524
          %1526 = vdwg.mxu0
          %v1527 = vld [vmem:[#allocation2 + $0x8] sm:$0xff]
          %v1528 = vld [vmem:[#allocation2 + $0x10] sm:$0xff]
          %v1529 = vld [vmem:[#allocation2 + $0x18] sm:$0xff]
          %v1530 = vld [vmem:[#allocation2 + $0x20] sm:$0xff]
          %v1531 = vld [vmem:[#allocation2 + $0x28] sm:$0xff]
          %v1532 = vld [vmem:[#allocation2 + $0x30] sm:$0xff]
          %v1533 = vld [vmem:[#allocation2 + $0x38] sm:$0xff]
          %v1534 = vld [vmem:[#allocation2 + $0x40] sm:$0xff]
          %v1535 = vld [vmem:[#allocation2 + $0x48] sm:$0xff]
          %v1536 = vld [vmem:[#allocation2 + $0x50] sm:$0xff]
          %v1537 = vld [vmem:[#allocation2 + $0x58] sm:$0xff]
          %v1538 = vld [vmem:[#allocation2 + $0x60] sm:$0xff]
          %v1539 = vld [vmem:[#allocation2 + $0x68] sm:$0xff]
          %v1540 = vld [vmem:[#allocation2 + $0x70] sm:$0xff]
          %v1541 = vld [vmem:[#allocation2 + $0x78] sm:$0xff]
          %v1542 = vld [vmem:[#allocation2 + $0x80] sm:$0xff]
          %v1543 = vpack.c.bf16 %v1528, %v1527
          %v1544 = vpack.c.bf16 %v1530, %v1529
          %v1545 = vpack.c.bf16 %v1532, %v1531
          %v1546 = vpack.c.bf16 %v1534, %v1533
          %v1547 = vpack.c.bf16 %v1536, %v1535
          %v1548 = vpack.c.bf16 %v1538, %v1537
          %v1549 = vpack.c.bf16 %v1540, %v1539
          %v1550 = vpack.c.bf16 %v1542, %v1541
          %s1551 = scalar_lea.vmem %s7, 4
          %v1552 = vld [vmem:[%s1551] sm:$0x3]
          %v1554 = vsel %vm1283, %v1543, 0
          %v1557 = vsel %vm1283, %v1544, 0
          %v1560 = vsel %vm1283, %v1545, 0
          %v1563 = vsel %vm1283, %v1546, 0
          %v1566 = vsel %vm1283, %v1547, 0
          %v1569 = vsel %vm1283, %v1548, 0
          %v1572 = vsel %vm1283, %v1549, 0
          %v1575 = vsel %vm1283, %v1550, 0
          %v1578 = vsel %vm1398, %v1552, 0
          %1580 = vmatpush.bf16.msra.mxu0 0
          %1581 = vmatpush.bf16.msra.mxu0 0
          %1582 = vmatpush.bf16.msra.mxu0 0
          %1583 = vmatpush.bf16.msra.mxu0 0
          %1584 = vmatpush.bf16.msra.mxu0 0
          %1585 = vmatpush.bf16.msra.mxu0 0
          %1586 = vmatpush.bf16.msra.mxu0 0
          %1587 = vmatpush.bf16.msra.mxu0 %v1578
          %1588 = vmatmul.bf16.gmra.mxu0 %v1554
          %v1589 = vpop.f32.mrf.mxu0
          %v1590 = vadd.f32 0.0, %v1589
          %v1591 = vpop.f32.mrf.mxu0
          %v1592 = vadd.f32 0.0, %v1591
          %1593 = vmatmul.bf16.gmra.mxu0 %v1557
          %v1594 = vpop.f32.mrf.mxu0
          %v1595 = vadd.f32 0.0, %v1594
          %v1596 = vpop.f32.mrf.mxu0
          %v1597 = vadd.f32 0.0, %v1596
          %1598 = vmatmul.bf16.gmra.mxu0 %v1560
          %v1599 = vpop.f32.mrf.mxu0
          %v1600 = vadd.f32 0.0, %v1599
          %v1601 = vpop.f32.mrf.mxu0
          %v1602 = vadd.f32 0.0, %v1601
          %1603 = vmatmul.bf16.gmra.mxu0 %v1563
          %v1604 = vpop.f32.mrf.mxu0
          %v1605 = vadd.f32 0.0, %v1604
          %v1606 = vpop.f32.mrf.mxu0
          %v1607 = vadd.f32 0.0, %v1606
          %1608 = vmatmul.bf16.gmra.mxu0 %v1566
          %v1609 = vpop.f32.mrf.mxu0
          %v1610 = vadd.f32 0.0, %v1609
          %v1611 = vpop.f32.mrf.mxu0
          %v1612 = vadd.f32 0.0, %v1611
          %1613 = vmatmul.bf16.gmra.mxu0 %v1569
          %v1614 = vpop.f32.mrf.mxu0
          %v1615 = vadd.f32 0.0, %v1614
          %v1616 = vpop.f32.mrf.mxu0
          %v1617 = vadd.f32 0.0, %v1616
          %1618 = vmatmul.bf16.gmra.mxu0 %v1572
          %v1619 = vpop.f32.mrf.mxu0
          %v1620 = vadd.f32 0.0, %v1619
          %v1621 = vpop.f32.mrf.mxu0
          %v1622 = vadd.f32 0.0, %v1621
          %1623 = vmatmul.bf16.gmra.mxu0 %v1575
          %v1624 = vpop.f32.mrf.mxu0
          %v1625 = vadd.f32 0.0, %v1624
          %v1626 = vpop.f32.mrf.mxu0
          %v1627 = vadd.f32 0.0, %v1626
          %1628 = vdwg.mxu0
          %v1629 = vadd.f32 %v1488, %v1590
          %v1630 = vadd.f32 %v1490, %v1592
          %v1631 = vadd.f32 %v1493, %v1595
          %v1632 = vadd.f32 %v1495, %v1597
          %v1633 = vadd.f32 %v1498, %v1600
          %v1634 = vadd.f32 %v1500, %v1602
          %v1635 = vadd.f32 %v1503, %v1605
          %v1636 = vadd.f32 %v1505, %v1607
          %v1637 = vadd.f32 %v1508, %v1610
          %v1638 = vadd.f32 %v1510, %v1612
          %v1639 = vadd.f32 %v1513, %v1615
          %v1640 = vadd.f32 %v1515, %v1617
          %v1641 = vadd.f32 %v1518, %v1620
          %v1642 = vadd.f32 %v1520, %v1622
          %v1643 = vadd.f32 %v1523, %v1625
          %v1644 = vadd.f32 %v1525, %v1627
          %v1645 = vld [vmem:[#allocation2 + $0x9] sm:$0xff]
          %v1646 = vld [vmem:[#allocation2 + $0x11] sm:$0xff]
          %v1647 = vld [vmem:[#allocation2 + $0x19] sm:$0xff]
          %v1648 = vld [vmem:[#allocation2 + $0x21] sm:$0xff]
          %v1649 = vld [vmem:[#allocation2 + $0x29] sm:$0xff]
          %v1650 = vld [vmem:[#allocation2 + $0x31] sm:$0xff]
          %v1651 = vld [vmem:[#allocation2 + $0x39] sm:$0xff]
          %v1652 = vld [vmem:[#allocation2 + $0x41] sm:$0xff]
          %v1653 = vld [vmem:[#allocation2 + $0x49] sm:$0xff]
          %v1654 = vld [vmem:[#allocation2 + $0x51] sm:$0xff]
          %v1655 = vld [vmem:[#allocation2 + $0x59] sm:$0xff]
          %v1656 = vld [vmem:[#allocation2 + $0x61] sm:$0xff]
          %v1657 = vld [vmem:[#allocation2 + $0x69] sm:$0xff]
          %v1658 = vld [vmem:[#allocation2 + $0x71] sm:$0xff]
          %v1659 = vld [vmem:[#allocation2 + $0x79] sm:$0xff]
          %v1660 = vld [vmem:[#allocation2 + $0x81] sm:$0xff]
          %v1661 = vpack.c.bf16 %v1646, %v1645
          %v1662 = vpack.c.bf16 %v1648, %v1647
          %v1663 = vpack.c.bf16 %v1650, %v1649
          %v1664 = vpack.c.bf16 %v1652, %v1651
          %v1665 = vpack.c.bf16 %v1654, %v1653
          %v1666 = vpack.c.bf16 %v1656, %v1655
          %v1667 = vpack.c.bf16 %v1658, %v1657
          %v1668 = vpack.c.bf16 %v1660, %v1659
          %s1669 = scalar_lea.vmem %s7, 6
          %v1670 = vld [vmem:[%s1669] sm:$0x3]
          %v1672 = vsel %vm1283, %v1661, 0
          %v1675 = vsel %vm1283, %v1662, 0
          %v1678 = vsel %vm1283, %v1663, 0
          %v1681 = vsel %vm1283, %v1664, 0
          %v1684 = vsel %vm1283, %v1665, 0
          %v1687 = vsel %vm1283, %v1666, 0
          %v1690 = vsel %vm1283, %v1667, 0
          %v1693 = vsel %vm1283, %v1668, 0
          %v1696 = vsel %vm1398, %v1670, 0
          %1698 = vmatpush.bf16.msra.mxu0 0
          %1699 = vmatpush.bf16.msra.mxu0 0
          %1700 = vmatpush.bf16.msra.mxu0 0
          %1701 = vmatpush.bf16.msra.mxu0 0
          %1702 = vmatpush.bf16.msra.mxu0 0
          %1703 = vmatpush.bf16.msra.mxu0 0
          %1704 = vmatpush.bf16.msra.mxu0 0
          %1705 = vmatpush.bf16.msra.mxu0 %v1696
          %1706 = vmatmul.bf16.gmra.mxu0 %v1672
          %v1707 = vpop.f32.mrf.mxu0
          %v1708 = vadd.f32 0.0, %v1707
          %v1709 = vpop.f32.mrf.mxu0
          %v1710 = vadd.f32 0.0, %v1709
          %1711 = vmatmul.bf16.gmra.mxu0 %v1675
          %v1712 = vpop.f32.mrf.mxu0
          %v1713 = vadd.f32 0.0, %v1712
          %v1714 = vpop.f32.mrf.mxu0
          %v1715 = vadd.f32 0.0, %v1714
          %1716 = vmatmul.bf16.gmra.mxu0 %v1678
          %v1717 = vpop.f32.mrf.mxu0
          %v1718 = vadd.f32 0.0, %v1717
          %v1719 = vpop.f32.mrf.mxu0
          %v1720 = vadd.f32 0.0, %v1719
          %1721 = vmatmul.bf16.gmra.mxu0 %v1681
          %v1722 = vpop.f32.mrf.mxu0
          %v1723 = vadd.f32 0.0, %v1722
          %v1724 = vpop.f32.mrf.mxu0
          %v1725 = vadd.f32 0.0, %v1724
          %1726 = vmatmul.bf16.gmra.mxu0 %v1684
          %v1727 = vpop.f32.mrf.mxu0
          %v1728 = vadd.f32 0.0, %v1727
          %v1729 = vpop.f32.mrf.mxu0
          %v1730 = vadd.f32 0.0, %v1729
          %1731 = vmatmul.bf16.gmra.mxu0 %v1687
          %v1732 = vpop.f32.mrf.mxu0
          %v1733 = vadd.f32 0.0, %v1732
          %v1734 = vpop.f32.mrf.mxu0
          %v1735 = vadd.f32 0.0, %v1734
          %1736 = vmatmul.bf16.gmra.mxu0 %v1690
          %v1737 = vpop.f32.mrf.mxu0
          %v1738 = vadd.f32 0.0, %v1737
          %v1739 = vpop.f32.mrf.mxu0
          %v1740 = vadd.f32 0.0, %v1739
          %1741 = vmatmul.bf16.gmra.mxu0 %v1693
          %v1742 = vpop.f32.mrf.mxu0
          %v1743 = vadd.f32 0.0, %v1742
          %v1744 = vpop.f32.mrf.mxu0
          %v1745 = vadd.f32 0.0, %v1744
          %1746 = vdwg.mxu0
          %v1747 = vadd.f32 %v1629, %v1708
          %v1748 = vadd.f32 %v1630, %v1710
          %v1749 = vadd.f32 %v1631, %v1713
          %v1750 = vadd.f32 %v1632, %v1715
          %v1751 = vadd.f32 %v1633, %v1718
          %v1752 = vadd.f32 %v1634, %v1720
          %v1753 = vadd.f32 %v1635, %v1723
          %v1754 = vadd.f32 %v1636, %v1725
          %v1755 = vadd.f32 %v1637, %v1728
          %v1756 = vadd.f32 %v1638, %v1730
          %v1757 = vadd.f32 %v1639, %v1733
          %v1758 = vadd.f32 %v1640, %v1735
          %v1759 = vadd.f32 %v1641, %v1738
          %v1760 = vadd.f32 %v1642, %v1740
          %v1761 = vadd.f32 %v1643, %v1743
          %v1762 = vadd.f32 %v1644, %v1745
          %v1763 = vld [vmem:[#allocation2 + $0xa] sm:$0xff]
          %v1764 = vld [vmem:[#allocation2 + $0x12] sm:$0xff]
          %v1765 = vld [vmem:[#allocation2 + $0x1a] sm:$0xff]
          %v1766 = vld [vmem:[#allocation2 + $0x22] sm:$0xff]
          %v1767 = vld [vmem:[#allocation2 + $0x2a] sm:$0xff]
          %v1768 = vld [vmem:[#allocation2 + $0x32] sm:$0xff]
          %v1769 = vld [vmem:[#allocation2 + $0x3a] sm:$0xff]
          %v1770 = vld [vmem:[#allocation2 + $0x42] sm:$0xff]
          %v1771 = vld [vmem:[#allocation2 + $0x4a] sm:$0xff]
          %v1772 = vld [vmem:[#allocation2 + $0x52] sm:$0xff]
          %v1773 = vld [vmem:[#allocation2 + $0x5a] sm:$0xff]
          %v1774 = vld [vmem:[#allocation2 + $0x62] sm:$0xff]
          %v1775 = vld [vmem:[#allocation2 + $0x6a] sm:$0xff]
          %v1776 = vld [vmem:[#allocation2 + $0x72] sm:$0xff]
          %v1777 = vld [vmem:[#allocation2 + $0x7a] sm:$0xff]
          %v1778 = vld [vmem:[#allocation2 + $0x82] sm:$0xff]
          %v1779 = vpack.c.bf16 %v1764, %v1763
          %v1780 = vpack.c.bf16 %v1766, %v1765
          %v1781 = vpack.c.bf16 %v1768, %v1767
          %v1782 = vpack.c.bf16 %v1770, %v1769
          %v1783 = vpack.c.bf16 %v1772, %v1771
          %v1784 = vpack.c.bf16 %v1774, %v1773
          %v1785 = vpack.c.bf16 %v1776, %v1775
          %v1786 = vpack.c.bf16 %v1778, %v1777
          %s1787 = scalar_lea.vmem %s7, 8
          %v1788 = vld [vmem:[%s1787] sm:$0x3]
          %v1790 = vsel %vm1283, %v1779, 0
          %v1793 = vsel %vm1283, %v1780, 0
          %v1796 = vsel %vm1283, %v1781, 0
          %v1799 = vsel %vm1283, %v1782, 0
          %v1802 = vsel %vm1283, %v1783, 0
          %v1805 = vsel %vm1283, %v1784, 0
          %v1808 = vsel %vm1283, %v1785, 0
          %v1811 = vsel %vm1283, %v1786, 0
          %v1814 = vsel %vm1398, %v1788, 0
          %1816 = vmatpush.bf16.msra.mxu0 0
          %1817 = vmatpush.bf16.msra.mxu0 0
          %1818 = vmatpush.bf16.msra.mxu0 0
          %1819 = vmatpush.bf16.msra.mxu0 0
          %1820 = vmatpush.bf16.msra.mxu0 0
          %1821 = vmatpush.bf16.msra.mxu0 0
          %1822 = vmatpush.bf16.msra.mxu0 0
          %1823 = vmatpush.bf16.msra.mxu0 %v1814
          %1824 = vmatmul.bf16.gmra.mxu0 %v1790
          %v1825 = vpop.f32.mrf.mxu0
          %v1826 = vadd.f32 0.0, %v1825
          %v1827 = vpop.f32.mrf.mxu0
          %v1828 = vadd.f32 0.0, %v1827
          %1829 = vmatmul.bf16.gmra.mxu0 %v1793
          %v1830 = vpop.f32.mrf.mxu0
          %v1831 = vadd.f32 0.0, %v1830
          %v1832 = vpop.f32.mrf.mxu0
          %v1833 = vadd.f32 0.0, %v1832
          %1834 = vmatmul.bf16.gmra.mxu0 %v1796
          %v1835 = vpop.f32.mrf.mxu0
          %v1836 = vadd.f32 0.0, %v1835
          %v1837 = vpop.f32.mrf.mxu0
          %v1838 = vadd.f32 0.0, %v1837
          %1839 = vmatmul.bf16.gmra.mxu0 %v1799
          %v1840 = vpop.f32.mrf.mxu0
          %v1841 = vadd.f32 0.0, %v1840
          %v1842 = vpop.f32.mrf.mxu0
          %v1843 = vadd.f32 0.0, %v1842
          %1844 = vmatmul.bf16.gmra.mxu0 %v1802
          %v1845 = vpop.f32.mrf.mxu0
          %v1846 = vadd.f32 0.0, %v1845
          %v1847 = vpop.f32.mrf.mxu0
          %v1848 = vadd.f32 0.0, %v1847
          %1849 = vmatmul.bf16.gmra.mxu0 %v1805
          %v1850 = vpop.f32.mrf.mxu0
          %v1851 = vadd.f32 0.0, %v1850
          %v1852 = vpop.f32.mrf.mxu0
          %v1853 = vadd.f32 0.0, %v1852
          %1854 = vmatmul.bf16.gmra.mxu0 %v1808
          %v1855 = vpop.f32.mrf.mxu0
          %v1856 = vadd.f32 0.0, %v1855
          %v1857 = vpop.f32.mrf.mxu0
          %v1858 = vadd.f32 0.0, %v1857
          %1859 = vmatmul.bf16.gmra.mxu0 %v1811
          %v1860 = vpop.f32.mrf.mxu0
          %v1861 = vadd.f32 0.0, %v1860
          %v1862 = vpop.f32.mrf.mxu0
          %v1863 = vadd.f32 0.0, %v1862
          %1864 = vdwg.mxu0
          %v1865 = vadd.f32 %v1747, %v1826
          %v1866 = vadd.f32 %v1748, %v1828
          %v1867 = vadd.f32 %v1749, %v1831
          %v1868 = vadd.f32 %v1750, %v1833
          %v1869 = vadd.f32 %v1751, %v1836
          %v1870 = vadd.f32 %v1752, %v1838
          %v1871 = vadd.f32 %v1753, %v1841
          %v1872 = vadd.f32 %v1754, %v1843
          %v1873 = vadd.f32 %v1755, %v1846
          %v1874 = vadd.f32 %v1756, %v1848
          %v1875 = vadd.f32 %v1757, %v1851
          %v1876 = vadd.f32 %v1758, %v1853
          %v1877 = vadd.f32 %v1759, %v1856
          %v1878 = vadd.f32 %v1760, %v1858
          %v1879 = vadd.f32 %v1761, %v1861
          %v1880 = vadd.f32 %v1762, %v1863
          %v1881 = vld [vmem:[%s1230] sm:$0x3]
          %v1882 = vld [vmem:[%s9] sm:$0x1]
          %v1884 = vperm.slane %v1882, 0
          %v1886 = vadd.f32 %v1865, %v1884
          %v1887 = vadd.f32 %v1866, %v1884
          %v1888 = vadd.f32 %v1867, %v1884
          %v1889 = vadd.f32 %v1868, %v1884
          %v1890 = vadd.f32 %v1869, %v1884
          %v1891 = vadd.f32 %v1870, %v1884
          %v1892 = vadd.f32 %v1871, %v1884
          %v1893 = vadd.f32 %v1872, %v1884
          %v1894 = vadd.f32 %v1873, %v1884
          %v1895 = vadd.f32 %v1874, %v1884
          %v1896 = vadd.f32 %v1875, %v1884
          %v1897 = vadd.f32 %v1876, %v1884
          %v1898 = vadd.f32 %v1877, %v1884
          %v1899 = vadd.f32 %v1878, %v1884
          %v1900 = vadd.f32 %v1879, %v1884
          %v1901 = vadd.f32 %v1880, %v1884
          %v1902 = vperm.slane %v1881, 0
          %v1903 = vsub.f32 %v1886, %v1902
          %v1904 = vsub.f32 %v1887, %v1902
          %v1905 = vsub.f32 %v1888, %v1902
          %v1906 = vsub.f32 %v1889, %v1902
          %v1907 = vsub.f32 %v1890, %v1902
          %v1908 = vsub.f32 %v1891, %v1902
          %v1909 = vsub.f32 %v1892, %v1902
          %v1910 = vsub.f32 %v1893, %v1902
          %v1911 = vsub.f32 %v1894, %v1902
          %v1912 = vsub.f32 %v1895, %v1902
          %v1913 = vsub.f32 %v1896, %v1902
          %v1914 = vsub.f32 %v1897, %v1902
          %v1915 = vsub.f32 %v1898, %v1902
          %v1916 = vsub.f32 %v1899, %v1902
          %v1917 = vsub.f32 %v1900, %v1902
          %v1918 = vsub.f32 %v1901, %v1902
          %v1919 = vperm.slane %v1881, 1
          %v1920 = vmul.f32 %v1903, %v1919
          %v1921 = vmul.f32 %v1904, %v1919
          %v1922 = vmul.f32 %v1905, %v1919
          %v1923 = vmul.f32 %v1906, %v1919
          %v1924 = vmul.f32 %v1907, %v1919
          %v1925 = vmul.f32 %v1908, %v1919
          %v1926 = vmul.f32 %v1909, %v1919
          %v1927 = vmul.f32 %v1910, %v1919
          %v1928 = vmul.f32 %v1911, %v1919
          %v1929 = vmul.f32 %v1912, %v1919
          %v1930 = vmul.f32 %v1913, %v1919
          %v1931 = vmul.f32 %v1914, %v1919
          %v1932 = vmul.f32 %v1915, %v1919
          %v1933 = vmul.f32 %v1916, %v1919
          %v1934 = vmul.f32 %v1917, %v1919
          %v1935 = vmul.f32 %v1918, %v1919
          %v1936 = vmax.f32 %v1920, 0.0
          %v1937 = vmax.f32 %v1921, 0.0
          %v1938 = vmax.f32 %v1922, 0.0
          %v1939 = vmax.f32 %v1923, 0.0
          %v1940 = vmax.f32 %v1924, 0.0
          %v1941 = vmax.f32 %v1925, 0.0
          %v1942 = vmax.f32 %v1926, 0.0
          %v1943 = vmax.f32 %v1927, 0.0
          %v1944 = vmax.f32 %v1928, 0.0
          %v1945 = vmax.f32 %v1929, 0.0
          %v1946 = vmax.f32 %v1930, 0.0
          %v1947 = vmax.f32 %v1931, 0.0
          %v1948 = vmax.f32 %v1932, 0.0
          %v1949 = vmax.f32 %v1933, 0.0
          %v1950 = vmax.f32 %v1934, 0.0
          %v1951 = vmax.f32 %v1935, 0.0
          %1952 = vst.msk [vmem:[#allocation3 + $0x8] sm:$0xff] %vm1286, %v1936
          %1953 = vst.msk [vmem:[#allocation3 + $0x10] sm:$0xff] %vm1286, %v1937
          %1954 = vst.msk [vmem:[#allocation3 + $0x18] sm:$0xff] %vm1286, %v1938
          %1955 = vst.msk [vmem:[#allocation3 + $0x20] sm:$0xff] %vm1286, %v1939
          %1956 = vst.msk [vmem:[#allocation3 + $0x28] sm:$0xff] %vm1286, %v1940
          %1957 = vst.msk [vmem:[#allocation3 + $0x30] sm:$0xff] %vm1286, %v1941
          %1958 = vst.msk [vmem:[#allocation3 + $0x38] sm:$0xff] %vm1286, %v1942
          %1959 = vst.msk [vmem:[#allocation3 + $0x40] sm:$0xff] %vm1286, %v1943
          %1960 = vst.msk [vmem:[#allocation3 + $0x48] sm:$0xff] %vm1286, %v1944
          %1961 = vst.msk [vmem:[#allocation3 + $0x50] sm:$0xff] %vm1286, %v1945
          %1962 = vst.msk [vmem:[#allocation3 + $0x58] sm:$0xff] %vm1286, %v1946
          %1963 = vst.msk [vmem:[#allocation3 + $0x60] sm:$0xff] %vm1286, %v1947
          %1964 = vst.msk [vmem:[#allocation3 + $0x68] sm:$0xff] %vm1286, %v1948
          %1965 = vst.msk [vmem:[#allocation3 + $0x70] sm:$0xff] %vm1286, %v1949
          %1966 = vst.msk [vmem:[#allocation3 + $0x78] sm:$0xff] %vm1286, %v1950
          %1967 = vst.msk [vmem:[#allocation3 + $0x80] sm:$0xff] %vm1286, %v1951
          %v1968 = vld [vmem:[#allocation3 + $0x7] sm:$0xff]
          %v1969 = vld [vmem:[#allocation3 + $0xf] sm:$0xff]
          %v1970 = vld [vmem:[#allocation3 + $0x17] sm:$0xff]
          %v1971 = vld [vmem:[#allocation3 + $0x1f] sm:$0xff]
          %v1972 = vld [vmem:[#allocation3 + $0x27] sm:$0xff]
          %v1973 = vld [vmem:[#allocation3 + $0x2f] sm:$0xff]
          %v1974 = vld [vmem:[#allocation3 + $0x37] sm:$0xff]
          %v1975 = vld [vmem:[#allocation3 + $0x3f] sm:$0xff]
          %v1976 = vld [vmem:[#allocation3 + $0x47] sm:$0xff]
          %v1977 = vld [vmem:[#allocation3 + $0x4f] sm:$0xff]
          %v1978 = vld [vmem:[#allocation3 + $0x57] sm:$0xff]
          %v1979 = vld [vmem:[#allocation3 + $0x5f] sm:$0xff]
          %v1980 = vld [vmem:[#allocation3 + $0x67] sm:$0xff]
          %v1981 = vld [vmem:[#allocation3 + $0x6f] sm:$0xff]
          %v1982 = vld [vmem:[#allocation3 + $0x77] sm:$0xff]
          %v1983 = vld [vmem:[#allocation3 + $0x7f] sm:$0xff]
          %v1984 = vpack.c.bf16 %v1969, %v1968
          %v1985 = vpack.c.bf16 %v1971, %v1970
          %v1986 = vpack.c.bf16 %v1973, %v1972
          %v1987 = vpack.c.bf16 %v1975, %v1974
          %v1988 = vpack.c.bf16 %v1977, %v1976
          %v1989 = vpack.c.bf16 %v1979, %v1978
          %v1990 = vpack.c.bf16 %v1981, %v1980
          %v1991 = vpack.c.bf16 %v1983, %v1982
          %v1992 = vld [vmem:[%s11] sm:$0xf]
          %v1993 = vld [vmem:[%s11 + $0x4] sm:$0xf]
          %v1994 = vld [vmem:[#allocation3 + $0x8] sm:$0xff]
          %v1995 = vld [vmem:[#allocation3 + $0x10] sm:$0xff]
          %v1996 = vld [vmem:[#allocation3 + $0x18] sm:$0xff]
          %v1997 = vld [vmem:[#allocation3 + $0x20] sm:$0xff]
          %v1998 = vld [vmem:[#allocation3 + $0x28] sm:$0xff]
          %v1999 = vld [vmem:[#allocation3 + $0x30] sm:$0xff]
          %v2000 = vld [vmem:[#allocation3 + $0x38] sm:$0xff]
          %v2001 = vld [vmem:[#allocation3 + $0x40] sm:$0xff]
          %v2002 = vld [vmem:[#allocation3 + $0x48] sm:$0xff]
          %v2003 = vld [vmem:[#allocation3 + $0x50] sm:$0xff]
          %v2004 = vld [vmem:[#allocation3 + $0x58] sm:$0xff]
          %v2005 = vld [vmem:[#allocation3 + $0x60] sm:$0xff]
          %v2006 = vld [vmem:[#allocation3 + $0x68] sm:$0xff]
          %v2007 = vld [vmem:[#allocation3 + $0x70] sm:$0xff]
          %v2008 = vld [vmem:[#allocation3 + $0x78] sm:$0xff]
          %v2009 = vld [vmem:[#allocation3 + $0x80] sm:$0xff]
          %v2010 = vpack.c.bf16 %v1995, %v1994
          %v2011 = vpack.c.bf16 %v1997, %v1996
          %v2012 = vpack.c.bf16 %v1999, %v1998
          %v2013 = vpack.c.bf16 %v2001, %v2000
          %v2014 = vpack.c.bf16 %v2003, %v2002
          %v2015 = vpack.c.bf16 %v2005, %v2004
          %v2016 = vpack.c.bf16 %v2007, %v2006
          %v2017 = vpack.c.bf16 %v2009, %v2008
          %s2018 = scalar_lea.vmem %s11, 8
          %v2019 = vld [vmem:[%s2018] sm:$0xf]
          %v2020 = vld [vmem:[%s2018 + $0x4] sm:$0xf]
          %v2023 = vunpack.c.l.b16 %v2019
          %v2024 = vunpack.c.l.b16 %v2020
          %v2025 = vpack.c.b16 %v2024, %v2023
          %v2028 = vsel %vm1286, %v2010, 0
          %v2031 = vsel %vm1286, %v2011, 0
          %v2034 = vsel %vm1286, %v2012, 0
          %v2037 = vsel %vm1286, %v2013, 0
          %v2040 = vsel %vm1286, %v2014, 0
          %v2043 = vsel %vm1286, %v2015, 0
          %v2046 = vsel %vm1286, %v2016, 0
          %v2049 = vsel %vm1286, %v2017, 0
          %2051 = vmatpush.bf16.msra.mxu0 0
          %2052 = vmatpush.bf16.msra.mxu0 0
          %2053 = vmatpush.bf16.msra.mxu0 0
          %2054 = vmatpush.bf16.msra.mxu0 0
          %2055 = vmatpush.bf16.msra.mxu0 0
          %2056 = vmatpush.bf16.msra.mxu0 0
          %2057 = vmatpush.bf16.msra.mxu0 0
          %2058 = vmatpush.bf16.msra.mxu0 %v2025
          %2059 = vmatmul.bf16.gmra.mxu0 %v2028
          %v2060 = vpop.f32.mrf.mxu0
          %v2061 = vadd.f32 0.0, %v2060
          %v2062 = vpop.f32.mrf.mxu0
          %v2063 = vadd.f32 0.0, %v2062
          %2064 = vmatmul.bf16.gmra.mxu0 %v2031
          %v2065 = vpop.f32.mrf.mxu0
          %v2066 = vadd.f32 0.0, %v2065
          %v2067 = vpop.f32.mrf.mxu0
          %v2068 = vadd.f32 0.0, %v2067
          %2069 = vmatmul.bf16.gmra.mxu0 %v2034
          %v2070 = vpop.f32.mrf.mxu0
          %v2071 = vadd.f32 0.0, %v2070
          %v2072 = vpop.f32.mrf.mxu0
          %v2073 = vadd.f32 0.0, %v2072
          %2074 = vmatmul.bf16.gmra.mxu0 %v2037
          %v2075 = vpop.f32.mrf.mxu0
          %v2076 = vadd.f32 0.0, %v2075
          %v2077 = vpop.f32.mrf.mxu0
          %v2078 = vadd.f32 0.0, %v2077
          %2079 = vmatmul.bf16.gmra.mxu0 %v2040
          %v2080 = vpop.f32.mrf.mxu0
          %v2081 = vadd.f32 0.0, %v2080
          %v2082 = vpop.f32.mrf.mxu0
          %v2083 = vadd.f32 0.0, %v2082
          %2084 = vmatmul.bf16.gmra.mxu0 %v2043
          %v2085 = vpop.f32.mrf.mxu0
          %v2086 = vadd.f32 0.0, %v2085
          %v2087 = vpop.f32.mrf.mxu0
          %v2088 = vadd.f32 0.0, %v2087
          %2089 = vmatmul.bf16.gmra.mxu0 %v2046
          %v2090 = vpop.f32.mrf.mxu0
          %v2091 = vadd.f32 0.0, %v2090
          %v2092 = vpop.f32.mrf.mxu0
          %v2093 = vadd.f32 0.0, %v2092
          %2094 = vmatmul.bf16.gmra.mxu0 %v2049
          %v2095 = vpop.f32.mrf.mxu0
          %v2096 = vadd.f32 0.0, %v2095
          %v2097 = vpop.f32.mrf.mxu0
          %v2098 = vadd.f32 0.0, %v2097
          %2099 = vdwg.mxu0
          %v2102 = vunpack.c.l.b16 %v1992
          %v2103 = vunpack.c.l.b16 %v1993
          %v2104 = vpack.c.b16 %v2103, %v2102
          %v2107 = vsel %vm1286, %v1984, 0
          %v2110 = vsel %vm1286, %v1985, 0
          %v2113 = vsel %vm1286, %v1986, 0
          %v2116 = vsel %vm1286, %v1987, 0
          %v2119 = vsel %vm1286, %v1988, 0
          %v2122 = vsel %vm1286, %v1989, 0
          %v2125 = vsel %vm1286, %v1990, 0
          %v2128 = vsel %vm1286, %v1991, 0
          %2130 = vmatpush.bf16.msra.mxu0 0
          %2131 = vmatpush.bf16.msra.mxu0 0
          %2132 = vmatpush.bf16.msra.mxu0 0
          %2133 = vmatpush.bf16.msra.mxu0 0
          %2134 = vmatpush.bf16.msra.mxu0 0
          %2135 = vmatpush.bf16.msra.mxu0 0
          %2136 = vmatpush.bf16.msra.mxu0 0
          %2137 = vmatpush.bf16.msra.mxu0 %v2104
          %2138 = vmatmul.bf16.gmra.mxu0 %v2107
          %v2139 = vpop.f32.mrf.mxu0
          %v2140 = vadd.f32 %v2061, %v2139
          %v2141 = vpop.f32.mrf.mxu0
          %v2142 = vadd.f32 %v2063, %v2141
          %2143 = vmatmul.bf16.gmra.mxu0 %v2110
          %v2144 = vpop.f32.mrf.mxu0
          %v2145 = vadd.f32 %v2066, %v2144
          %v2146 = vpop.f32.mrf.mxu0
          %v2147 = vadd.f32 %v2068, %v2146
          %2148 = vmatmul.bf16.gmra.mxu0 %v2113
          %v2149 = vpop.f32.mrf.mxu0
          %v2150 = vadd.f32 %v2071, %v2149
          %v2151 = vpop.f32.mrf.mxu0
          %v2152 = vadd.f32 %v2073, %v2151
          %2153 = vmatmul.bf16.gmra.mxu0 %v2116
          %v2154 = vpop.f32.mrf.mxu0
          %v2155 = vadd.f32 %v2076, %v2154
          %v2156 = vpop.f32.mrf.mxu0
          %v2157 = vadd.f32 %v2078, %v2156
          %2158 = vmatmul.bf16.gmra.mxu0 %v2119
          %v2159 = vpop.f32.mrf.mxu0
          %v2160 = vadd.f32 %v2081, %v2159
          %v2161 = vpop.f32.mrf.mxu0
          %v2162 = vadd.f32 %v2083, %v2161
          %2163 = vmatmul.bf16.gmra.mxu0 %v2122
          %v2164 = vpop.f32.mrf.mxu0
          %v2165 = vadd.f32 %v2086, %v2164
          %v2166 = vpop.f32.mrf.mxu0
          %v2167 = vadd.f32 %v2088, %v2166
          %2168 = vmatmul.bf16.gmra.mxu0 %v2125
          %v2169 = vpop.f32.mrf.mxu0
          %v2170 = vadd.f32 %v2091, %v2169
          %v2171 = vpop.f32.mrf.mxu0
          %v2172 = vadd.f32 %v2093, %v2171
          %2173 = vmatmul.bf16.gmra.mxu0 %v2128
          %v2174 = vpop.f32.mrf.mxu0
          %v2175 = vadd.f32 %v2096, %v2174
          %v2176 = vpop.f32.mrf.mxu0
          %v2177 = vadd.f32 %v2098, %v2176
          %2178 = vdwg.mxu0
          %v2179 = vld [vmem:[#allocation3 + $0x9] sm:$0xff]
          %v2180 = vld [vmem:[#allocation3 + $0x11] sm:$0xff]
          %v2181 = vld [vmem:[#allocation3 + $0x19] sm:$0xff]
          %v2182 = vld [vmem:[#allocation3 + $0x21] sm:$0xff]
          %v2183 = vld [vmem:[#allocation3 + $0x29] sm:$0xff]
          %v2184 = vld [vmem:[#allocation3 + $0x31] sm:$0xff]
          %v2185 = vld [vmem:[#allocation3 + $0x39] sm:$0xff]
          %v2186 = vld [vmem:[#allocation3 + $0x41] sm:$0xff]
          %v2187 = vld [vmem:[#allocation3 + $0x49] sm:$0xff]
          %v2188 = vld [vmem:[#allocation3 + $0x51] sm:$0xff]
          %v2189 = vld [vmem:[#allocation3 + $0x59] sm:$0xff]
          %v2190 = vld [vmem:[#allocation3 + $0x61] sm:$0xff]
          %v2191 = vld [vmem:[#allocation3 + $0x69] sm:$0xff]
          %v2192 = vld [vmem:[#allocation3 + $0x71] sm:$0xff]
          %v2193 = vld [vmem:[#allocation3 + $0x79] sm:$0xff]
          %v2194 = vld [vmem:[#allocation3 + $0x81] sm:$0xff]
          %v2195 = vpack.c.bf16 %v2180, %v2179
          %v2196 = vpack.c.bf16 %v2182, %v2181
          %v2197 = vpack.c.bf16 %v2184, %v2183
          %v2198 = vpack.c.bf16 %v2186, %v2185
          %v2199 = vpack.c.bf16 %v2188, %v2187
          %v2200 = vpack.c.bf16 %v2190, %v2189
          %v2201 = vpack.c.bf16 %v2192, %v2191
          %v2202 = vpack.c.bf16 %v2194, %v2193
          %s2203 = scalar_lea.vmem %s11, 16
          %v2204 = vld [vmem:[%s2203] sm:$0xf]
          %v2205 = vld [vmem:[%s2203 + $0x4] sm:$0xf]
          %v2208 = vunpack.c.l.b16 %v2204
          %v2209 = vunpack.c.l.b16 %v2205
          %v2210 = vpack.c.b16 %v2209, %v2208
          %v2213 = vsel %vm1286, %v2195, 0
          %v2216 = vsel %vm1286, %v2196, 0
          %v2219 = vsel %vm1286, %v2197, 0
          %v2222 = vsel %vm1286, %v2198, 0
          %v2225 = vsel %vm1286, %v2199, 0
          %v2228 = vsel %vm1286, %v2200, 0
          %v2231 = vsel %vm1286, %v2201, 0
          %v2234 = vsel %vm1286, %v2202, 0
          %2236 = vmatpush.bf16.msra.mxu0 0
          %2237 = vmatpush.bf16.msra.mxu0 0
          %2238 = vmatpush.bf16.msra.mxu0 0
          %2239 = vmatpush.bf16.msra.mxu0 0
          %2240 = vmatpush.bf16.msra.mxu0 0
          %2241 = vmatpush.bf16.msra.mxu0 0
          %2242 = vmatpush.bf16.msra.mxu0 0
          %2243 = vmatpush.bf16.msra.mxu0 %v2210
          %2244 = vmatmul.bf16.gmra.mxu0 %v2213
          %v2245 = vpop.f32.mrf.mxu0
          %v2246 = vadd.f32 0.0, %v2245
          %v2247 = vpop.f32.mrf.mxu0
          %v2248 = vadd.f32 0.0, %v2247
          %2249 = vmatmul.bf16.gmra.mxu0 %v2216
          %v2250 = vpop.f32.mrf.mxu0
          %v2251 = vadd.f32 0.0, %v2250
          %v2252 = vpop.f32.mrf.mxu0
          %v2253 = vadd.f32 0.0, %v2252
          %2254 = vmatmul.bf16.gmra.mxu0 %v2219
          %v2255 = vpop.f32.mrf.mxu0
          %v2256 = vadd.f32 0.0, %v2255
          %v2257 = vpop.f32.mrf.mxu0
          %v2258 = vadd.f32 0.0, %v2257
          %2259 = vmatmul.bf16.gmra.mxu0 %v2222
          %v2260 = vpop.f32.mrf.mxu0
          %v2261 = vadd.f32 0.0, %v2260
          %v2262 = vpop.f32.mrf.mxu0
          %v2263 = vadd.f32 0.0, %v2262
          %2264 = vmatmul.bf16.gmra.mxu0 %v2225
          %v2265 = vpop.f32.mrf.mxu0
          %v2266 = vadd.f32 0.0, %v2265
          %v2267 = vpop.f32.mrf.mxu0
          %v2268 = vadd.f32 0.0, %v2267
          %2269 = vmatmul.bf16.gmra.mxu0 %v2228
          %v2270 = vpop.f32.mrf.mxu0
          %v2271 = vadd.f32 0.0, %v2270
          %v2272 = vpop.f32.mrf.mxu0
          %v2273 = vadd.f32 0.0, %v2272
          %2274 = vmatmul.bf16.gmra.mxu0 %v2231
          %v2275 = vpop.f32.mrf.mxu0
          %v2276 = vadd.f32 0.0, %v2275
          %v2277 = vpop.f32.mrf.mxu0
          %v2278 = vadd.f32 0.0, %v2277
          %2279 = vmatmul.bf16.gmra.mxu0 %v2234
          %v2280 = vpop.f32.mrf.mxu0
          %v2281 = vadd.f32 0.0, %v2280
          %v2282 = vpop.f32.mrf.mxu0
          %v2283 = vadd.f32 0.0, %v2282
          %2284 = vdwg.mxu0
          %v2285 = vadd.f32 %v2140, %v2246
          %v2286 = vadd.f32 %v2142, %v2248
          %v2287 = vadd.f32 %v2145, %v2251
          %v2288 = vadd.f32 %v2147, %v2253
          %v2289 = vadd.f32 %v2150, %v2256
          %v2290 = vadd.f32 %v2152, %v2258
          %v2291 = vadd.f32 %v2155, %v2261
          %v2292 = vadd.f32 %v2157, %v2263
          %v2293 = vadd.f32 %v2160, %v2266
          %v2294 = vadd.f32 %v2162, %v2268
          %v2295 = vadd.f32 %v2165, %v2271
          %v2296 = vadd.f32 %v2167, %v2273
          %v2297 = vadd.f32 %v2170, %v2276
          %v2298 = vadd.f32 %v2172, %v2278
          %v2299 = vadd.f32 %v2175, %v2281
          %v2300 = vadd.f32 %v2177, %v2283
          %v2301 = vld [vmem:[%s13] sm:$0x1]
          %v2303 = vperm.slane %v2301, 0
          %v2305 = vadd.f32 %v2285, %v2303
          %v2306 = vadd.f32 %v2286, %v2303
          %v2307 = vadd.f32 %v2287, %v2303
          %v2308 = vadd.f32 %v2288, %v2303
          %v2309 = vadd.f32 %v2289, %v2303
          %v2310 = vadd.f32 %v2290, %v2303
          %v2311 = vadd.f32 %v2291, %v2303
          %v2312 = vadd.f32 %v2292, %v2303
          %v2313 = vadd.f32 %v2293, %v2303
          %v2314 = vadd.f32 %v2294, %v2303
          %v2315 = vadd.f32 %v2295, %v2303
          %v2316 = vadd.f32 %v2296, %v2303
          %v2317 = vadd.f32 %v2297, %v2303
          %v2318 = vadd.f32 %v2298, %v2303
          %v2319 = vadd.f32 %v2299, %v2303
          %v2320 = vadd.f32 %v2300, %v2303
          %v2321 = vmax.f32 %v2305, 0.0
          %v2322 = vmax.f32 %v2306, 0.0
          %v2323 = vmax.f32 %v2307, 0.0
          %v2324 = vmax.f32 %v2308, 0.0
          %v2325 = vmax.f32 %v2309, 0.0
          %v2326 = vmax.f32 %v2310, 0.0
          %v2327 = vmax.f32 %v2311, 0.0
          %v2328 = vmax.f32 %v2312, 0.0
          %v2329 = vmax.f32 %v2313, 0.0
          %v2330 = vmax.f32 %v2314, 0.0
          %v2331 = vmax.f32 %v2315, 0.0
          %v2332 = vmax.f32 %v2316, 0.0
          %v2333 = vmax.f32 %v2317, 0.0
          %v2334 = vmax.f32 %v2318, 0.0
          %v2335 = vmax.f32 %v2319, 0.0
          %v2336 = vmax.f32 %v2320, 0.0
          %2337 = vst.msk [vmem:[#allocation4 + $0x8] sm:$0xff] %vm1286, %v2321
          %2338 = vst.msk [vmem:[#allocation4 + $0x10] sm:$0xff] %vm1286, %v2322
          %2339 = vst.msk [vmem:[#allocation4 + $0x18] sm:$0xff] %vm1286, %v2323
          %2340 = vst.msk [vmem:[#allocation4 + $0x20] sm:$0xff] %vm1286, %v2324
          %2341 = vst.msk [vmem:[#allocation4 + $0x28] sm:$0xff] %vm1286, %v2325
          %2342 = vst.msk [vmem:[#allocation4 + $0x30] sm:$0xff] %vm1286, %v2326
          %2343 = vst.msk [vmem:[#allocation4 + $0x38] sm:$0xff] %vm1286, %v2327
          %2344 = vst.msk [vmem:[#allocation4 + $0x40] sm:$0xff] %vm1286, %v2328
          %2345 = vst.msk [vmem:[#allocation4 + $0x48] sm:$0xff] %vm1286, %v2329
          %2346 = vst.msk [vmem:[#allocation4 + $0x50] sm:$0xff] %vm1286, %v2330
          %2347 = vst.msk [vmem:[#allocation4 + $0x58] sm:$0xff] %vm1286, %v2331
          %2348 = vst.msk [vmem:[#allocation4 + $0x60] sm:$0xff] %vm1286, %v2332
          %2349 = vst.msk [vmem:[#allocation4 + $0x68] sm:$0xff] %vm1286, %v2333
          %2350 = vst.msk [vmem:[#allocation4 + $0x70] sm:$0xff] %vm1286, %v2334
          %2351 = vst.msk [vmem:[#allocation4 + $0x78] sm:$0xff] %vm1286, %v2335
          %2352 = vst.msk [vmem:[#allocation4 + $0x80] sm:$0xff] %vm1286, %v2336
          %v2353 = vld [vmem:[#allocation4 + $0x6] sm:$0xff]
          %v2354 = vld [vmem:[#allocation4 + $0xe] sm:$0xff]
          %v2355 = vld [vmem:[#allocation4 + $0x16] sm:$0xff]
          %v2356 = vld [vmem:[#allocation4 + $0x1e] sm:$0xff]
          %v2357 = vld [vmem:[#allocation4 + $0x26] sm:$0xff]
          %v2358 = vld [vmem:[#allocation4 + $0x2e] sm:$0xff]
          %v2359 = vld [vmem:[#allocation4 + $0x36] sm:$0xff]
          %v2360 = vld [vmem:[#allocation4 + $0x3e] sm:$0xff]
          %v2361 = vld [vmem:[#allocation4 + $0x46] sm:$0xff]
          %v2362 = vld [vmem:[#allocation4 + $0x4e] sm:$0xff]
          %v2363 = vld [vmem:[#allocation4 + $0x56] sm:$0xff]
          %v2364 = vld [vmem:[#allocation4 + $0x5e] sm:$0xff]
          %v2365 = vld [vmem:[#allocation4 + $0x66] sm:$0xff]
          %v2366 = vld [vmem:[#allocation4 + $0x6e] sm:$0xff]
          %v2367 = vld [vmem:[#allocation4 + $0x76] sm:$0xff]
          %v2368 = vld [vmem:[#allocation4 + $0x7e] sm:$0xff]
          %v2369 = vpack.c.bf16 %v2354, %v2353
          %v2370 = vpack.c.bf16 %v2356, %v2355
          %v2371 = vpack.c.bf16 %v2358, %v2357
          %v2372 = vpack.c.bf16 %v2360, %v2359
          %v2373 = vpack.c.bf16 %v2362, %v2361
          %v2374 = vpack.c.bf16 %v2364, %v2363
          %v2375 = vpack.c.bf16 %v2366, %v2365
          %v2376 = vpack.c.bf16 %v2368, %v2367
          %v2377 = vld [vmem:[%s15] sm:$0xf]
          %v2378 = vld [vmem:[%s15 + $0x4] sm:$0xf]
          %v2379 = vld [vmem:[#allocation4 + $0x8] sm:$0xff]
          %v2380 = vld [vmem:[#allocation4 + $0x10] sm:$0xff]
          %v2381 = vld [vmem:[#allocation4 + $0x18] sm:$0xff]
          %v2382 = vld [vmem:[#allocation4 + $0x20] sm:$0xff]
          %v2383 = vld [vmem:[#allocation4 + $0x28] sm:$0xff]
          %v2384 = vld [vmem:[#allocation4 + $0x30] sm:$0xff]
          %v2385 = vld [vmem:[#allocation4 + $0x38] sm:$0xff]
          %v2386 = vld [vmem:[#allocation4 + $0x40] sm:$0xff]
          %v2387 = vld [vmem:[#allocation4 + $0x48] sm:$0xff]
          %v2388 = vld [vmem:[#allocation4 + $0x50] sm:$0xff]
          %v2389 = vld [vmem:[#allocation4 + $0x58] sm:$0xff]
          %v2390 = vld [vmem:[#allocation4 + $0x60] sm:$0xff]
          %v2391 = vld [vmem:[#allocation4 + $0x68] sm:$0xff]
          %v2392 = vld [vmem:[#allocation4 + $0x70] sm:$0xff]
          %v2393 = vld [vmem:[#allocation4 + $0x78] sm:$0xff]
          %v2394 = vld [vmem:[#allocation4 + $0x80] sm:$0xff]
          %v2395 = vpack.c.bf16 %v2380, %v2379
          %v2396 = vpack.c.bf16 %v2382, %v2381
          %v2397 = vpack.c.bf16 %v2384, %v2383
          %v2398 = vpack.c.bf16 %v2386, %v2385
          %v2399 = vpack.c.bf16 %v2388, %v2387
          %v2400 = vpack.c.bf16 %v2390, %v2389
          %v2401 = vpack.c.bf16 %v2392, %v2391
          %v2402 = vpack.c.bf16 %v2394, %v2393
          %s2403 = scalar_lea.vmem %s15, 8
          %v2404 = vld [vmem:[%s2403] sm:$0xf]
          %v2405 = vld [vmem:[%s2403 + $0x4] sm:$0xf]
          %v2408 = vunpack.c.l.b16 %v2404
          %v2409 = vunpack.c.l.b16 %v2405
          %v2410 = vpack.c.b16 %v2409, %v2408
          %v2413 = vsel %vm1286, %v2395, 0
          %v2416 = vsel %vm1286, %v2396, 0
          %v2419 = vsel %vm1286, %v2397, 0
          %v2422 = vsel %vm1286, %v2398, 0
          %v2425 = vsel %vm1286, %v2399, 0
          %v2428 = vsel %vm1286, %v2400, 0
          %v2431 = vsel %vm1286, %v2401, 0
          %v2434 = vsel %vm1286, %v2402, 0
          %2436 = vmatpush.bf16.msra.mxu0 0
          %2437 = vmatpush.bf16.msra.mxu0 0
          %2438 = vmatpush.bf16.msra.mxu0 0
          %2439 = vmatpush.bf16.msra.mxu0 0
          %2440 = vmatpush.bf16.msra.mxu0 0
          %2441 = vmatpush.bf16.msra.mxu0 0
          %2442 = vmatpush.bf16.msra.mxu0 0
          %2443 = vmatpush.bf16.msra.mxu0 %v2410
          %2444 = vmatmul.bf16.gmra.mxu0 %v2413
          %v2445 = vpop.f32.mrf.mxu0
          %v2446 = vadd.f32 0.0, %v2445
          %v2447 = vpop.f32.mrf.mxu0
          %v2448 = vadd.f32 0.0, %v2447
          %2449 = vmatmul.bf16.gmra.mxu0 %v2416
          %v2450 = vpop.f32.mrf.mxu0
          %v2451 = vadd.f32 0.0, %v2450
          %v2452 = vpop.f32.mrf.mxu0
          %v2453 = vadd.f32 0.0, %v2452
          %2454 = vmatmul.bf16.gmra.mxu0 %v2419
          %v2455 = vpop.f32.mrf.mxu0
          %v2456 = vadd.f32 0.0, %v2455
          %v2457 = vpop.f32.mrf.mxu0
          %v2458 = vadd.f32 0.0, %v2457
          %2459 = vmatmul.bf16.gmra.mxu0 %v2422
          %v2460 = vpop.f32.mrf.mxu0
          %v2461 = vadd.f32 0.0, %v2460
          %v2462 = vpop.f32.mrf.mxu0
          %v2463 = vadd.f32 0.0, %v2462
          %2464 = vmatmul.bf16.gmra.mxu0 %v2425
          %v2465 = vpop.f32.mrf.mxu0
          %v2466 = vadd.f32 0.0, %v2465
          %v2467 = vpop.f32.mrf.mxu0
          %v2468 = vadd.f32 0.0, %v2467
          %2469 = vmatmul.bf16.gmra.mxu0 %v2428
          %v2470 = vpop.f32.mrf.mxu0
          %v2471 = vadd.f32 0.0, %v2470
          %v2472 = vpop.f32.mrf.mxu0
          %v2473 = vadd.f32 0.0, %v2472
          %2474 = vmatmul.bf16.gmra.mxu0 %v2431
          %v2475 = vpop.f32.mrf.mxu0
          %v2476 = vadd.f32 0.0, %v2475
          %v2477 = vpop.f32.mrf.mxu0
          %v2478 = vadd.f32 0.0, %v2477
          %2479 = vmatmul.bf16.gmra.mxu0 %v2434
          %v2480 = vpop.f32.mrf.mxu0
          %v2481 = vadd.f32 0.0, %v2480
          %v2482 = vpop.f32.mrf.mxu0
          %v2483 = vadd.f32 0.0, %v2482
          %2484 = vdwg.mxu0
          %v2487 = vunpack.c.l.b16 %v2377
          %v2488 = vunpack.c.l.b16 %v2378
          %v2489 = vpack.c.b16 %v2488, %v2487
          %v2492 = vsel %vm1286, %v2369, 0
          %v2495 = vsel %vm1286, %v2370, 0
          %v2498 = vsel %vm1286, %v2371, 0
          %v2501 = vsel %vm1286, %v2372, 0
          %v2504 = vsel %vm1286, %v2373, 0
          %v2507 = vsel %vm1286, %v2374, 0
          %v2510 = vsel %vm1286, %v2375, 0
          %v2513 = vsel %vm1286, %v2376, 0
          %2515 = vmatpush.bf16.msra.mxu0 0
          %2516 = vmatpush.bf16.msra.mxu0 0
          %2517 = vmatpush.bf16.msra.mxu0 0
          %2518 = vmatpush.bf16.msra.mxu0 0
          %2519 = vmatpush.bf16.msra.mxu0 0
          %2520 = vmatpush.bf16.msra.mxu0 0
          %2521 = vmatpush.bf16.msra.mxu0 0
          %2522 = vmatpush.bf16.msra.mxu0 %v2489
          %2523 = vmatmul.bf16.gmra.mxu0 %v2492
          %v2524 = vpop.f32.mrf.mxu0
          %v2525 = vadd.f32 %v2446, %v2524
          %v2526 = vpop.f32.mrf.mxu0
          %v2527 = vadd.f32 %v2448, %v2526
          %2528 = vmatmul.bf16.gmra.mxu0 %v2495
          %v2529 = vpop.f32.mrf.mxu0
          %v2530 = vadd.f32 %v2451, %v2529
          %v2531 = vpop.f32.mrf.mxu0
          %v2532 = vadd.f32 %v2453, %v2531
          %2533 = vmatmul.bf16.gmra.mxu0 %v2498
          %v2534 = vpop.f32.mrf.mxu0
          %v2535 = vadd.f32 %v2456, %v2534
          %v2536 = vpop.f32.mrf.mxu0
          %v2537 = vadd.f32 %v2458, %v2536
          %2538 = vmatmul.bf16.gmra.mxu0 %v2501
          %v2539 = vpop.f32.mrf.mxu0
          %v2540 = vadd.f32 %v2461, %v2539
          %v2541 = vpop.f32.mrf.mxu0
          %v2542 = vadd.f32 %v2463, %v2541
          %2543 = vmatmul.bf16.gmra.mxu0 %v2504
          %v2544 = vpop.f32.mrf.mxu0
          %v2545 = vadd.f32 %v2466, %v2544
          %v2546 = vpop.f32.mrf.mxu0
          %v2547 = vadd.f32 %v2468, %v2546
          %2548 = vmatmul.bf16.gmra.mxu0 %v2507
          %v2549 = vpop.f32.mrf.mxu0
          %v2550 = vadd.f32 %v2471, %v2549
          %v2551 = vpop.f32.mrf.mxu0
          %v2552 = vadd.f32 %v2473, %v2551
          %2553 = vmatmul.bf16.gmra.mxu0 %v2510
          %v2554 = vpop.f32.mrf.mxu0
          %v2555 = vadd.f32 %v2476, %v2554
          %v2556 = vpop.f32.mrf.mxu0
          %v2557 = vadd.f32 %v2478, %v2556
          %2558 = vmatmul.bf16.gmra.mxu0 %v2513
          %v2559 = vpop.f32.mrf.mxu0
          %v2560 = vadd.f32 %v2481, %v2559
          %v2561 = vpop.f32.mrf.mxu0
          %v2562 = vadd.f32 %v2483, %v2561
          %2563 = vdwg.mxu0
          %v2564 = vld [vmem:[#allocation4 + $0xa] sm:$0xff]
          %v2565 = vld [vmem:[#allocation4 + $0x12] sm:$0xff]
          %v2566 = vld [vmem:[#allocation4 + $0x1a] sm:$0xff]
          %v2567 = vld [vmem:[#allocation4 + $0x22] sm:$0xff]
          %v2568 = vld [vmem:[#allocation4 + $0x2a] sm:$0xff]
          %v2569 = vld [vmem:[#allocation4 + $0x32] sm:$0xff]
          %v2570 = vld [vmem:[#allocation4 + $0x3a] sm:$0xff]
          %v2571 = vld [vmem:[#allocation4 + $0x42] sm:$0xff]
          %v2572 = vld [vmem:[#allocation4 + $0x4a] sm:$0xff]
          %v2573 = vld [vmem:[#allocation4 + $0x52] sm:$0xff]
          %v2574 = vld [vmem:[#allocation4 + $0x5a] sm:$0xff]
          %v2575 = vld [vmem:[#allocation4 + $0x62] sm:$0xff]
          %v2576 = vld [vmem:[#allocation4 + $0x6a] sm:$0xff]
          %v2577 = vld [vmem:[#allocation4 + $0x72] sm:$0xff]
          %v2578 = vld [vmem:[#allocation4 + $0x7a] sm:$0xff]
          %v2579 = vld [vmem:[#allocation4 + $0x82] sm:$0xff]
          %v2580 = vpack.c.bf16 %v2565, %v2564
          %v2581 = vpack.c.bf16 %v2567, %v2566
          %v2582 = vpack.c.bf16 %v2569, %v2568
          %v2583 = vpack.c.bf16 %v2571, %v2570
          %v2584 = vpack.c.bf16 %v2573, %v2572
          %v2585 = vpack.c.bf16 %v2575, %v2574
          %v2586 = vpack.c.bf16 %v2577, %v2576
          %v2587 = vpack.c.bf16 %v2579, %v2578
          %s2588 = scalar_lea.vmem %s15, 16
          %v2589 = vld [vmem:[%s2588] sm:$0xf]
          %v2590 = vld [vmem:[%s2588 + $0x4] sm:$0xf]
          %v2593 = vunpack.c.l.b16 %v2589
          %v2594 = vunpack.c.l.b16 %v2590
          %v2595 = vpack.c.b16 %v2594, %v2593
          %v2598 = vsel %vm1286, %v2580, 0
          %v2601 = vsel %vm1286, %v2581, 0
          %v2604 = vsel %vm1286, %v2582, 0
          %v2607 = vsel %vm1286, %v2583, 0
          %v2610 = vsel %vm1286, %v2584, 0
          %v2613 = vsel %vm1286, %v2585, 0
          %v2616 = vsel %vm1286, %v2586, 0
          %v2619 = vsel %vm1286, %v2587, 0
          %2621 = vmatpush.bf16.msra.mxu0 0
          %2622 = vmatpush.bf16.msra.mxu0 0
          %2623 = vmatpush.bf16.msra.mxu0 0
          %2624 = vmatpush.bf16.msra.mxu0 0
          %2625 = vmatpush.bf16.msra.mxu0 0
          %2626 = vmatpush.bf16.msra.mxu0 0
          %2627 = vmatpush.bf16.msra.mxu0 0
          %2628 = vmatpush.bf16.msra.mxu0 %v2595
          %2629 = vmatmul.bf16.gmra.mxu0 %v2598
          %v2630 = vpop.f32.mrf.mxu0
          %v2631 = vadd.f32 0.0, %v2630
          %v2632 = vpop.f32.mrf.mxu0
          %v2633 = vadd.f32 0.0, %v2632
          %2634 = vmatmul.bf16.gmra.mxu0 %v2601
          %v2635 = vpop.f32.mrf.mxu0
          %v2636 = vadd.f32 0.0, %v2635
          %v2637 = vpop.f32.mrf.mxu0
          %v2638 = vadd.f32 0.0, %v2637
          %2639 = vmatmul.bf16.gmra.mxu0 %v2604
          %v2640 = vpop.f32.mrf.mxu0
          %v2641 = vadd.f32 0.0, %v2640
          %v2642 = vpop.f32.mrf.mxu0
          %v2643 = vadd.f32 0.0, %v2642
          %2644 = vmatmul.bf16.gmra.mxu0 %v2607
          %v2645 = vpop.f32.mrf.mxu0
          %v2646 = vadd.f32 0.0, %v2645
          %v2647 = vpop.f32.mrf.mxu0
          %v2648 = vadd.f32 0.0, %v2647
          %2649 = vmatmul.bf16.gmra.mxu0 %v2610
          %v2650 = vpop.f32.mrf.mxu0
          %v2651 = vadd.f32 0.0, %v2650
          %v2652 = vpop.f32.mrf.mxu0
          %v2653 = vadd.f32 0.0, %v2652
          %2654 = vmatmul.bf16.gmra.mxu0 %v2613
          %v2655 = vpop.f32.mrf.mxu0
          %v2656 = vadd.f32 0.0, %v2655
          %v2657 = vpop.f32.mrf.mxu0
          %v2658 = vadd.f32 0.0, %v2657
          %2659 = vmatmul.bf16.gmra.mxu0 %v2616
          %v2660 = vpop.f32.mrf.mxu0
          %v2661 = vadd.f32 0.0, %v2660
          %v2662 = vpop.f32.mrf.mxu0
          %v2663 = vadd.f32 0.0, %v2662
          %2664 = vmatmul.bf16.gmra.mxu0 %v2619
          %v2665 = vpop.f32.mrf.mxu0
          %v2666 = vadd.f32 0.0, %v2665
          %v2667 = vpop.f32.mrf.mxu0
          %v2668 = vadd.f32 0.0, %v2667
          %2669 = vdwg.mxu0
          %v2670 = vadd.f32 %v2525, %v2631
          %v2671 = vadd.f32 %v2527, %v2633
          %v2672 = vadd.f32 %v2530, %v2636
          %v2673 = vadd.f32 %v2532, %v2638
          %v2674 = vadd.f32 %v2535, %v2641
          %v2675 = vadd.f32 %v2537, %v2643
          %v2676 = vadd.f32 %v2540, %v2646
          %v2677 = vadd.f32 %v2542, %v2648
          %v2678 = vadd.f32 %v2545, %v2651
          %v2679 = vadd.f32 %v2547, %v2653
          %v2680 = vadd.f32 %v2550, %v2656
          %v2681 = vadd.f32 %v2552, %v2658
          %v2682 = vadd.f32 %v2555, %v2661
          %v2683 = vadd.f32 %v2557, %v2663
          %v2684 = vadd.f32 %v2560, %v2666
          %v2685 = vadd.f32 %v2562, %v2668
          %v2686 = vld [vmem:[%s17] sm:$0x1]
          %v2688 = vperm.slane %v2686, 0
          %v2690 = vadd.f32 %v2670, %v2688
          %v2691 = vadd.f32 %v2671, %v2688
          %v2692 = vadd.f32 %v2672, %v2688
          %v2693 = vadd.f32 %v2673, %v2688
          %v2694 = vadd.f32 %v2674, %v2688
          %v2695 = vadd.f32 %v2675, %v2688
          %v2696 = vadd.f32 %v2676, %v2688
          %v2697 = vadd.f32 %v2677, %v2688
          %v2698 = vadd.f32 %v2678, %v2688
          %v2699 = vadd.f32 %v2679, %v2688
          %v2700 = vadd.f32 %v2680, %v2688
          %v2701 = vadd.f32 %v2681, %v2688
          %v2702 = vadd.f32 %v2682, %v2688
          %v2703 = vadd.f32 %v2683, %v2688
          %v2704 = vadd.f32 %v2684, %v2688
          %v2705 = vadd.f32 %v2685, %v2688
          %v2706 = vmax.f32 %v2690, 0.0
          %v2707 = vmax.f32 %v2691, 0.0
          %v2708 = vmax.f32 %v2692, 0.0
          %v2709 = vmax.f32 %v2693, 0.0
          %v2710 = vmax.f32 %v2694, 0.0
          %v2711 = vmax.f32 %v2695, 0.0
          %v2712 = vmax.f32 %v2696, 0.0
          %v2713 = vmax.f32 %v2697, 0.0
          %v2714 = vmax.f32 %v2698, 0.0
          %v2715 = vmax.f32 %v2699, 0.0
          %v2716 = vmax.f32 %v2700, 0.0
          %v2717 = vmax.f32 %v2701, 0.0
          %v2718 = vmax.f32 %v2702, 0.0
          %v2719 = vmax.f32 %v2703, 0.0
          %v2720 = vmax.f32 %v2704, 0.0
          %v2721 = vmax.f32 %v2705, 0.0
          %v2722 = vadd.f32 %v2321, %v2706
          %v2723 = vadd.f32 %v2322, %v2707
          %v2724 = vadd.f32 %v2323, %v2708
          %v2725 = vadd.f32 %v2324, %v2709
          %v2726 = vadd.f32 %v2325, %v2710
          %v2727 = vadd.f32 %v2326, %v2711
          %v2728 = vadd.f32 %v2327, %v2712
          %v2729 = vadd.f32 %v2328, %v2713
          %v2730 = vadd.f32 %v2329, %v2714
          %v2731 = vadd.f32 %v2330, %v2715
          %v2732 = vadd.f32 %v2331, %v2716
          %v2733 = vadd.f32 %v2332, %v2717
          %v2734 = vadd.f32 %v2333, %v2718
          %v2735 = vadd.f32 %v2334, %v2719
          %v2736 = vadd.f32 %v2335, %v2720
          %v2737 = vadd.f32 %v2336, %v2721
          %2738 = vst.msk [vmem:[#allocation4 + $0x8] sm:$0xff] %vm1286, %v2722
          %2739 = vst.msk [vmem:[#allocation4 + $0x10] sm:$0xff] %vm1286, %v2723
          %2740 = vst.msk [vmem:[#allocation4 + $0x18] sm:$0xff] %vm1286, %v2724
          %2741 = vst.msk [vmem:[#allocation4 + $0x20] sm:$0xff] %vm1286, %v2725
          %2742 = vst.msk [vmem:[#allocation4 + $0x28] sm:$0xff] %vm1286, %v2726
          %2743 = vst.msk [vmem:[#allocation4 + $0x30] sm:$0xff] %vm1286, %v2727
          %2744 = vst.msk [vmem:[#allocation4 + $0x38] sm:$0xff] %vm1286, %v2728
          %2745 = vst.msk [vmem:[#allocation4 + $0x40] sm:$0xff] %vm1286, %v2729
          %2746 = vst.msk [vmem:[#allocation4 + $0x48] sm:$0xff] %vm1286, %v2730
          %2747 = vst.msk [vmem:[#allocation4 + $0x50] sm:$0xff] %vm1286, %v2731
          %2748 = vst.msk [vmem:[#allocation4 + $0x58] sm:$0xff] %vm1286, %v2732
          %2749 = vst.msk [vmem:[#allocation4 + $0x60] sm:$0xff] %vm1286, %v2733
          %2750 = vst.msk [vmem:[#allocation4 + $0x68] sm:$0xff] %vm1286, %v2734
          %2751 = vst.msk [vmem:[#allocation4 + $0x70] sm:$0xff] %vm1286, %v2735
          %2752 = vst.msk [vmem:[#allocation4 + $0x78] sm:$0xff] %vm1286, %v2736
          %2753 = vst.msk [vmem:[#allocation4 + $0x80] sm:$0xff] %vm1286, %v2737
          %v2754 = vld [vmem:[#allocation4 + $0x4] sm:$0xff]
          %v2755 = vld [vmem:[#allocation4 + $0xc] sm:$0xff]
          %v2756 = vld [vmem:[#allocation4 + $0x14] sm:$0xff]
          %v2757 = vld [vmem:[#allocation4 + $0x1c] sm:$0xff]
          %v2758 = vld [vmem:[#allocation4 + $0x24] sm:$0xff]
          %v2759 = vld [vmem:[#allocation4 + $0x2c] sm:$0xff]
          %v2760 = vld [vmem:[#allocation4 + $0x34] sm:$0xff]
          %v2761 = vld [vmem:[#allocation4 + $0x3c] sm:$0xff]
          %v2762 = vld [vmem:[#allocation4 + $0x44] sm:$0xff]
          %v2763 = vld [vmem:[#allocation4 + $0x4c] sm:$0xff]
          %v2764 = vld [vmem:[#allocation4 + $0x54] sm:$0xff]
          %v2765 = vld [vmem:[#allocation4 + $0x5c] sm:$0xff]
          %v2766 = vld [vmem:[#allocation4 + $0x64] sm:$0xff]
          %v2767 = vld [vmem:[#allocation4 + $0x6c] sm:$0xff]
          %v2768 = vld [vmem:[#allocation4 + $0x74] sm:$0xff]
          %v2769 = vld [vmem:[#allocation4 + $0x7c] sm:$0xff]
          %v2770 = vpack.c.bf16 %v2755, %v2754
          %v2771 = vpack.c.bf16 %v2757, %v2756
          %v2772 = vpack.c.bf16 %v2759, %v2758
          %v2773 = vpack.c.bf16 %v2761, %v2760
          %v2774 = vpack.c.bf16 %v2763, %v2762
          %v2775 = vpack.c.bf16 %v2765, %v2764
          %v2776 = vpack.c.bf16 %v2767, %v2766
          %v2777 = vpack.c.bf16 %v2769, %v2768
          %s2778 = scalar_lea.vmem %s15, 24
          %v2779 = vld [vmem:[%s2778] sm:$0xf]
          %v2780 = vld [vmem:[%s2778 + $0x4] sm:$0xf]
          %v2781 = vld [vmem:[#allocation4 + $0x8] sm:$0xff]
          %v2782 = vld [vmem:[#allocation4 + $0x10] sm:$0xff]
          %v2783 = vld [vmem:[#allocation4 + $0x18] sm:$0xff]
          %v2784 = vld [vmem:[#allocation4 + $0x20] sm:$0xff]
          %v2785 = vld [vmem:[#allocation4 + $0x28] sm:$0xff]
          %v2786 = vld [vmem:[#allocation4 + $0x30] sm:$0xff]
          %v2787 = vld [vmem:[#allocation4 + $0x38] sm:$0xff]
          %v2788 = vld [vmem:[#allocation4 + $0x40] sm:$0xff]
          %v2789 = vld [vmem:[#allocation4 + $0x48] sm:$0xff]
          %v2790 = vld [vmem:[#allocation4 + $0x50] sm:$0xff]
          %v2791 = vld [vmem:[#allocation4 + $0x58] sm:$0xff]
          %v2792 = vld [vmem:[#allocation4 + $0x60] sm:$0xff]
          %v2793 = vld [vmem:[#allocation4 + $0x68] sm:$0xff]
          %v2794 = vld [vmem:[#allocation4 + $0x70] sm:$0xff]
          %v2795 = vld [vmem:[#allocation4 + $0x78] sm:$0xff]
          %v2796 = vld [vmem:[#allocation4 + $0x80] sm:$0xff]
          %v2797 = vpack.c.bf16 %v2782, %v2781
          %v2798 = vpack.c.bf16 %v2784, %v2783
          %v2799 = vpack.c.bf16 %v2786, %v2785
          %v2800 = vpack.c.bf16 %v2788, %v2787
          %v2801 = vpack.c.bf16 %v2790, %v2789
          %v2802 = vpack.c.bf16 %v2792, %v2791
          %v2803 = vpack.c.bf16 %v2794, %v2793
          %v2804 = vpack.c.bf16 %v2796, %v2795
          %s2805 = scalar_lea.vmem %s15, 32
          %v2806 = vld [vmem:[%s2805] sm:$0xf]
          %v2807 = vld [vmem:[%s2805 + $0x4] sm:$0xf]
          %v2810 = vunpack.c.l.b16 %v2806
          %v2811 = vunpack.c.l.b16 %v2807
          %v2812 = vpack.c.b16 %v2811, %v2810
          %v2815 = vsel %vm1286, %v2797, 0
          %v2818 = vsel %vm1286, %v2798, 0
          %v2821 = vsel %vm1286, %v2799, 0
          %v2824 = vsel %vm1286, %v2800, 0
          %v2827 = vsel %vm1286, %v2801, 0
          %v2830 = vsel %vm1286, %v2802, 0
          %v2833 = vsel %vm1286, %v2803, 0
          %v2836 = vsel %vm1286, %v2804, 0
          %2838 = vmatpush.bf16.msra.mxu0 0
          %2839 = vmatpush.bf16.msra.mxu0 0
          %2840 = vmatpush.bf16.msra.mxu0 0
          %2841 = vmatpush.bf16.msra.mxu0 0
          %2842 = vmatpush.bf16.msra.mxu0 0
          %2843 = vmatpush.bf16.msra.mxu0 0
          %2844 = vmatpush.bf16.msra.mxu0 0
          %2845 = vmatpush.bf16.msra.mxu0 %v2812
          %2846 = vmatmul.bf16.gmra.mxu0 %v2815
          %v2847 = vpop.f32.mrf.mxu0
          %v2848 = vadd.f32 0.0, %v2847
          %v2849 = vpop.f32.mrf.mxu0
          %v2850 = vadd.f32 0.0, %v2849
          %2851 = vmatmul.bf16.gmra.mxu0 %v2818
          %v2852 = vpop.f32.mrf.mxu0
          %v2853 = vadd.f32 0.0, %v2852
          %v2854 = vpop.f32.mrf.mxu0
          %v2855 = vadd.f32 0.0, %v2854
          %2856 = vmatmul.bf16.gmra.mxu0 %v2821
          %v2857 = vpop.f32.mrf.mxu0
          %v2858 = vadd.f32 0.0, %v2857
          %v2859 = vpop.f32.mrf.mxu0
          %v2860 = vadd.f32 0.0, %v2859
          %2861 = vmatmul.bf16.gmra.mxu0 %v2824
          %v2862 = vpop.f32.mrf.mxu0
          %v2863 = vadd.f32 0.0, %v2862
          %v2864 = vpop.f32.mrf.mxu0
          %v2865 = vadd.f32 0.0, %v2864
          %2866 = vmatmul.bf16.gmra.mxu0 %v2827
          %v2867 = vpop.f32.mrf.mxu0
          %v2868 = vadd.f32 0.0, %v2867
          %v2869 = vpop.f32.mrf.mxu0
          %v2870 = vadd.f32 0.0, %v2869
          %2871 = vmatmul.bf16.gmra.mxu0 %v2830
          %v2872 = vpop.f32.mrf.mxu0
          %v2873 = vadd.f32 0.0, %v2872
          %v2874 = vpop.f32.mrf.mxu0
          %v2875 = vadd.f32 0.0, %v2874
          %2876 = vmatmul.bf16.gmra.mxu0 %v2833
          %v2877 = vpop.f32.mrf.mxu0
          %v2878 = vadd.f32 0.0, %v2877
          %v2879 = vpop.f32.mrf.mxu0
          %v2880 = vadd.f32 0.0, %v2879
          %2881 = vmatmul.bf16.gmra.mxu0 %v2836
          %v2882 = vpop.f32.mrf.mxu0
          %v2883 = vadd.f32 0.0, %v2882
          %v2884 = vpop.f32.mrf.mxu0
          %v2885 = vadd.f32 0.0, %v2884
          %2886 = vdwg.mxu0
          %v2889 = vunpack.c.l.b16 %v2779
          %v2890 = vunpack.c.l.b16 %v2780
          %v2891 = vpack.c.b16 %v2890, %v2889
          %v2894 = vsel %vm1286, %v2770, 0
          %v2897 = vsel %vm1286, %v2771, 0
          %v2900 = vsel %vm1286, %v2772, 0
          %v2903 = vsel %vm1286, %v2773, 0
          %v2906 = vsel %vm1286, %v2774, 0
          %v2909 = vsel %vm1286, %v2775, 0
          %v2912 = vsel %vm1286, %v2776, 0
          %v2915 = vsel %vm1286, %v2777, 0
          %2917 = vmatpush.bf16.msra.mxu0 0
          %2918 = vmatpush.bf16.msra.mxu0 0
          %2919 = vmatpush.bf16.msra.mxu0 0
          %2920 = vmatpush.bf16.msra.mxu0 0
          %2921 = vmatpush.bf16.msra.mxu0 0
          %2922 = vmatpush.bf16.msra.mxu0 0
          %2923 = vmatpush.bf16.msra.mxu0 0
          %2924 = vmatpush.bf16.msra.mxu0 %v2891
          %2925 = vmatmul.bf16.gmra.mxu0 %v2894
          %v2926 = vpop.f32.mrf.mxu0
          %v2927 = vadd.f32 %v2848, %v2926
          %v2928 = vpop.f32.mrf.mxu0
          %v2929 = vadd.f32 %v2850, %v2928
          %2930 = vmatmul.bf16.gmra.mxu0 %v2897
          %v2931 = vpop.f32.mrf.mxu0
          %v2932 = vadd.f32 %v2853, %v2931
          %v2933 = vpop.f32.mrf.mxu0
          %v2934 = vadd.f32 %v2855, %v2933
          %2935 = vmatmul.bf16.gmra.mxu0 %v2900
          %v2936 = vpop.f32.mrf.mxu0
          %v2937 = vadd.f32 %v2858, %v2936
          %v2938 = vpop.f32.mrf.mxu0
          %v2939 = vadd.f32 %v2860, %v2938
          %2940 = vmatmul.bf16.gmra.mxu0 %v2903
          %v2941 = vpop.f32.mrf.mxu0
          %v2942 = vadd.f32 %v2863, %v2941
          %v2943 = vpop.f32.mrf.mxu0
          %v2944 = vadd.f32 %v2865, %v2943
          %2945 = vmatmul.bf16.gmra.mxu0 %v2906
          %v2946 = vpop.f32.mrf.mxu0
          %v2947 = vadd.f32 %v2868, %v2946
          %v2948 = vpop.f32.mrf.mxu0
          %v2949 = vadd.f32 %v2870, %v2948
          %2950 = vmatmul.bf16.gmra.mxu0 %v2909
          %v2951 = vpop.f32.mrf.mxu0
          %v2952 = vadd.f32 %v2873, %v2951
          %v2953 = vpop.f32.mrf.mxu0
          %v2954 = vadd.f32 %v2875, %v2953
          %2955 = vmatmul.bf16.gmra.mxu0 %v2912
          %v2956 = vpop.f32.mrf.mxu0
          %v2957 = vadd.f32 %v2878, %v2956
          %v2958 = vpop.f32.mrf.mxu0
          %v2959 = vadd.f32 %v2880, %v2958
          %2960 = vmatmul.bf16.gmra.mxu0 %v2915
          %v2961 = vpop.f32.mrf.mxu0
          %v2962 = vadd.f32 %v2883, %v2961
          %v2963 = vpop.f32.mrf.mxu0
          %v2964 = vadd.f32 %v2885, %v2963
          %2965 = vdwg.mxu0
          %v2966 = vld [vmem:[#allocation4 + $0xc] sm:$0xff]
          %v2967 = vld [vmem:[#allocation4 + $0x14] sm:$0xff]
          %v2968 = vld [vmem:[#allocation4 + $0x1c] sm:$0xff]
          %v2969 = vld [vmem:[#allocation4 + $0x24] sm:$0xff]
          %v2970 = vld [vmem:[#allocation4 + $0x2c] sm:$0xff]
          %v2971 = vld [vmem:[#allocation4 + $0x34] sm:$0xff]
          %v2972 = vld [vmem:[#allocation4 + $0x3c] sm:$0xff]
          %v2973 = vld [vmem:[#allocation4 + $0x44] sm:$0xff]
          %v2974 = vld [vmem:[#allocation4 + $0x4c] sm:$0xff]
          %v2975 = vld [vmem:[#allocation4 + $0x54] sm:$0xff]
          %v2976 = vld [vmem:[#allocation4 + $0x5c] sm:$0xff]
          %v2977 = vld [vmem:[#allocation4 + $0x64] sm:$0xff]
          %v2978 = vld [vmem:[#allocation4 + $0x6c] sm:$0xff]
          %v2979 = vld [vmem:[#allocation4 + $0x74] sm:$0xff]
          %v2980 = vld [vmem:[#allocation4 + $0x7c] sm:$0xff]
          %v2981 = vld [vmem:[#allocation4 + $0x84] sm:$0xff]
          %v2982 = vpack.c.bf16 %v2967, %v2966
          %v2983 = vpack.c.bf16 %v2969, %v2968
          %v2984 = vpack.c.bf16 %v2971, %v2970
          %v2985 = vpack.c.bf16 %v2973, %v2972
          %v2986 = vpack.c.bf16 %v2975, %v2974
          %v2987 = vpack.c.bf16 %v2977, %v2976
          %v2988 = vpack.c.bf16 %v2979, %v2978
          %v2989 = vpack.c.bf16 %v2981, %v2980
          %s2990 = scalar_lea.vmem %s15, 40
          %v2991 = vld [vmem:[%s2990] sm:$0xf]
          %v2992 = vld [vmem:[%s2990 + $0x4] sm:$0xf]
          %v2995 = vunpack.c.l.b16 %v2991
          %v2996 = vunpack.c.l.b16 %v2992
          %v2997 = vpack.c.b16 %v2996, %v2995
          %v3000 = vsel %vm1286, %v2982, 0
          %v3003 = vsel %vm1286, %v2983, 0
          %v3006 = vsel %vm1286, %v2984, 0
          %v3009 = vsel %vm1286, %v2985, 0
          %v3012 = vsel %vm1286, %v2986, 0
          %v3015 = vsel %vm1286, %v2987, 0
          %v3018 = vsel %vm1286, %v2988, 0
          %v3021 = vsel %vm1286, %v2989, 0
          %3023 = vmatpush.bf16.msra.mxu0 0
          %3024 = vmatpush.bf16.msra.mxu0 0
          %3025 = vmatpush.bf16.msra.mxu0 0
          %3026 = vmatpush.bf16.msra.mxu0 0
          %3027 = vmatpush.bf16.msra.mxu0 0
          %3028 = vmatpush.bf16.msra.mxu0 0
          %3029 = vmatpush.bf16.msra.mxu0 0
          %3030 = vmatpush.bf16.msra.mxu0 %v2997
          %3031 = vmatmul.bf16.gmra.mxu0 %v3000
          %v3032 = vpop.f32.mrf.mxu0
          %v3033 = vadd.f32 0.0, %v3032
          %v3034 = vpop.f32.mrf.mxu0
          %v3035 = vadd.f32 0.0, %v3034
          %3036 = vmatmul.bf16.gmra.mxu0 %v3003
          %v3037 = vpop.f32.mrf.mxu0
          %v3038 = vadd.f32 0.0, %v3037
          %v3039 = vpop.f32.mrf.mxu0
          %v3040 = vadd.f32 0.0, %v3039
          %3041 = vmatmul.bf16.gmra.mxu0 %v3006
          %v3042 = vpop.f32.mrf.mxu0
          %v3043 = vadd.f32 0.0, %v3042
          %v3044 = vpop.f32.mrf.mxu0
          %v3045 = vadd.f32 0.0, %v3044
          %3046 = vmatmul.bf16.gmra.mxu0 %v3009
          %v3047 = vpop.f32.mrf.mxu0
          %v3048 = vadd.f32 0.0, %v3047
          %v3049 = vpop.f32.mrf.mxu0
          %v3050 = vadd.f32 0.0, %v3049
          %3051 = vmatmul.bf16.gmra.mxu0 %v3012
          %v3052 = vpop.f32.mrf.mxu0
          %v3053 = vadd.f32 0.0, %v3052
          %v3054 = vpop.f32.mrf.mxu0
          %v3055 = vadd.f32 0.0, %v3054
          %3056 = vmatmul.bf16.gmra.mxu0 %v3015
          %v3057 = vpop.f32.mrf.mxu0
          %v3058 = vadd.f32 0.0, %v3057
          %v3059 = vpop.f32.mrf.mxu0
          %v3060 = vadd.f32 0.0, %v3059
          %3061 = vmatmul.bf16.gmra.mxu0 %v3018
          %v3062 = vpop.f32.mrf.mxu0
          %v3063 = vadd.f32 0.0, %v3062
          %v3064 = vpop.f32.mrf.mxu0
          %v3065 = vadd.f32 0.0, %v3064
          %3066 = vmatmul.bf16.gmra.mxu0 %v3021
          %v3067 = vpop.f32.mrf.mxu0
          %v3068 = vadd.f32 0.0, %v3067
          %v3069 = vpop.f32.mrf.mxu0
          %v3070 = vadd.f32 0.0, %v3069
          %3071 = vdwg.mxu0
          %v3072 = vadd.f32 %v2927, %v3033
          %v3073 = vadd.f32 %v2929, %v3035
          %v3074 = vadd.f32 %v2932, %v3038
          %v3075 = vadd.f32 %v2934, %v3040
          %v3076 = vadd.f32 %v2937, %v3043
          %v3077 = vadd.f32 %v2939, %v3045
          %v3078 = vadd.f32 %v2942, %v3048
          %v3079 = vadd.f32 %v2944, %v3050
          %v3080 = vadd.f32 %v2947, %v3053
          %v3081 = vadd.f32 %v2949, %v3055
          %v3082 = vadd.f32 %v2952, %v3058
          %v3083 = vadd.f32 %v2954, %v3060
          %v3084 = vadd.f32 %v2957, %v3063
          %v3085 = vadd.f32 %v2959, %v3065
          %v3086 = vadd.f32 %v2962, %v3068
          %v3087 = vadd.f32 %v2964, %v3070
          %s3088 = scalar_lea.vmem %s17, 1
          %v3089 = vld [vmem:[%s3088] sm:$0x1]
          %v3091 = vperm.slane %v3089, 0
          %v3093 = vadd.f32 %v3072, %v3091
          %v3094 = vadd.f32 %v3073, %v3091
          %v3095 = vadd.f32 %v3074, %v3091
          %v3096 = vadd.f32 %v3075, %v3091
          %v3097 = vadd.f32 %v3076, %v3091
          %v3098 = vadd.f32 %v3077, %v3091
          %v3099 = vadd.f32 %v3078, %v3091
          %v3100 = vadd.f32 %v3079, %v3091
          %v3101 = vadd.f32 %v3080, %v3091
          %v3102 = vadd.f32 %v3081, %v3091
          %v3103 = vadd.f32 %v3082, %v3091
          %v3104 = vadd.f32 %v3083, %v3091
          %v3105 = vadd.f32 %v3084, %v3091
          %v3106 = vadd.f32 %v3085, %v3091
          %v3107 = vadd.f32 %v3086, %v3091
          %v3108 = vadd.f32 %v3087, %v3091
          %v3109 = vmax.f32 %v3093, 0.0
          %v3110 = vmax.f32 %v3094, 0.0
          %v3111 = vmax.f32 %v3095, 0.0
          %v3112 = vmax.f32 %v3096, 0.0
          %v3113 = vmax.f32 %v3097, 0.0
          %v3114 = vmax.f32 %v3098, 0.0
          %v3115 = vmax.f32 %v3099, 0.0
          %v3116 = vmax.f32 %v3100, 0.0
          %v3117 = vmax.f32 %v3101, 0.0
          %v3118 = vmax.f32 %v3102, 0.0
          %v3119 = vmax.f32 %v3103, 0.0
          %v3120 = vmax.f32 %v3104, 0.0
          %v3121 = vmax.f32 %v3105, 0.0
          %v3122 = vmax.f32 %v3106, 0.0
          %v3123 = vmax.f32 %v3107, 0.0
          %v3124 = vmax.f32 %v3108, 0.0
          %v3125 = vadd.f32 %v2722, %v3109
          %v3126 = vadd.f32 %v2723, %v3110
          %v3127 = vadd.f32 %v2724, %v3111
          %v3128 = vadd.f32 %v2725, %v3112
          %v3129 = vadd.f32 %v2726, %v3113
          %v3130 = vadd.f32 %v2727, %v3114
          %v3131 = vadd.f32 %v2728, %v3115
          %v3132 = vadd.f32 %v2729, %v3116
          %v3133 = vadd.f32 %v2730, %v3117
          %v3134 = vadd.f32 %v2731, %v3118
          %v3135 = vadd.f32 %v2732, %v3119
          %v3136 = vadd.f32 %v2733, %v3120
          %v3137 = vadd.f32 %v2734, %v3121
          %v3138 = vadd.f32 %v2735, %v3122
          %v3139 = vadd.f32 %v2736, %v3123
          %v3140 = vadd.f32 %v2737, %v3124
          %3141 = vst.msk [vmem:[#allocation4 + $0x8] sm:$0xff] %vm1286, %v3125
          %3142 = vst.msk [vmem:[#allocation4 + $0x10] sm:$0xff] %vm1286, %v3126
          %3143 = vst.msk [vmem:[#allocation4 + $0x18] sm:$0xff] %vm1286, %v3127
          %3144 = vst.msk [vmem:[#allocation4 + $0x20] sm:$0xff] %vm1286, %v3128
          %3145 = vst.msk [vmem:[#allocation4 + $0x28] sm:$0xff] %vm1286, %v3129
          %3146 = vst.msk [vmem:[#allocation4 + $0x30] sm:$0xff] %vm1286, %v3130
          %3147 = vst.msk [vmem:[#allocation4 + $0x38] sm:$0xff] %vm1286, %v3131
          %3148 = vst.msk [vmem:[#allocation4 + $0x40] sm:$0xff] %vm1286, %v3132
          %3149 = vst.msk [vmem:[#allocation4 + $0x48] sm:$0xff] %vm1286, %v3133
          %3150 = vst.msk [vmem:[#allocation4 + $0x50] sm:$0xff] %vm1286, %v3134
          %3151 = vst.msk [vmem:[#allocation4 + $0x58] sm:$0xff] %vm1286, %v3135
          %3152 = vst.msk [vmem:[#allocation4 + $0x60] sm:$0xff] %vm1286, %v3136
          %3153 = vst.msk [vmem:[#allocation4 + $0x68] sm:$0xff] %vm1286, %v3137
          %3154 = vst.msk [vmem:[#allocation4 + $0x70] sm:$0xff] %vm1286, %v3138
          %3155 = vst.msk [vmem:[#allocation4 + $0x78] sm:$0xff] %vm1286, %v3139
          %3156 = vst.msk [vmem:[#allocation4 + $0x80] sm:$0xff] %vm1286, %v3140
          %v3157 = vsel %vm1286, %v3125, 0.0
          %v3158 = vsel %vm1286, %v3126, 0.0
          %v3159 = vadd.f32 %v3157, %v3158
          %v3160 = vrot.slane %v3159, 4
          %v3161 = vadd.f32 %v3159, %v3160
          %v3162 = vrot.slane %v3161, 2
          %v3163 = vadd.f32 %v3161, %v3162
          %v3164 = vrot.slane %v3163, 1
          %v3165 = vadd.f32 %v3163, %v3164
          %v3166 = vsel %vm1286, %v3127, 0.0
          %v3167 = vsel %vm1286, %v3128, 0.0
          %v3168 = vadd.f32 %v3166, %v3167
          %v3169 = vrot.slane %v3168, 4
          %v3170 = vadd.f32 %v3168, %v3169
          %v3171 = vrot.slane %v3170, 2
          %v3172 = vadd.f32 %v3170, %v3171
          %v3173 = vrot.slane %v3172, 1
          %v3174 = vadd.f32 %v3172, %v3173
          %v3175 = vsel %vm1286, %v3129, 0.0
          %v3176 = vsel %vm1286, %v3130, 0.0
          %v3177 = vadd.f32 %v3175, %v3176
          %v3178 = vrot.slane %v3177, 4
          %v3179 = vadd.f32 %v3177, %v3178
          %v3180 = vrot.slane %v3179, 2
          %v3181 = vadd.f32 %v3179, %v3180
          %v3182 = vrot.slane %v3181, 1
          %v3183 = vadd.f32 %v3181, %v3182
          %v3184 = vsel %vm1286, %v3131, 0.0
          %v3185 = vsel %vm1286, %v3132, 0.0
          %v3186 = vadd.f32 %v3184, %v3185
          %v3187 = vrot.slane %v3186, 4
          %v3188 = vadd.f32 %v3186, %v3187
          %v3189 = vrot.slane %v3188, 2
          %v3190 = vadd.f32 %v3188, %v3189
          %v3191 = vrot.slane %v3190, 1
          %v3192 = vadd.f32 %v3190, %v3191
          %v3193 = vsel %vm1286, %v3133, 0.0
          %v3194 = vsel %vm1286, %v3134, 0.0
          %v3195 = vadd.f32 %v3193, %v3194
          %v3196 = vrot.slane %v3195, 4
          %v3197 = vadd.f32 %v3195, %v3196
          %v3198 = vrot.slane %v3197, 2
          %v3199 = vadd.f32 %v3197, %v3198
          %v3200 = vrot.slane %v3199, 1
          %v3201 = vadd.f32 %v3199, %v3200
          %v3202 = vsel %vm1286, %v3135, 0.0
          %v3203 = vsel %vm1286, %v3136, 0.0
          %v3204 = vadd.f32 %v3202, %v3203
          %v3205 = vrot.slane %v3204, 4
          %v3206 = vadd.f32 %v3204, %v3205
          %v3207 = vrot.slane %v3206, 2
          %v3208 = vadd.f32 %v3206, %v3207
          %v3209 = vrot.slane %v3208, 1
          %v3210 = vadd.f32 %v3208, %v3209
          %v3211 = vsel %vm1286, %v3137, 0.0
          %v3212 = vsel %vm1286, %v3138, 0.0
          %v3213 = vadd.f32 %v3211, %v3212
          %v3214 = vrot.slane %v3213, 4
          %v3215 = vadd.f32 %v3213, %v3214
          %v3216 = vrot.slane %v3215, 2
          %v3217 = vadd.f32 %v3215, %v3216
          %v3218 = vrot.slane %v3217, 1
          %v3219 = vadd.f32 %v3217, %v3218
          %v3220 = vsel %vm1286, %v3139, 0.0
          %v3221 = vsel %vm1286, %v3140, 0.0
          %v3222 = vadd.f32 %v3220, %v3221
          %v3223 = vrot.slane %v3222, 4
          %v3224 = vadd.f32 %v3222, %v3223
          %v3225 = vrot.slane %v3224, 2
          %v3226 = vadd.f32 %v3224, %v3225
          %v3227 = vrot.slane %v3226, 1
          %v3228 = vadd.f32 %v3226, %v3227
          %v3229 = vmul.f32 %v3165, 0.0625
          %v3230 = vmul.f32 %v3174, 0.0625
          %v3231 = vmul.f32 %v3183, 0.0625
          %v3232 = vmul.f32 %v3192, 0.0625
          %v3233 = vmul.f32 %v3201, 0.0625
          %v3234 = vmul.f32 %v3210, 0.0625
          %v3235 = vmul.f32 %v3219, 0.0625
          %v3236 = vmul.f32 %v3228, 0.0625
          %v3237 = vpack.c.bf16 %v3229, %v3229
          %v3238 = vpack.c.bf16 %v3230, %v3230
          %v3239 = vpack.c.bf16 %v3231, %v3231
          %v3240 = vpack.c.bf16 %v3232, %v3232
          %v3241 = vpack.c.bf16 %v3233, %v3233
          %v3242 = vpack.c.bf16 %v3234, %v3234
          %v3243 = vpack.c.bf16 %v3235, %v3235
          %v3244 = vpack.c.bf16 %v3236, %v3236
          %v3245 = vld [vmem:[%s19] sm:$0xf]
          %v3246 = vld [vmem:[%s19 + $0x4] sm:$0xf]
          %v3247 = vld [vmem:[%s21] sm:$0x1]
          %v3249 = vperm.slane %v3247, 0
          %v3259 = vunpack.c.l.b16 %v3237
          %v3260 = vunpack.c.l.b16 %v3238
          %v3261 = vunpack.c.l.b16 %v3239
          %v3262 = vunpack.c.l.b16 %v3240
          %v3263 = vunpack.c.l.b16 %v3241
          %v3264 = vunpack.c.l.b16 %v3242
          %v3265 = vunpack.c.l.b16 %v3243
          %v3266 = vunpack.c.l.b16 %v3244
          %vm3267 = vcmask 1041409
          %v3268 = vsel %vm3267, %v3260, %v3259
          %vm3269 = vcmask 1042434
          %v3270 = vsel %vm3269, %v3261, %v3268
          %vm3271 = vcmask 1043459
          %v3272 = vsel %vm3271, %v3262, %v3270
          %vm3273 = vcmask 1044484
          %v3274 = vsel %vm3273, %v3263, %v3272
          %vm3275 = vcmask 1045509
          %v3276 = vsel %vm3275, %v3264, %v3274
          %vm3277 = vcmask 1046534
          %v3278 = vsel %vm3277, %v3265, %v3276
          %vm3279 = vcmask 1047559
          %v3280 = vsel %vm3279, %v3266, %v3278
          %v3281 = vpack.c.b16 %v3280, %v3280
          %v3284 = vunpack.c.l.b16 %v3245
          %v3285 = vunpack.c.l.b16 %v3246
          %v3286 = vpack.c.b16 %v3285, %v3284
          %v3289 = vsel %vm1286, %v3281, 0
          %3291 = vmatpush.bf16.msra.mxu0 0
          %3292 = vmatpush.bf16.msra.mxu0 0
          %3293 = vmatpush.bf16.msra.mxu0 0
          %3294 = vmatpush.bf16.msra.mxu0 0
          %3295 = vmatpush.bf16.msra.mxu0 0
          %3296 = vmatpush.bf16.msra.mxu0 0
          %3297 = vmatpush.bf16.msra.mxu0 0
          %3298 = vmatpush.bf16.msra.mxu0 %v3286
          %3299 = vmatmul.bf16.gmra.mxu0 %v3289
          %v3300 = vpop.f32.mrf.mxu0
          %v3301 = vadd.f32 %v3249, %v3300
          %v3302 = vpop.f32.mrf.mxu0
          %3303 = vdwg.mxu0
          %v3304 = vpack.c.bf16 %v3301, %v3301
          %v3305 = vld [vmem:[%s23] sm:$0xf]
          %v3306 = vld [vmem:[%s23 + $0x4] sm:$0xf]
          %v3307 = vld [vmem:[%s23 + $0x8] sm:$0xf]
          %v3308 = vld [vmem:[%s25] sm:$0x1]
          %v3310 = vperm.slane %v3308, 0
          %v3315 = vunpack.c.l.b16 %v3305
          %v3316 = vunpack.c.l.b16 %v3306
          %v3317 = vunpack.c.l.b16 %v3307
          %v3318 = vpack.c.b16 %v3316, %v3315
          %v3319 = vpack.c.b16 %v3317, %v3317
          %vm3321 = vcmask 195584
          %v3323 = vsel %vm3321, %v3304, 0
          %vm3325 = vcmask 1043456
          %v3327 = vsel %vm3325, %v3319, 0
          %3329 = vmatpush.bf16.msra.mxu0 0
          %3330 = vmatpush.bf16.msra.mxu0 0
          %3331 = vmatpush.bf16.msra.mxu0 0
          %3332 = vmatpush.bf16.msra.mxu0 0
          %3333 = vmatpush.bf16.msra.mxu0 0
          %3334 = vmatpush.bf16.msra.mxu0 0
          %3335 = vmatpush.bf16.msra.mxu0 %v3327
          %3336 = vmatpush.bf16.msra.mxu0 %v3318
          %3337 = vmatmul.bf16.gmra.mxu0 %v3323
          %v3338 = vpop.f32.mrf.mxu0
          %v3339 = vadd.f32 %v3310, %v3338
          %v3340 = vpop.f32.mrf.mxu0
          %3341 = vdwg.mxu0
          %v3342 = vmax.f32 %v3339, 0.0
          %v3343 = vpack.c.bf16 %v3342, %v3342
          %v3344 = vld [vmem:[%s27] sm:$0xf]
          %v3345 = vld [vmem:[%s27 + $0x4] sm:$0xf]
          %v3346 = vld [vmem:[%s27 + $0x8] sm:$0xf]
          %v3347 = vld [vmem:[%s27 + $0xc] sm:$0xf]
          %v3348 = vld [vmem:[#allocation7] sm:$0x1]
          %v3350 = vperm.slane %v3348, 0
          %v3356 = vunpack.c.l.b16 %v3344
          %v3357 = vunpack.c.l.b16 %v3345
          %v3358 = vunpack.c.l.b16 %v3346
          %v3359 = vunpack.c.l.b16 %v3347
          %v3360 = vpack.c.b16 %v3357, %v3356
          %v3361 = vpack.c.b16 %v3359, %v3358
          %vm3364 = vcmask 261120
          %v3366 = vsel %vm3364, %v3343, 0
          %3368 = vmatpush.bf16.msra.mxu0 0
          %3369 = vmatpush.bf16.msra.mxu0 0
          %3370 = vmatpush.bf16.msra.mxu0 0
          %3371 = vmatpush.bf16.msra.mxu0 0
          %3372 = vmatpush.bf16.msra.mxu0 0
          %3373 = vmatpush.bf16.msra.mxu0 0
          %3374 = vmatpush.bf16.msra.mxu0 %v3361
          %3375 = vmatpush.bf16.msra.mxu0 %v3360
          %3376 = vmatmul.bf16.gmra.mxu0 %v3366
          %v3377 = vpop.f32.mrf.mxu0
          %v3378 = vadd.f32 %v3350, %v3377
          %v3379 = vpop.f32.mrf.mxu0
          %3380 = vdwg.mxu0
          %v3381 = vmax.f32 %v3378, 0.0
          %v3382 = vand.u32 2147483647, %v3378
          %v3383 = vsub.f32 0.0, %v3382
          %v3384 = vmul.f32 %v3383, 1.442695
          %v3385 = vpow.pop %v3384
          %v3386 = vadd.f32 %v3385, 1.0
          %v3387 = vlog2.pop %v3386
          %v3388 = vmul.f32 %v3387, 0.6931472
          %v3389 = vadd.f32 %v3381, %v3388
          %vm3390 = vcmask 7168
          %3391 = vst.msk [vmem:[#allocation6] sm:$0xff] %vm3390, %v3389
          %v3392 = vld [vmem:[%s31] sm:$0xf]
          %v3393 = vld [vmem:[%s31 + $0x4] sm:$0xf]
          %v3394 = vld [vmem:[%s31 + $0x8] sm:$0xf]
          %v3395 = vld [vmem:[%s33] sm:$0x1]
          %v3397 = vperm.slane %v3395, 0
          %v3402 = vunpack.c.l.b16 %v3392
          %v3403 = vunpack.c.l.b16 %v3393
          %v3404 = vunpack.c.l.b16 %v3394
          %v3405 = vpack.c.b16 %v3403, %v3402
          %v3406 = vpack.c.b16 %v3404, %v3404
          %v3409 = vsel %vm3325, %v3406, 0
          %3411 = vmatpush.bf16.msra.mxu0 0
          %3412 = vmatpush.bf16.msra.mxu0 0
          %3413 = vmatpush.bf16.msra.mxu0 0
          %3414 = vmatpush.bf16.msra.mxu0 0
          %3415 = vmatpush.bf16.msra.mxu0 0
          %3416 = vmatpush.bf16.msra.mxu0 0
          %3417 = vmatpush.bf16.msra.mxu0 %v3409
          %3418 = vmatpush.bf16.msra.mxu0 %v3405
          %3419 = vmatmul.bf16.gmra.mxu0 %v3323
          %v3420 = vpop.f32.mrf.mxu0
          %v3421 = vadd.f32 %v3397, %v3420
          %v3422 = vpop.f32.mrf.mxu0
          %3423 = vdwg.mxu0
          %v3424 = vld [vmem:[%s35] sm:$0xff]
          %v3425 = vadd.f32 %v3421, %v3424
          %3426 = vst.msk [vmem:[#allocation5] sm:$0xff] %vm3364, %v3425
        $region160: #{tpu_custom_call.1} parent=155 // pred_fallthru
          _
        %v3427 = vld [vmem:[#allocation5] sm:$0xff]
        %v3428 = vld [vmem:[%s1236] sm:$0x1]
        %v3429 = vld [vmem:[%s1239] sm:$0x1]
        %vm3430 = vcmask 261120
        %v3431 = vsel %vm3430, %v3427, 0.0
        %3432 = vadd.xlane.f32.xlu0 %v3431
        %v3433 = vpop.xlane.xlu0 %3432
        %v3434 = vrcp.pop 32.0
        %v3435 = vmul.f32 32.0, %v3434
        %v3436 = vsub.f32 1.0, %v3435
        %v3437 = vmul.f32 %v3434, %v3436
        %v3438 = vadd.f32 %v3434, %v3437
        %vm3439 = vweird.f32 %v3434
        %v3440 = vsel %vm3439, %v3434, %v3438
        %v3441 = vmul.f32 %v3433, %v3440
        %v3442 = vsub.f32 %v3427, %v3441
        %v3443 = vmul.f32 %v3442, %v3442
        %v3444 = vsel %vm3430, %v3443, 0.0
        %3445 = vadd.xlane.f32.xlu0 %v3444
        %v3446 = vpop.xlane.xlu0 %3445
        %v3447 = vmul.f32 %v3446, %v3440
        %v3448 = vadd.f32 %v3447, 1e-05
        %v3449 = vrsqrt.pop %v3448
        %v3450 = vmul.f32 %v3449, %v3448
        %v3451 = vmul.f32 %v3450, %v3449
        %v3452 = vmul.f32 0.5, %v3451
        %v3453 = vsub.f32 1.5, %v3452
        %v3454 = vmul.f32 %v3449, %v3453
        %vm3455 = vweird.f32 %v3448
        %vm3456 = vweird.f32 %v3449
        %vm3457 = vmor %vm3455, %vm3456
        %v3458 = vsel %vm3457, %v3449, %v3454
        %v3459 = vmul.f32 %v3442, %v3458
        %v3461 = vperm.slane %v3428, 0
        %v3463 = vmul.f32 %v3459, %v3461
        %v3465 = vperm.slane %v3429, 0
        %v3467 = vadd.f32 %v3463, %v3465
        %v3468 = vpack.c.bf16 %v3467, %v3467
        %v3469 = vld [vmem:[%s1244] sm:$0xf]
        %v3470 = vld [vmem:[%s1244 + $0x4] sm:$0xf]
        %v3471 = vld [vmem:[%s1244 + $0x8] sm:$0xf]
        %v3472 = vld [vmem:[%s1244 + $0xc] sm:$0xf]
        %v3473 = vld [vmem:[%s1247] sm:$0x1]
        %v3475 = vperm.slane %v3473, 0
        %v3481 = vunpack.c.l.b16 %v3469
        %v3482 = vunpack.c.l.b16 %v3470
        %v3483 = vunpack.c.l.b16 %v3471
        %v3484 = vunpack.c.l.b16 %v3472
        %v3485 = vpack.c.b16 %v3482, %v3481
        %v3486 = vpack.c.b16 %v3484, %v3483
        %v3490 = vsel %vm3430, %v3468, 0
        %3492 = vmatpush.bf16.msra.mxu0 0
        %3493 = vmatpush.bf16.msra.mxu0 0
        %3494 = vmatpush.bf16.msra.mxu0 0
        %3495 = vmatpush.bf16.msra.mxu0 0
        %3496 = vmatpush.bf16.msra.mxu0 0
        %3497 = vmatpush.bf16.msra.mxu0 0
        %3498 = vmatpush.bf16.msra.mxu0 %v3486
        %3499 = vmatpush.bf16.msra.mxu0 %v3485
        %3500 = vmatmul.bf16.gmra.mxu0 %v3490
        %v3501 = vpop.f32.mrf.mxu0
        %v3502 = vadd.f32 %v3475, %v3501
        %v3503 = vpop.f32.mrf.mxu0
        %3504 = vdwg.mxu0
        %3506 = vrot.lane.b32.xlu0 %v3502, 120
        %v3507 = vpop.permute.xlu0 %3506
        %3509 = vrot.lane.b32.xlu0 %v3502, 112
        %v3510 = vpop.permute.xlu0 %3509
        %3512 = vrot.lane.b32.xlu0 %v3502, 104
        %v3513 = vpop.permute.xlu0 %3512
        %v3515 = vpack.c.bf16 %v3502, %v3502
        %v3516 = vpack.c.bf16 %v3507, %v3507
        %v3517 = vpack.c.bf16 %v3510, %v3510
        %v3518 = vpack.c.bf16 %v3513, %v3513
        %v3519 = vld [vmem:[%s1233] sm:$0x1]
        %v3521 = vperm.slane %v3519, 0
        %v3524 = vunpack.c.l.b16 %v3515
        %v3525 = vpack.c.b16 %v3524, %v3524
        %3526 = vrot.lane.b32.xlu0 %v3525, 96
        %v3527 = vpop.permute.xlu0 %3526
        %vm3528 = vcmask 64512
        %v3530 = vsel %vm3528, %v3515, 0
        %v3533 = vsel %vm3528, %v3527, 0
        %3535 = vmatpush.bf16.xpose.msra.mxu0 0
        %3536 = vmatpush.bf16.xpose.msra.mxu0 0
        %3537 = vmatpush.bf16.xpose.msra.mxu0 0
        %3538 = vmatpush.bf16.xpose.msra.mxu0 0
        %3539 = vmatpush.bf16.xpose.msra.mxu0 0
        %3540 = vmatpush.bf16.xpose.msra.mxu0 0
        %3541 = vmatpush.bf16.xpose.msra.mxu0 0
        %3542 = vmatpush.bf16.xpose.msra.mxu0 %v3533
        %3543 = vmatmul.bf16.gmra.mxu0 %v3530
        %v3544 = vpop.f32.mrf.mxu0
        %v3545 = vadd.f32 %v3521, %v3544
        %v3546 = vpop.f32.mrf.mxu0
        %3547 = vdwg.mxu0
        %v3549 = vunpack.c.l.b16 %v3516
        %v3550 = vpack.c.b16 %v3549, %v3549
        %3551 = vrot.lane.b32.xlu0 %v3550, 96
        %v3552 = vpop.permute.xlu0 %3551
        %v3554 = vsel %vm3528, %v3516, 0
        %v3557 = vsel %vm3528, %v3552, 0
        %3559 = vmatpush.bf16.xpose.msra.mxu0 0
        %3560 = vmatpush.bf16.xpose.msra.mxu0 0
        %3561 = vmatpush.bf16.xpose.msra.mxu0 0
        %3562 = vmatpush.bf16.xpose.msra.mxu0 0
        %3563 = vmatpush.bf16.xpose.msra.mxu0 0
        %3564 = vmatpush.bf16.xpose.msra.mxu0 0
        %3565 = vmatpush.bf16.xpose.msra.mxu0 0
        %3566 = vmatpush.bf16.xpose.msra.mxu0 %v3557
        %3567 = vmatmul.bf16.gmra.mxu0 %v3554
        %v3568 = vpop.f32.mrf.mxu0
        %v3569 = vadd.f32 %v3521, %v3568
        %v3570 = vpop.f32.mrf.mxu0
        %3571 = vdwg.mxu0
        %v3573 = vunpack.c.l.b16 %v3517
        %v3574 = vpack.c.b16 %v3573, %v3573
        %3575 = vrot.lane.b32.xlu0 %v3574, 96
        %v3576 = vpop.permute.xlu0 %3575
        %v3578 = vsel %vm3528, %v3517, 0
        %v3581 = vsel %vm3528, %v3576, 0
        %3583 = vmatpush.bf16.xpose.msra.mxu0 0
        %3584 = vmatpush.bf16.xpose.msra.mxu0 0
        %3585 = vmatpush.bf16.xpose.msra.mxu0 0
        %3586 = vmatpush.bf16.xpose.msra.mxu0 0
        %3587 = vmatpush.bf16.xpose.msra.mxu0 0
        %3588 = vmatpush.bf16.xpose.msra.mxu0 0
        %3589 = vmatpush.bf16.xpose.msra.mxu0 0
        %3590 = vmatpush.bf16.xpose.msra.mxu0 %v3581
        %3591 = vmatmul.bf16.gmra.mxu0 %v3578
        %v3592 = vpop.f32.mrf.mxu0
        %v3593 = vadd.f32 %v3521, %v3592
        %v3594 = vpop.f32.mrf.mxu0
        %3595 = vdwg.mxu0
        %v3597 = vunpack.c.l.b16 %v3518
        %v3598 = vpack.c.b16 %v3597, %v3597
        %3599 = vrot.lane.b32.xlu0 %v3598, 96
        %v3600 = vpop.permute.xlu0 %3599
        %v3602 = vsel %vm3528, %v3518, 0
        %v3605 = vsel %vm3528, %v3600, 0
        %3607 = vmatpush.bf16.xpose.msra.mxu0 0
        %3608 = vmatpush.bf16.xpose.msra.mxu0 0
        %3609 = vmatpush.bf16.xpose.msra.mxu0 0
        %3610 = vmatpush.bf16.xpose.msra.mxu0 0
        %3611 = vmatpush.bf16.xpose.msra.mxu0 0
        %3612 = vmatpush.bf16.xpose.msra.mxu0 0
        %3613 = vmatpush.bf16.xpose.msra.mxu0 0
        %3614 = vmatpush.bf16.xpose.msra.mxu0 %v3605
        %3615 = vmatmul.bf16.gmra.mxu0 %v3602
        %v3616 = vpop.f32.mrf.mxu0
        %v3617 = vadd.f32 %v3521, %v3616
        %v3618 = vpop.f32.mrf.mxu0
        %3619 = vdwg.mxu0
        %v3620 = vsel %vm3528, %v3545, -inf
        %3621 = vmax.xlane.f32.xlu0 %v3620
        %v3622 = vpop.xlane.xlu0 %3621
        %v3623 = vsel %vm3528, %v3569, -inf
        %3624 = vmax.xlane.f32.xlu0 %v3623
        %v3625 = vpop.xlane.xlu0 %3624
        %v3626 = vsel %vm3528, %v3593, -inf
        %3627 = vmax.xlane.f32.xlu0 %v3626
        %v3628 = vpop.xlane.xlu0 %3627
        %v3629 = vsel %vm3528, %v3617, -inf
        %3630 = vmax.xlane.f32.xlu0 %v3629
        %v3631 = vpop.xlane.xlu0 %3630
        %v3632 = vsub.f32 %v3545, %v3622
        %v3633 = vsub.f32 %v3569, %v3625
        %v3634 = vsub.f32 %v3593, %v3628
        %v3635 = vsub.f32 %v3617, %v3631
        %v3636 = vmul.f32 %v3632, 1.442695
        %v3637 = vpow.pop %v3636
        %v3638 = vmul.f32 %v3633, 1.442695
        %v3639 = vpow.pop %v3638
        %v3640 = vmul.f32 %v3634, 1.442695
        %v3641 = vpow.pop %v3640
        %v3642 = vmul.f32 %v3635, 1.442695
        %v3643 = vpow.pop %v3642
        %v3644 = vsel %vm3528, %v3637, 0.0
        %3645 = vadd.xlane.f32.xlu0 %v3644
        %v3646 = vpop.xlane.xlu0 %3645
        %v3647 = vsel %vm3528, %v3639, 0.0
        %3648 = vadd.xlane.f32.xlu0 %v3647
        %v3649 = vpop.xlane.xlu0 %3648
        %v3650 = vsel %vm3528, %v3641, 0.0
        %3651 = vadd.xlane.f32.xlu0 %v3650
        %v3652 = vpop.xlane.xlu0 %3651
        %v3653 = vsel %vm3528, %v3643, 0.0
        %3654 = vadd.xlane.f32.xlu0 %v3653
        %v3655 = vpop.xlane.xlu0 %3654
        %v3656 = vrcp.pop %v3646
        %v3657 = vrcp.pop %v3649
        %v3658 = vrcp.pop %v3652
        %v3659 = vrcp.pop %v3655
        %v3660 = vmul.f32 %v3637, %v3656
        %v3661 = vmul.f32 %v3639, %v3657
        %v3662 = vmul.f32 %v3641, %v3658
        %v3663 = vmul.f32 %v3643, %v3659
        %v3664 = vpack.c.bf16 %v3660, %v3660
        %v3665 = vpack.c.bf16 %v3661, %v3661
        %v3666 = vpack.c.bf16 %v3662, %v3662
        %v3667 = vpack.c.bf16 %v3663, %v3663
        %3668 = vrot.lane.b32.xlu0 %v3525, 64
        %v3669 = vpop.permute.xlu0 %3668
        %v3671 = vsel %vm3528, %v3664, 0
        %vm3673 = vcmask 1043456
        %v3675 = vsel %vm3673, %v3669, 0
        %3677 = vmatpush.bf16.msra.mxu0 0
        %3678 = vmatpush.bf16.msra.mxu0 0
        %3679 = vmatpush.bf16.msra.mxu0 0
        %3680 = vmatpush.bf16.msra.mxu0 0
        %3681 = vmatpush.bf16.msra.mxu0 0
        %3682 = vmatpush.bf16.msra.mxu0 0
        %3683 = vmatpush.bf16.msra.mxu0 0
        %3684 = vmatpush.bf16.msra.mxu0 %v3675
        %3685 = vmatmul.bf16.gmra.mxu0 %v3671
        %v3686 = vpop.f32.mrf.mxu0
        %v3687 = vadd.f32 0.0, %v3686
        %v3688 = vpop.f32.mrf.mxu0
        %3689 = vdwg.mxu0
        %3690 = vrot.lane.b32.xlu0 %v3550, 64
        %v3691 = vpop.permute.xlu0 %3690
        %v3693 = vsel %vm3528, %v3665, 0
        %v3696 = vsel %vm3673, %v3691, 0
        %3698 = vmatpush.bf16.msra.mxu0 0
        %3699 = vmatpush.bf16.msra.mxu0 0
        %3700 = vmatpush.bf16.msra.mxu0 0
        %3701 = vmatpush.bf16.msra.mxu0 0
        %3702 = vmatpush.bf16.msra.mxu0 0
        %3703 = vmatpush.bf16.msra.mxu0 0
        %3704 = vmatpush.bf16.msra.mxu0 0
        %3705 = vmatpush.bf16.msra.mxu0 %v3696
        %3706 = vmatmul.bf16.gmra.mxu0 %v3693
        %v3707 = vpop.f32.mrf.mxu0
        %v3708 = vadd.f32 0.0, %v3707
        %v3709 = vpop.f32.mrf.mxu0
        %3710 = vdwg.mxu0
        %3711 = vrot.lane.b32.xlu0 %v3574, 64
        %v3712 = vpop.permute.xlu0 %3711
        %v3714 = vsel %vm3528, %v3666, 0
        %v3717 = vsel %vm3673, %v3712, 0
        %3719 = vmatpush.bf16.msra.mxu0 0
        %3720 = vmatpush.bf16.msra.mxu0 0
        %3721 = vmatpush.bf16.msra.mxu0 0
        %3722 = vmatpush.bf16.msra.mxu0 0
        %3723 = vmatpush.bf16.msra.mxu0 0
        %3724 = vmatpush.bf16.msra.mxu0 0
        %3725 = vmatpush.bf16.msra.mxu0 0
        %3726 = vmatpush.bf16.msra.mxu0 %v3717
        %3727 = vmatmul.bf16.gmra.mxu0 %v3714
        %v3728 = vpop.f32.mrf.mxu0
        %v3729 = vadd.f32 0.0, %v3728
        %v3730 = vpop.f32.mrf.mxu0
        %3731 = vdwg.mxu0
        %3732 = vrot.lane.b32.xlu0 %v3598, 64
        %v3733 = vpop.permute.xlu0 %3732
        %v3735 = vsel %vm3528, %v3667, 0
        %v3738 = vsel %vm3673, %v3733, 0
        %3740 = vmatpush.bf16.msra.mxu0 0
        %3741 = vmatpush.bf16.msra.mxu0 0
        %3742 = vmatpush.bf16.msra.mxu0 0
        %3743 = vmatpush.bf16.msra.mxu0 0
        %3744 = vmatpush.bf16.msra.mxu0 0
        %3745 = vmatpush.bf16.msra.mxu0 0
        %3746 = vmatpush.bf16.msra.mxu0 0
        %3747 = vmatpush.bf16.msra.mxu0 %v3738
        %3748 = vmatmul.bf16.gmra.mxu0 %v3735
        %v3749 = vpop.f32.mrf.mxu0
        %v3750 = vadd.f32 0.0, %v3749
        %v3751 = vpop.f32.mrf.mxu0
        %3752 = vdwg.mxu0
        %v3753 = vpack.c.bf16 %v3687, %v3687
        %v3754 = vpack.c.bf16 %v3708, %v3708
        %v3755 = vpack.c.bf16 %v3729, %v3729
        %v3756 = vpack.c.bf16 %v3750, %v3750
        %v3757 = vld [vmem:[%s1252] sm:$0xf]
        %v3758 = vld [vmem:[%s1252 + $0x4] sm:$0xf]
        %v3759 = vld [vmem:[%s1252 + $0x8] sm:$0xf]
        %v3760 = vld [vmem:[%s1252 + $0xc] sm:$0xf]
        %v3762 = vsel %vm3528, %v3753, 0
        %v3765 = vsel %vm3673, %v3757, 0
        %3767 = vmatpush.bf16.msra.mxu0 0
        %3768 = vmatpush.bf16.msra.mxu0 0
        %3769 = vmatpush.bf16.msra.mxu0 0
        %3770 = vmatpush.bf16.msra.mxu0 0
        %3771 = vmatpush.bf16.msra.mxu0 0
        %3772 = vmatpush.bf16.msra.mxu0 0
        %3773 = vmatpush.bf16.msra.mxu0 0
        %3774 = vmatpush.bf16.msra.mxu0 %v3765
        %3775 = vmatmul.bf16.gmra.mxu0 %v3762
        %v3776 = vpop.f32.mrf.mxu0
        %v3777 = vadd.f32 0.0, %v3776
        %v3778 = vpop.f32.mrf.mxu0
        %3779 = vdwg.mxu0
        %v3781 = vsel %vm3528, %v3754, 0
        %v3784 = vsel %vm3673, %v3758, 0
        %3786 = vmatpush.bf16.msra.mxu0 0
        %3787 = vmatpush.bf16.msra.mxu0 0
        %3788 = vmatpush.bf16.msra.mxu0 0
        %3789 = vmatpush.bf16.msra.mxu0 0
        %3790 = vmatpush.bf16.msra.mxu0 0
        %3791 = vmatpush.bf16.msra.mxu0 0
        %3792 = vmatpush.bf16.msra.mxu0 0
        %3793 = vmatpush.bf16.msra.mxu0 %v3784
        %3794 = vmatmul.bf16.gmra.mxu0 %v3781
        %v3795 = vpop.f32.mrf.mxu0
        %v3796 = vadd.f32 0.0, %v3795
        %v3797 = vpop.f32.mrf.mxu0
        %3798 = vdwg.mxu0
        %v3800 = vsel %vm3528, %v3755, 0
        %v3803 = vsel %vm3673, %v3759, 0
        %3805 = vmatpush.bf16.msra.mxu0 0
        %3806 = vmatpush.bf16.msra.mxu0 0
        %3807 = vmatpush.bf16.msra.mxu0 0
        %3808 = vmatpush.bf16.msra.mxu0 0
        %3809 = vmatpush.bf16.msra.mxu0 0
        %3810 = vmatpush.bf16.msra.mxu0 0
        %3811 = vmatpush.bf16.msra.mxu0 0
        %3812 = vmatpush.bf16.msra.mxu0 %v3803
        %3813 = vmatmul.bf16.gmra.mxu0 %v3800
        %v3814 = vpop.f32.mrf.mxu0
        %v3815 = vadd.f32 0.0, %v3814
        %v3816 = vpop.f32.mrf.mxu0
        %3817 = vdwg.mxu0
        %v3819 = vsel %vm3528, %v3756, 0
        %v3822 = vsel %vm3673, %v3760, 0
        %3824 = vmatpush.bf16.msra.mxu0 0
        %3825 = vmatpush.bf16.msra.mxu0 0
        %3826 = vmatpush.bf16.msra.mxu0 0
        %3827 = vmatpush.bf16.msra.mxu0 0
        %3828 = vmatpush.bf16.msra.mxu0 0
        %3829 = vmatpush.bf16.msra.mxu0 0
        %3830 = vmatpush.bf16.msra.mxu0 0
        %3831 = vmatpush.bf16.msra.mxu0 %v3822
        %3832 = vmatmul.bf16.gmra.mxu0 %v3819
        %v3833 = vpop.f32.mrf.mxu0
        %v3834 = vadd.f32 0.0, %v3833
        %v3835 = vpop.f32.mrf.mxu0
        %3836 = vdwg.mxu0
        %v3837 = vsel %vm3430, %v3777, 0.0
        %v3838 = vsel %vm3430, %v3796, 0.0
        %v3839 = vadd.f32 %v3837, %v3838
        %v3840 = vsel %vm3430, %v3815, 0.0
        %v3841 = vadd.f32 %v3839, %v3840
        %v3842 = vsel %vm3430, %v3834, 0.0
        %v3843 = vadd.f32 %v3841, %v3842
        %v3844 = vadd.f32 %v3427, %v3843
        %v3845 = vld [vmem:[%s1255] sm:$0x1]
        %v3847 = vperm.slane %v3845, 0
        %v3849 = vadd.f32 %v3844, %v3847
        %v3850 = vld [vmem:[%s1258] sm:$0x1]
        %v3851 = vld [vmem:[%s1261] sm:$0x1]
        %v3852 = vsel %vm3430, %v3849, 0.0
        %3853 = vadd.xlane.f32.xlu0 %v3852
        %v3854 = vpop.xlane.xlu0 %3853
        %v3855 = vmul.f32 %v3854, %v3440
        %v3856 = vsub.f32 %v3849, %v3855
        %v3857 = vmul.f32 %v3856, %v3856
        %v3858 = vsel %vm3430, %v3857, 0.0
        %3859 = vadd.xlane.f32.xlu0 %v3858
        %v3860 = vpop.xlane.xlu0 %3859
        %v3861 = vmul.f32 %v3860, %v3440
        %v3862 = vadd.f32 %v3861, 1e-05
        %v3863 = vrsqrt.pop %v3862
        %v3864 = vmul.f32 %v3863, %v3862
        %v3865 = vmul.f32 %v3864, %v3863
        %v3866 = vmul.f32 0.5, %v3865
        %v3867 = vsub.f32 1.5, %v3866
        %v3868 = vmul.f32 %v3863, %v3867
        %vm3869 = vweird.f32 %v3862
        %vm3870 = vweird.f32 %v3863
        %vm3871 = vmor %vm3869, %vm3870
        %v3872 = vsel %vm3871, %v3863, %v3868
        %v3873 = vmul.f32 %v3856, %v3872
        %v3875 = vperm.slane %v3850, 0
        %v3877 = vmul.f32 %v3873, %v3875
        %v3879 = vperm.slane %v3851, 0
        %v3881 = vadd.f32 %v3877, %v3879
        %v3882 = vpack.c.bf16 %v3881, %v3881
        %v3883 = vld [vmem:[%s1266] sm:$0xf]
        %v3884 = vld [vmem:[%s1266 + $0x4] sm:$0xf]
        %v3885 = vld [vmem:[%s1266 + $0x8] sm:$0xf]
        %v3886 = vld [vmem:[%s1266 + $0xc] sm:$0xf]
        %v3887 = vld [vmem:[%s1269] sm:$0x1]
        %v3889 = vperm.slane %v3887, 0
        %v3895 = vunpack.c.l.b16 %v3883
        %v3896 = vunpack.c.l.b16 %v3884
        %v3897 = vunpack.c.l.b16 %v3885
        %v3898 = vunpack.c.l.b16 %v3886
        %v3899 = vpack.c.b16 %v3896, %v3895
        %v3900 = vpack.c.b16 %v3898, %v3897
        %v3904 = vsel %vm3430, %v3882, 0
        %3906 = vmatpush.bf16.msra.mxu0 0
        %3907 = vmatpush.bf16.msra.mxu0 0
        %3908 = vmatpush.bf16.msra.mxu0 0
        %3909 = vmatpush.bf16.msra.mxu0 0
        %3910 = vmatpush.bf16.msra.mxu0 0
        %3911 = vmatpush.bf16.msra.mxu0 0
        %3912 = vmatpush.bf16.msra.mxu0 %v3900
        %3913 = vmatpush.bf16.msra.mxu0 %v3899
        %3914 = vmatmul.bf16.gmra.mxu0 %v3904
        %v3915 = vpop.f32.mrf.mxu0
        %v3916 = vadd.f32 %v3889, %v3915
        %v3917 = vpop.f32.mrf.mxu0
        %3918 = vdwg.mxu0
        %v3919 = vmul.f32 %v3916, 0.5
        %v3920 = vmul.f32 %v3916, 0.044715
        %v3921 = vmul.f32 %v3920, %v3916
        %v3922 = vmul.f32 %v3921, %v3916
        %v3923 = vadd.f32 %v3916, %v3922
        %v3924 = vmul.f32 %v3923, 0.7978846
        %v3925 = vtanh.pop %v3924
        %v3926 = vadd.f32 %v3925, 1.0
        %v3927 = vmul.f32 %v3919, %v3926
        %v3928 = vpack.c.bf16 %v3927, %v3927
        %v3929 = vld [vmem:[%s1274] sm:$0xf]
        %v3930 = vld [vmem:[%s1274 + $0x4] sm:$0xf]
        %v3931 = vld [vmem:[%s1274 + $0x8] sm:$0xf]
        %v3932 = vld [vmem:[%s1274 + $0xc] sm:$0xf]
        %v3933 = vld [vmem:[%s1274 + $0x10] sm:$0xf]
        %v3934 = vld [vmem:[%s1274 + $0x14] sm:$0xf]
        %v3935 = vld [vmem:[%s1274 + $0x18] sm:$0xf]
        %v3936 = vld [vmem:[%s1274 + $0x1c] sm:$0xf]
        %v3937 = vld [vmem:[%s1274 + $0x20] sm:$0xf]
        %v3938 = vld [vmem:[%s1274 + $0x24] sm:$0xf]
        %v3939 = vld [vmem:[%s1274 + $0x28] sm:$0xf]
        %v3940 = vld [vmem:[%s1274 + $0x2c] sm:$0xf]
        %v3941 = vld [vmem:[%s1274 + $0x30] sm:$0xf]
        %v3942 = vld [vmem:[%s1274 + $0x34] sm:$0xf]
        %v3943 = vld [vmem:[%s1274 + $0x38] sm:$0xf]
        %v3944 = vld [vmem:[%s1274 + $0x3c] sm:$0xf]
        %v3945 = vld [vmem:[%s1277] sm:$0x1]
        %v3947 = vperm.slane %v3945, 0
        %v3965 = vunpack.c.l.b16 %v3929
        %v3966 = vunpack.c.l.b16 %v3930
        %v3967 = vunpack.c.l.b16 %v3931
        %v3968 = vunpack.c.l.b16 %v3932
        %v3969 = vunpack.c.l.b16 %v3933
        %v3970 = vunpack.c.l.b16 %v3934
        %v3971 = vunpack.c.l.b16 %v3935
        %v3972 = vunpack.c.l.b16 %v3936
        %v3973 = vunpack.c.l.b16 %v3937
        %v3974 = vunpack.c.l.b16 %v3938
        %v3975 = vunpack.c.l.b16 %v3939
        %v3976 = vunpack.c.l.b16 %v3940
        %v3977 = vunpack.c.l.b16 %v3941
        %v3978 = vunpack.c.l.b16 %v3942
        %v3979 = vunpack.c.l.b16 %v3943
        %v3980 = vunpack.c.l.b16 %v3944
        %v3981 = vpack.c.b16 %v3966, %v3965
        %v3982 = vpack.c.b16 %v3968, %v3967
        %v3983 = vpack.c.b16 %v3970, %v3969
        %v3984 = vpack.c.b16 %v3972, %v3971
        %v3985 = vpack.c.b16 %v3974, %v3973
        %v3986 = vpack.c.b16 %v3976, %v3975
        %v3987 = vpack.c.b16 %v3978, %v3977
        %v3988 = vpack.c.b16 %v3980, %v3979
        %3997 = vmatpush.bf16.msra.mxu0 %v3988
        %3998 = vmatpush.bf16.msra.mxu0 %v3987
        %3999 = vmatpush.bf16.msra.mxu0 %v3986
        %4000 = vmatpush.bf16.msra.mxu0 %v3985
        %4001 = vmatpush.bf16.msra.mxu0 %v3984
        %4002 = vmatpush.bf16.msra.mxu0 %v3983
        %4003 = vmatpush.bf16.msra.mxu0 %v3982
        %4004 = vmatpush.bf16.msra.mxu0 %v3981
        %4005 = vmatmul.bf16.gmra.mxu0 %v3928
        %v4006 = vpop.f32.mrf.mxu0
        %v4007 = vadd.f32 %v3947, %v4006
        %v4008 = vpop.f32.mrf.mxu0
        %4009 = vdwg.mxu0
        %v4010 = vadd.f32 %v3849, %v4007
        %4011 = vst.msk [vmem:[#allocation5] sm:$0xff] %vm3430, %v4010
        %p4012 = scmp.eq.s32.totalorder %s90, 1
        // Predicated region
        $region161: #{tpu_custom_call.1} parent=155 // pred_check
          %p4013 = pneg %p4012
        $region162: #{tpu_custom_call.1} parent=155 // pred_check_branch
          %4015 = sbr.rel (%p4013) target = $region164
        $region163: #{tpu_custom_call.1} parent=155 // pred_region
          %v4016 = vld [vmem:[#allocation5] sm:$0xff]
          %v4017 = vld [vmem:[%s61] sm:$0x1]
          %v4018 = vld [vmem:[%s63] sm:$0x1]
          %v4019 = vsel %vm3430, %v4016, 0.0
          %4020 = vadd.xlane.f32.xlu0 %v4019
          %v4021 = vpop.xlane.xlu0 %4020
          %v4022 = vmul.f32 %v4021, %v3440
          %v4023 = vsub.f32 %v4016, %v4022
          %v4024 = vmul.f32 %v4023, %v4023
          %v4025 = vsel %vm3430, %v4024, 0.0
          %4026 = vadd.xlane.f32.xlu0 %v4025
          %v4027 = vpop.xlane.xlu0 %4026
          %v4028 = vmul.f32 %v4027, %v3440
          %v4029 = vadd.f32 %v4028, 1e-05
          %v4030 = vrsqrt.pop %v4029
          %v4031 = vmul.f32 %v4030, %v4029
          %v4032 = vmul.f32 %v4031, %v4030
          %v4033 = vmul.f32 0.5, %v4032
          %v4034 = vsub.f32 1.5, %v4033
          %v4035 = vmul.f32 %v4030, %v4034
          %vm4036 = vweird.f32 %v4029
          %vm4037 = vweird.f32 %v4030
          %vm4038 = vmor %vm4036, %vm4037
          %v4039 = vsel %vm4038, %v4030, %v4035
          %v4040 = vmul.f32 %v4023, %v4039
          %v4042 = vperm.slane %v4017, 0
          %v4044 = vmul.f32 %v4040, %v4042
          %v4046 = vperm.slane %v4018, 0
          %v4048 = vadd.f32 %v4044, %v4046
          %v4049 = vpack.c.bf16 %v4048, %v4048
          %v4050 = vld [vmem:[%s65] sm:$0xf]
          %v4051 = vld [vmem:[%s65 + $0x4] sm:$0xf]
          %v4052 = vld [vmem:[%s65 + $0x8] sm:$0xf]
          %v4053 = vld [vmem:[%s65 + $0xc] sm:$0xf]
          %v4054 = vld [vmem:[%s67] sm:$0x1]
          %v4056 = vperm.slane %v4054, 0
          %v4062 = vunpack.c.l.b16 %v4050
          %v4063 = vunpack.c.l.b16 %v4051
          %v4064 = vunpack.c.l.b16 %v4052
          %v4065 = vunpack.c.l.b16 %v4053
          %v4066 = vpack.c.b16 %v4063, %v4062
          %v4067 = vpack.c.b16 %v4065, %v4064
          %v4071 = vsel %vm3430, %v4049, 0
          %4073 = vmatpush.bf16.msra.mxu0 0
          %4074 = vmatpush.bf16.msra.mxu0 0
          %4075 = vmatpush.bf16.msra.mxu0 0
          %4076 = vmatpush.bf16.msra.mxu0 0
          %4077 = vmatpush.bf16.msra.mxu0 0
          %4078 = vmatpush.bf16.msra.mxu0 0
          %4079 = vmatpush.bf16.msra.mxu0 %v4067
          %4080 = vmatpush.bf16.msra.mxu0 %v4066
          %4081 = vmatmul.bf16.gmra.mxu0 %v4071
          %v4082 = vpop.f32.mrf.mxu0
          %v4083 = vadd.f32 %v4056, %v4082
          %v4084 = vpop.f32.mrf.mxu0
          %4085 = vdwg.mxu0
          %v4086 = vmax.f32 %v4083, 0.0
          %v4087 = vand.u32 2147483647, %v4083
          %v4088 = vsub.f32 0.0, %v4087
          %v4089 = vmul.f32 %v4088, 1.442695
          %v4090 = vpow.pop %v4089
          %v4091 = vadd.f32 %v4090, 1.0
          %v4092 = vlog2.pop %v4091
          %v4093 = vmul.f32 %v4092, 0.6931472
          %v4094 = vadd.f32 %v4086, %v4093
          %v4095 = vld [vmem:[#allocation6] sm:$0xff]
          %4097 = vrot.lane.b32.xlu0 %v4094, 1
          %v4098 = vpop.permute.xlu0 %4097
          %vm4100 = vcmask 7168
          %v4101 = vsel %vm4100, %v4095, %v4098
          %vm4102 = vcmask 424960
          %v4103 = vsel %vm4102, %v4101, 0.0
          %4104 = vst [vmem:[%s1221] sm:$0xff] %v4103
        $region164: #{tpu_custom_call.1} parent=155 // pred_fallthru
          _
        %s4105 = sand.u32 %s894, 1
        %s4106 = scalar_lea.sflag [#allocation9], %s4105
        %s4107 = sand.u32 %s894, 1
        %s4108 = smul.addr %s4107, 8
        %s4109 = scalar_lea.vmem [#allocation8], %s4108
        // Predicated region
        $region165: #{tpu_custom_call.1} parent=155 // pred_check
          %p4110 = pneg %p904
        $region166: #{tpu_custom_call.1} parent=155 // pred_check_branch
          %4112 = sbr.rel (%p4110) target = $region168
        $region167: #{tpu_custom_call.1} parent=155 // pred_region
          %4114 = vsyncadd %s4106, 0
          %s4115 = smul.addr %s89, 8
          %s4116 = scalar_lea.hbm %s69, %s4115
          %s4118 = sshll.u32 %s4109, 4
          %s4119 = int_to_ptr.vmem [resolvable:$true] %s4118
          %s4120 = sshll.u32 %s4116, 4
          %s4121 = int_to_ptr.hbm [resolvable:$true] %s4120
          %4123 = dma.vmem_to_hbm [thread:$0]  %s4119, 128, %s4121, %s4106
        $region168: #{tpu_custom_call.1} parent=155 // pred_fallthru
          _
      $region156: #{tpu_custom_call.1} parent=5 // pred_fallthru
        _
      %p4124 = scmp.le.s32.totalorder 2, %s80
      // Predicated region
      $region169: #{tpu_custom_call.1} parent=5 // pred_check
        %p4125 = pneg %p4124
      $region170: #{tpu_custom_call.1} parent=5 // pred_check_branch
        %4127 = sbr.rel (%p4125) target = $region172
      $region171: #{tpu_custom_call.1} parent=5 // pred_region
        %s4128 = ssub.s32 %s80, 2
        // Predicated region
        $region173: #{tpu_custom_call.1} parent=171 // pred_check
          %p4129 = pneg %p910
        $region174: #{tpu_custom_call.1} parent=171 // pred_check_branch
          %4131 = sbr.rel (%p4129) target = $region176
        $region175: #{tpu_custom_call.1} parent=171 // pred_region
          %s4132 = sand.u32 %s895, 1
          %s4133 = scalar_lea.sflag [#allocation9], %s4132
          %s4134 = sand.u32 %s895, 1
          %s4135 = smul.addr %s4134, 8
          %s4136 = scalar_lea.vmem [#allocation8], %s4135
          %4138 = dma.done %s4133, 128
        $region176: #{tpu_custom_call.1} parent=171 // pred_fallthru
          _
      $region172: #{tpu_custom_call.1} parent=5 // pred_fallthru
        _
    $region6: #{tpu_custom_call.1} parent=1 // loop_footer
      %s84 = sadd.s32 1, %s80
    $region7: #{tpu_custom_call.1} parent=1 // loop_footer_branch
      %79 = sbr.rel target = $region3
    $region8: #{tpu_custom_call.1} parent=1 // loop_exit
      _
    %4139 = vsyncpa [#allocation9], 1
    %s4140 = scalar_lea.sflag [#allocation9], 1
    %4141 = vsyncpa %s4140, 1

</llo_original>
